<compile_context>
chip_gen: v5e
topology: v5e:2x2
jax: 0.10.0
libtpu: 0.0.40
codegen_flags: <defaults>
</compile_context>

<pallas_src>
import jax
import jax.numpy as jnp
from jax.experimental import pallas as pl
from jax.experimental.pallas import tpu as pltpu


_LANES = 128                      # TPU lane width: channel dims are padded to multiples of this
_MATMUL_DTYPE = jnp.bfloat16      # MXU operand / inter-layer activation dtype (f32 accumulation)
_VMEM_LIMIT = 32 * 1024 * 1024    # explicit scoped-VMEM budget, safe on v5e / v6e / v7x


def _round_up(x, m):
    return (x + m - 1) // m * m


def _pick_tile_m(m):
    """Largest multiple-of-8 row tile <= 512 that divides M; full M otherwise."""
    for tm in (512, 256, 128, 64, 32, 16, 8):
        if m % tm == 0:
            return tm
    return m


# ---------------------------------------------------------------------------
# Fused Conv(3x3,s2,p1) + BatchNorm2d(train) + LeakyReLU(0.01) kernel
# ---------------------------------------------------------------------------
def _conv_bn_lrelu_kernel(x_ref, w_ref, gamma_ref, beta_ref, o_ref, acc_ref):
    """Grid: (M // tm,) over row tiles of the im2col patch matrix ("arbitrary" axis).

      x_ref     : (tm, K)   patch tile, bf16, pipelined per grid step
      w_ref     : (K, Cp)   folded conv weight, bf16, VMEM-resident (constant index map)
      gamma_ref : (1, Cp)   BN scale, f32
      beta_ref  : (1, Cp)   BN shift, f32
      o_ref     : (M, Cp)   layer output, bf16, VMEM-resident, stored to HBM once
      acc_ref   : (M, Cp)   f32 scratch holding the pre-BN conv result
    """
    m = pl.program_id(0)
    tm = x_ref.shape[0]

    # Conv tile on the MXU: bf16 x bf16 -> f32 accumulation.
    tile = jnp.dot(x_ref[...], w_ref[...], preferred_element_type=jnp.float32)
    off = m * tm
    if tm % 8 == 0:
        off = pl.multiple_of(off, 8)
    acc_ref[pl.ds(off, tm), :] = tile

    # Epilogue on the last tile: training-mode BN (biased variance, eps=1e-5) + LeakyReLU,
    # computed on the full VMEM-resident f32 accumulator, then a single lane-dense store.
    @pl.when(m == pl.num_programs(0) - 1)
    def _():
        x = acc_ref[...]
        inv_m = 1.0 / x.shape[0]
        mean = jnp.sum(x, axis=0, keepdims=True) * inv_m
        xc = x - mean
        var = jnp.sum(xc * xc, axis=0, keepdims=True) * inv_m
        inv = jax.lax.rsqrt(var + 1e-5)
        y = xc * (inv * gamma_ref[...]) + beta_ref[...]
        o_ref[...] = jnp.where(y > 0, y, 0.01 * y).astype(o_ref.dtype)


def _im2col(x_nhwc, ksize=3, stride=2, pad=1):
    """Stride-2 3x3 patch extraction (XLA glue; ~2.25x element expansion, in bf16)."""
    n, h, w, c = x_nhwc.shape
    ho = (h + 2 * pad - ksize) // stride + 1
    wo = (w + 2 * pad - ksize) // stride + 1
    xp = jnp.pad(x_nhwc, ((0, 0), (pad, pad), (pad, pad), (0, 0)))
    taps = []
    for ky in range(ksize):
        for kx in range(ksize):
            taps.append(xp[:, ky:ky + stride * ho:stride, kx:kx + stride * wo:stride, :])
    patches = jnp.stack(taps, axis=3)                          # (N, Ho, Wo, 9, C)
    return patches.reshape(n * ho * wo, ksize * ksize * c), (n, ho, wo)


def _prep_conv_layer(w_oihw, gamma, beta, cp_in, cp_out):
    """(Cout,Cin,kh,kw) -> (9*cp_in, cp_out) bf16 in im2col (tap-major, channel-minor) order."""
    cout, cin, kh, kw = w_oihw.shape
    wt = jnp.transpose(w_oihw, (2, 3, 1, 0))                   # (kh, kw, Cin, Cout)
    wt = jnp.pad(wt, ((0, 0), (0, 0), (0, cp_in - cin), (0, cp_out - cout)))
    wt = wt.reshape(kh * kw * cp_in, cp_out).astype(_MATMUL_DTYPE)
    g = jnp.pad(gamma, (0, cp_out - cout), constant_values=1.0).reshape(1, cp_out).astype(jnp.float32)
    b = jnp.pad(beta, (0, cp_out - cout)).reshape(1, cp_out).astype(jnp.float32)
    return wt, g, b


def conv_bn_lrelu(x_nhwc, layer_params):
    """One encoder block.  x_nhwc: (N, H, W, cp_in) bf16, channels already 128-padded."""
    cp_in = x_nhwc.shape[-1]
    cout = layer_params["w"].shape[0]
    cp_out = _round_up(cout, _LANES)

    patches, (n, ho, wo) = _im2col(x_nhwc)                     # (M, 9*cp_in) bf16
    m_rows, k = patches.shape
    wt, g, b = _prep_conv_layer(layer_params["w"], layer_params["gamma"],
                                layer_params["beta"], cp_in, cp_out)
    tm = _pick_tile_m(m_rows)

    y = pl.pallas_call(
        _conv_bn_lrelu_kernel,
        out_shape=jax.ShapeDtypeStruct((m_rows, cp_out), _MATMUL_DTYPE),
        grid=(m_rows // tm,),
        in_specs=[
            pl.BlockSpec((tm, k), lambda i: (i, 0)),           # pipelined patch tiles
            pl.BlockSpec((k, cp_out), lambda i: (0, 0)),       # weight, resident across grid
            pl.BlockSpec((1, cp_out), lambda i: (0, 0)),       # gamma
            pl.BlockSpec((1, cp_out), lambda i: (0, 0)),       # beta
        ],
        # Constant index map -> output stays VMEM-resident; written back to HBM once.
        out_specs=pl.BlockSpec((m_rows, cp_out), lambda i: (0, 0)),
        scratch_shapes=[pltpu.VMEM((m_rows, cp_out), jnp.float32)],
        compiler_params=pltpu.CompilerParams(
            dimension_semantics=("arbitrary",),                # BN reduces over the M axis
            vmem_limit_bytes=_VMEM_LIMIT),
        cost_estimate=pl.CostEstimate(
            flops=2 * m_rows * k * cp_out + 10 * m_rows * cp_out,
            transcendentals=cp_out,
            bytes_accessed=(m_rows * k + k * cp_out + m_rows * cp_out) * 2 + 2 * cp_out * 4),
    )(patches, wt, g, b)
    return y.reshape(n, ho, wo, cp_out)


# ---------------------------------------------------------------------------
# Fused fc_mu / fc_var head (single lane-dense matmul + bias)
# ---------------------------------------------------------------------------
def _fc_heads_kernel(x_ref, w_ref, b_ref, o_ref):
    acc = jnp.dot(x_ref[...], w_ref[...], preferred_element_type=jnp.float32)
    o_ref[...] = acc + b_ref[...]


def fc_heads(x_flat, w, b):
    n, f = x_flat.shape
    out_p = w.shape[1]
    return pl.pallas_call(
        _fc_heads_kernel,
        out_shape=jax.ShapeDtypeStruct((n, out_p), jnp.float32),
        in_specs=[pl.BlockSpec(memory_space=pltpu.MemorySpace.VMEM)] * 3,
        out_specs=pl.BlockSpec(memory_space=pltpu.MemorySpace.VMEM),
        compiler_params=pltpu.CompilerParams(vmem_limit_bytes=_VMEM_LIMIT),
        cost_estimate=pl.CostEstimate(
            flops=2 * n * f * out_p,
            transcendentals=0,
            bytes_accessed=(n * f + f * out_p) * 2 + (out_p + n * out_p) * 4),
    )(x_flat, w, b)


# ---------------------------------------------------------------------------
# Encoder forward
# ---------------------------------------------------------------------------
def encoder_forward(x_nchw, params):
    # NCHW -> NHWC (channels on the 128-lane axis), zero-pad channels to 128, bf16.
    x = jnp.transpose(x_nchw, (0, 2, 3, 1))
    cin = x.shape[-1]
    x = jnp.pad(x, ((0, 0), (0, 0), (0, 0), (0, _round_up(cin, _LANES) - cin)))
    x = x.astype(_MATMUL_DTYPE)

    # Conv2d(3x3,s2,p1) + BatchNorm2d(train) + LeakyReLU(0.01), fused per layer.
    # Conv bias is skipped: training-mode BN subtracts the per-channel batch mean,
    # which cancels a constant bias exactly (output-identical).
    for layer_params in params["convs"]:
        x = conv_bn_lrelu(x, layer_params)                     # (N, Ho, Wo, Cp) bf16

    n, ho, wo, cp = x.shape
    latent = params["fc_mu_w"].shape[0]
    c_last = params["fc_mu_w"].shape[1] // (ho * wo)
    out_p = _round_up(2 * latent, _LANES)

    # Fused fc_mu / fc_var head.  Weight rows are permuted at trace time from the
    # NCHW flatten order (c*Ho*Wo + h*Wo + w) to the padded-NHWC flatten order
    # ((h*Wo + w)*Cp + c), so the runtime transpose of activations is eliminated.
    w = jnp.concatenate([params["fc_mu_w"], params["fc_var_w"]], axis=0)   # (2L, C*Ho*Wo)
    bias = jnp.concatenate([params["fc_mu_b"], params["fc_var_b"]], axis=0)
    w = w.reshape(2 * latent, c_last, ho, wo)
    w = jnp.transpose(w, (2, 3, 1, 0))                                     # (Ho, Wo, C, 2L)
    w = jnp.pad(w, ((0, 0), (0, 0), (0, cp - c_last), (0, out_p - 2 * latent)))
    w = w.reshape(ho * wo * cp, out_p).astype(_MATMUL_DTYPE)
    bias = jnp.pad(bias, (0, out_p - 2 * latent)).reshape(1, out_p).astype(jnp.float32)

    x_flat = x.reshape(n, ho * wo * cp)                        # free row-major reshape
    y = fc_heads(x_flat, w, bias)                              # (N, out_p) f32
    mu = y[:, :latent]
    log_var = y[:, latent:2 * latent]
    return mu, log_var


def init_params(key, in_channels, hidden_dims, latent_dim):
    params = {"convs": []}
    cin = in_channels
    for h in hidden_dims:
        key, k1, k2 = jax.random.split(key, 3)
        params["convs"].append(
            dict(
                w=0.1 * jax.random.normal(k1, (h, cin, 3, 3), jnp.float32),
                # Conv bias kept only for parity with nn.Conv2d(bias=True); it is
                # mathematically absorbed by the following training-mode BatchNorm.
                b=0.1 * jax.random.normal(k2, (h,), jnp.float32),
                gamma=jnp.ones((h,), jnp.float32),             # PyTorch BN init
                beta=jnp.zeros((h,), jnp.float32),
            )
        )
        cin = h
    feat = hidden_dims[-1] * 4
    key, k1, k2, k3, k4 = jax.random.split(key, 5)
    params["fc_mu_w"] = 0.05 * jax.random.normal(k1, (latent_dim, feat), jnp.float32)
    params["fc_mu_b"] = 0.05 * jax.random.normal(k2, (latent_dim,), jnp.float32)
    params["fc_var_w"] = 0.05 * jax.random.normal(k3, (latent_dim, feat), jnp.float32)
    params["fc_var_b"] = 0.05 * jax.random.normal(k4, (latent_dim,), jnp.float32)
    return params


if __name__ == "__main__":
    # Small shapes consistent with the module: after len(hidden_dims) stride-2 convs
    # the spatial size must be 2x2 so that flatten width == hidden_dims[-1] * 4.
    batch, in_channels, spatial = 2, 3, 16
    hidden_dims = (8, 16, 32)
    latent_dim = 32

    key = jax.random.PRNGKey(0)
    key, kx = jax.random.split(key)
    x = jax.random.normal(kx, (batch, in_channels, spatial, spatial), jnp.float32)
    params = init_params(key, in_channels, hidden_dims, latent_dim)

    mu, log_var = jax.jit(encoder_forward)(x, params)
    jax.block_until_ready((mu, log_var))
    assert mu.shape == (batch, latent_dim) and log_var.shape == (batch, latent_dim)
    assert bool(jnp.all(jnp.isfinite(mu))) and bool(jnp.all(jnp.isfinite(log_var)))
    print("KERNEL_OK")
</pallas_src>

<mosaic_0001>
module attributes {stable_mosaic.version = 11 : i64} {
  func.func @_conv_bn_lrelu_kernel(%arg0: i32, %arg1: memref<128x1152xbf16, #tpu.memory_space<vmem>>, %arg2: memref<1152x128xbf16, #tpu.memory_space<vmem>>, %arg3: memref<1x128xf32, #tpu.memory_space<vmem>>, %arg4: memref<1x128xf32, #tpu.memory_space<vmem>>, %arg5: memref<128x128xbf16, #tpu.memory_space<vmem>>, %arg6: memref<128x128xf32, #tpu.memory_space<vmem>>) attributes {dimension_semantics = [#tpu.dimension_semantics<arbitrary>], iteration_bounds = array<i64: 1>, scalar_prefetch = 0 : i64, scratch_operands = 1 : i64, tpu.core_type = #tpu.core_type<tc>, window_params = [{transform_indices = @transform_0, window_bounds = array<i64: 128, 1152>}, {pipeline_mode = #tpu.pipeline_mode<synchronous>, transform_indices = @transform_1, window_bounds = array<i64: 1152, 128>}, {pipeline_mode = #tpu.pipeline_mode<synchronous>, transform_indices = @transform_2, window_bounds = array<i64: 1, 128>}, {pipeline_mode = #tpu.pipeline_mode<synchronous>, transform_indices = @transform_3, window_bounds = array<i64: 1, 128>}, {pipeline_mode = #tpu.pipeline_mode<synchronous>, transform_indices = @transform_4, window_bounds = array<i64: 128, 128>}]} {
    %c0 = arith.constant 0 : index
    %c0_0 = arith.constant 0 : index
    %0 = vector.load %arg1[%c0, %c0_0] : memref<128x1152xbf16, #tpu.memory_space<vmem>>, vector<128x1152xbf16>
    %c0_1 = arith.constant 0 : index
    %c0_2 = arith.constant 0 : index
    %1 = vector.load %arg2[%c0_1, %c0_2] : memref<1152x128xbf16, #tpu.memory_space<vmem>>, vector<1152x128xbf16>
    %cst = arith.constant dense<0.000000e+00> : vector<128x128xf32>
    %2 = tpu.matmul %0, %1, %cst {dimension_numbers = #tpu.dot_dimension_numbers<[1], [0], [0], [1], [0, 0, 1, 1], [], []>} : vector<128x1152xbf16>, vector<1152x128xbf16>, vector<128x128xf32> -> vector<128x128xf32>
    %c128_i32 = arith.constant 128 : i32
    %3 = arith.muli %arg0, %c128_i32 : i32
    %4 = tpu.assume_multiple %3, 8 : i32
    %5 = arith.index_cast %4 : i32 to index
    %c0_3 = arith.constant 0 : index
    %6 = vector.load %arg6[%5, %c0_3] : memref<128x128xf32, #tpu.memory_space<vmem>>, vector<128x128xf32>
    tpu.vector_store %arg6[%5, %c0_3], %2 {strides = array<i32>} : memref<128x128xf32, #tpu.memory_space<vmem>>, vector<128x128xf32>,
    %c0_i32 = arith.constant 0 : i32
    %7 = arith.cmpi eq, %arg0, %c0_i32 : i32
    %8 = arith.extui %7 : i1 to i32
    %c0_i32_4 = arith.constant 0 : i32
    %9 = arith.cmpi ne, %8, %c0_i32_4 : i32
    scf.if %9 {
      %c0_5 = arith.constant 0 : index
      %c0_6 = arith.constant 0 : index
      %10 = vector.load %arg6[%c0_5, %c0_6] : memref<128x128xf32, #tpu.memory_space<vmem>>, vector<128x128xf32>
      %cst_7 = arith.constant dense<0.000000e+00> : vector<128xf32>
      %11 = vector.multi_reduction <add>, %10, %cst_7 [0] : vector<128x128xf32> to vector<128xf32>
      %12 = vector.shape_cast %11 : vector<128xf32> to vector<1x128xf32>
      %cst_8 = arith.constant 7.812500e-03 : f32
      %13 = vector.broadcast %cst_8 : f32 to vector<1x128xf32>
      %14 = arith.mulf %12, %13 : vector<1x128xf32>
      %15 = vector.broadcast %14 : vector<1x128xf32> to vector<128x128xf32>
      %16 = arith.subf %10, %15 : vector<128x128xf32>
      %17 = arith.mulf %16, %16 : vector<128x128xf32>
      %cst_9 = arith.constant dense<0.000000e+00> : vector<128xf32>
      %18 = vector.multi_reduction <add>, %17, %cst_9 [0] : vector<128x128xf32> to vector<128xf32>
      %19 = vector.shape_cast %18 : vector<128xf32> to vector<1x128xf32>
      %cst_10 = arith.constant 7.812500e-03 : f32
      %20 = vector.broadcast %cst_10 : f32 to vector<1x128xf32>
      %21 = arith.mulf %19, %20 : vector<1x128xf32>
      %cst_11 = arith.constant 9.99999974E-6 : f32
      %22 = vector.broadcast %cst_11 : f32 to vector<1x128xf32>
      %23 = arith.addf %21, %22 : vector<1x128xf32>
      %24 = math.rsqrt %23 : vector<1x128xf32>
      %c0_12 = arith.constant 0 : index
      %c0_13 = arith.constant 0 : index
      %25 = vector.load %arg3[%c0_12, %c0_13] : memref<1x128xf32, #tpu.memory_space<vmem>>, vector<1x128xf32>
      %26 = arith.mulf %24, %25 : vector<1x128xf32>
      %27 = vector.broadcast %26 : vector<1x128xf32> to vector<128x128xf32>
      %28 = arith.mulf %16, %27 : vector<128x128xf32>
      %c0_14 = arith.constant 0 : index
      %c0_15 = arith.constant 0 : index
      %29 = vector.load %arg4[%c0_14, %c0_15] : memref<1x128xf32, #tpu.memory_space<vmem>>, vector<1x128xf32>
      %30 = vector.broadcast %29 : vector<1x128xf32> to vector<128x128xf32>
      %31 = arith.addf %28, %30 : vector<128x128xf32>
      %cst_16 = arith.constant 0.000000e+00 : f32
      %32 = vector.broadcast %cst_16 : f32 to vector<128x128xf32>
      %33 = arith.cmpf ogt, %31, %32 : vector<128x128xf32>
      %cst_17 = arith.constant 0.00999999977 : f32
      %34 = vector.broadcast %cst_17 : f32 to vector<128x128xf32>
      %35 = arith.mulf %34, %31 : vector<128x128xf32>
      %36 = arith.select %33, %31, %35 : vector<128x128xi1>, vector<128x128xf32>
      %37 = arith.truncf %36 : vector<128x128xf32> to vector<128x128xbf16>
      %c0_18 = arith.constant 0 : index
      %c0_19 = arith.constant 0 : index
      %38 = vector.load %arg5[%c0_18, %c0_19] : memref<128x128xbf16, #tpu.memory_space<vmem>>, vector<128x128xbf16>
      tpu.vector_store %arg5[%c0_18, %c0_19], %37 {strides = array<i32>} : memref<128x128xbf16, #tpu.memory_space<vmem>>, vector<128x128xbf16>,
    } else {
    }
    return
  }
  func.func @transform_0(%arg0: i32) -> (i32, i32) {
    %c0_i32 = arith.constant 0 : i32
    %c0_i32_0 = arith.constant 0 : i32
    return %arg0, %c0_i32 : i32, i32
  }
  func.func @transform_1(%arg0: i32) -> (i32, i32) {
    %c0_i32 = arith.constant 0 : i32
    %c0_i32_0 = arith.constant 0 : i32
    %c0_i32_1 = arith.constant 0 : i32
    return %c0_i32, %c0_i32_0 : i32, i32
  }
  func.func @transform_2(%arg0: i32) -> (i32, i32) {
    %c0_i32 = arith.constant 0 : i32
    %c0_i32_0 = arith.constant 0 : i32
    %c0_i32_1 = arith.constant 0 : i32
    return %c0_i32, %c0_i32_0 : i32, i32
  }
  func.func @transform_3(%arg0: i32) -> (i32, i32) {
    %c0_i32 = arith.constant 0 : i32
    %c0_i32_0 = arith.constant 0 : i32
    %c0_i32_1 = arith.constant 0 : i32
    return %c0_i32, %c0_i32_0 : i32, i32
  }
  func.func @transform_4(%arg0: i32) -> (i32, i32) {
    %c0_i32 = arith.constant 0 : i32
    %c0_i32_0 = arith.constant 0 : i32
    %c0_i32_1 = arith.constant 0 : i32
    return %c0_i32, %c0_i32_0 : i32, i32
  }
}

module attributes {stable_mosaic.version = 11 : i64} {
  func.func @_conv_bn_lrelu_kernel(%arg0: i32, %arg1: memref<32x1152xbf16, #tpu.memory_space<vmem>>, %arg2: memref<1152x128xbf16, #tpu.memory_space<vmem>>, %arg3: memref<1x128xf32, #tpu.memory_space<vmem>>, %arg4: memref<1x128xf32, #tpu.memory_space<vmem>>, %arg5: memref<32x128xbf16, #tpu.memory_space<vmem>>, %arg6: memref<32x128xf32, #tpu.memory_space<vmem>>) attributes {dimension_semantics = [#tpu.dimension_semantics<arbitrary>], iteration_bounds = array<i64: 1>, scalar_prefetch = 0 : i64, scratch_operands = 1 : i64, tpu.core_type = #tpu.core_type<tc>, window_params = [{transform_indices = @transform_0, window_bounds = array<i64: 32, 1152>}, {pipeline_mode = #tpu.pipeline_mode<synchronous>, transform_indices = @transform_1, window_bounds = array<i64: 1152, 128>}, {pipeline_mode = #tpu.pipeline_mode<synchronous>, transform_indices = @transform_2, window_bounds = array<i64: 1, 128>}, {pipeline_mode = #tpu.pipeline_mode<synchronous>, transform_indices = @transform_3, window_bounds = array<i64: 1, 128>}, {pipeline_mode = #tpu.pipeline_mode<synchronous>, transform_indices = @transform_4, window_bounds = array<i64: 32, 128>}]} {
    %c0 = arith.constant 0 : index
    %c0_0 = arith.constant 0 : index
    %0 = vector.load %arg1[%c0, %c0_0] : memref<32x1152xbf16, #tpu.memory_space<vmem>>, vector<32x1152xbf16>
    %c0_1 = arith.constant 0 : index
    %c0_2 = arith.constant 0 : index
    %1 = vector.load %arg2[%c0_1, %c0_2] : memref<1152x128xbf16, #tpu.memory_space<vmem>>, vector<1152x128xbf16>
    %cst = arith.constant dense<0.000000e+00> : vector<32x128xf32>
    %2 = tpu.matmul %0, %1, %cst {dimension_numbers = #tpu.dot_dimension_numbers<[1], [0], [0], [1], [0, 0, 1, 1], [], []>} : vector<32x1152xbf16>, vector<1152x128xbf16>, vector<32x128xf32> -> vector<32x128xf32>
    %c32_i32 = arith.constant 32 : i32
    %3 = arith.muli %arg0, %c32_i32 : i32
    %4 = tpu.assume_multiple %3, 8 : i32
    %5 = arith.index_cast %4 : i32 to index
    %c0_3 = arith.constant 0 : index
    %6 = vector.load %arg6[%5, %c0_3] : memref<32x128xf32, #tpu.memory_space<vmem>>, vector<32x128xf32>
    tpu.vector_store %arg6[%5, %c0_3], %2 {strides = array<i32>} : memref<32x128xf32, #tpu.memory_space<vmem>>, vector<32x128xf32>,
    %c0_i32 = arith.constant 0 : i32
    %7 = arith.cmpi eq, %arg0, %c0_i32 : i32
    %8 = arith.extui %7 : i1 to i32
    %c0_i32_4 = arith.constant 0 : i32
    %9 = arith.cmpi ne, %8, %c0_i32_4 : i32
    scf.if %9 {
      %c0_5 = arith.constant 0 : index
      %c0_6 = arith.constant 0 : index
      %10 = vector.load %arg6[%c0_5, %c0_6] : memref<32x128xf32, #tpu.memory_space<vmem>>, vector<32x128xf32>
      %cst_7 = arith.constant dense<0.000000e+00> : vector<128xf32>
      %11 = vector.multi_reduction <add>, %10, %cst_7 [0] : vector<32x128xf32> to vector<128xf32>
      %12 = vector.shape_cast %11 : vector<128xf32> to vector<1x128xf32>
      %cst_8 = arith.constant 3.125000e-02 : f32
      %13 = vector.broadcast %cst_8 : f32 to vector<1x128xf32>
      %14 = arith.mulf %12, %13 : vector<1x128xf32>
      %15 = vector.broadcast %14 : vector<1x128xf32> to vector<32x128xf32>
      %16 = arith.subf %10, %15 : vector<32x128xf32>
      %17 = arith.mulf %16, %16 : vector<32x128xf32>
      %cst_9 = arith.constant dense<0.000000e+00> : vector<128xf32>
      %18 = vector.multi_reduction <add>, %17, %cst_9 [0] : vector<32x128xf32> to vector<128xf32>
      %19 = vector.shape_cast %18 : vector<128xf32> to vector<1x128xf32>
      %cst_10 = arith.constant 3.125000e-02 : f32
      %20 = vector.broadcast %cst_10 : f32 to vector<1x128xf32>
      %21 = arith.mulf %19, %20 : vector<1x128xf32>
      %cst_11 = arith.constant 9.99999974E-6 : f32
      %22 = vector.broadcast %cst_11 : f32 to vector<1x128xf32>
      %23 = arith.addf %21, %22 : vector<1x128xf32>
      %24 = math.rsqrt %23 : vector<1x128xf32>
      %c0_12 = arith.constant 0 : index
      %c0_13 = arith.constant 0 : index
      %25 = vector.load %arg3[%c0_12, %c0_13] : memref<1x128xf32, #tpu.memory_space<vmem>>, vector<1x128xf32>
      %26 = arith.mulf %24, %25 : vector<1x128xf32>
      %27 = vector.broadcast %26 : vector<1x128xf32> to vector<32x128xf32>
      %28 = arith.mulf %16, %27 : vector<32x128xf32>
      %c0_14 = arith.constant 0 : index
      %c0_15 = arith.constant 0 : index
      %29 = vector.load %arg4[%c0_14, %c0_15] : memref<1x128xf32, #tpu.memory_space<vmem>>, vector<1x128xf32>
      %30 = vector.broadcast %29 : vector<1x128xf32> to vector<32x128xf32>
      %31 = arith.addf %28, %30 : vector<32x128xf32>
      %cst_16 = arith.constant 0.000000e+00 : f32
      %32 = vector.broadcast %cst_16 : f32 to vector<32x128xf32>
      %33 = arith.cmpf ogt, %31, %32 : vector<32x128xf32>
      %cst_17 = arith.constant 0.00999999977 : f32
      %34 = vector.broadcast %cst_17 : f32 to vector<32x128xf32>
      %35 = arith.mulf %34, %31 : vector<32x128xf32>
      %36 = arith.select %33, %31, %35 : vector<32x128xi1>, vector<32x128xf32>
      %37 = arith.truncf %36 : vector<32x128xf32> to vector<32x128xbf16>
      %c0_18 = arith.constant 0 : index
      %c0_19 = arith.constant 0 : index
      %38 = vector.load %arg5[%c0_18, %c0_19] : memref<32x128xbf16, #tpu.memory_space<vmem>>, vector<32x128xbf16>
      tpu.vector_store %arg5[%c0_18, %c0_19], %37 {strides = array<i32>} : memref<32x128xbf16, #tpu.memory_space<vmem>>, vector<32x128xbf16>,
    } else {
    }
    return
  }
  func.func @transform_0(%arg0: i32) -> (i32, i32) {
    %c0_i32 = arith.constant 0 : i32
    %c0_i32_0 = arith.constant 0 : i32
    return %arg0, %c0_i32 : i32, i32
  }
  func.func @transform_1(%arg0: i32) -> (i32, i32) {
    %c0_i32 = arith.constant 0 : i32
    %c0_i32_0 = arith.constant 0 : i32
    %c0_i32_1 = arith.constant 0 : i32
    return %c0_i32, %c0_i32_0 : i32, i32
  }
  func.func @transform_2(%arg0: i32) -> (i32, i32) {
    %c0_i32 = arith.constant 0 : i32
    %c0_i32_0 = arith.constant 0 : i32
    %c0_i32_1 = arith.constant 0 : i32
    return %c0_i32, %c0_i32_0 : i32, i32
  }
  func.func @transform_3(%arg0: i32) -> (i32, i32) {
    %c0_i32 = arith.constant 0 : i32
    %c0_i32_0 = arith.constant 0 : i32
    %c0_i32_1 = arith.constant 0 : i32
    return %c0_i32, %c0_i32_0 : i32, i32
  }
  func.func @transform_4(%arg0: i32) -> (i32, i32) {
    %c0_i32 = arith.constant 0 : i32
    %c0_i32_0 = arith.constant 0 : i32
    %c0_i32_1 = arith.constant 0 : i32
    return %c0_i32, %c0_i32_0 : i32, i32
  }
}

module attributes {stable_mosaic.version = 11 : i64} {
  func.func @_conv_bn_lrelu_kernel(%arg0: i32, %arg1: memref<8x1152xbf16, #tpu.memory_space<vmem>>, %arg2: memref<1152x128xbf16, #tpu.memory_space<vmem>>, %arg3: memref<1x128xf32, #tpu.memory_space<vmem>>, %arg4: memref<1x128xf32, #tpu.memory_space<vmem>>, %arg5: memref<8x128xbf16, #tpu.memory_space<vmem>>, %arg6: memref<8x128xf32, #tpu.memory_space<vmem>>) attributes {dimension_semantics = [#tpu.dimension_semantics<arbitrary>], iteration_bounds = array<i64: 1>, scalar_prefetch = 0 : i64, scratch_operands = 1 : i64, tpu.core_type = #tpu.core_type<tc>, window_params = [{transform_indices = @transform_0, window_bounds = array<i64: 8, 1152>}, {pipeline_mode = #tpu.pipeline_mode<synchronous>, transform_indices = @transform_1, window_bounds = array<i64: 1152, 128>}, {pipeline_mode = #tpu.pipeline_mode<synchronous>, transform_indices = @transform_2, window_bounds = array<i64: 1, 128>}, {pipeline_mode = #tpu.pipeline_mode<synchronous>, transform_indices = @transform_3, window_bounds = array<i64: 1, 128>}, {pipeline_mode = #tpu.pipeline_mode<synchronous>, transform_indices = @transform_4, window_bounds = array<i64: 8, 128>}]} {
    %c0 = arith.constant 0 : index
    %c0_0 = arith.constant 0 : index
    %0 = vector.load %arg1[%c0, %c0_0] : memref<8x1152xbf16, #tpu.memory_space<vmem>>, vector<8x1152xbf16>
    %c0_1 = arith.constant 0 : index
    %c0_2 = arith.constant 0 : index
    %1 = vector.load %arg2[%c0_1, %c0_2] : memref<1152x128xbf16, #tpu.memory_space<vmem>>, vector<1152x128xbf16>
    %cst = arith.constant dense<0.000000e+00> : vector<8x128xf32>
    %2 = tpu.matmul %0, %1, %cst {dimension_numbers = #tpu.dot_dimension_numbers<[1], [0], [0], [1], [0, 0, 1, 1], [], []>} : vector<8x1152xbf16>, vector<1152x128xbf16>, vector<8x128xf32> -> vector<8x128xf32>
    %c8_i32 = arith.constant 8 : i32
    %3 = arith.muli %arg0, %c8_i32 : i32
    %4 = tpu.assume_multiple %3, 8 : i32
    %5 = arith.index_cast %4 : i32 to index
    %c0_3 = arith.constant 0 : index
    %6 = vector.load %arg6[%5, %c0_3] : memref<8x128xf32, #tpu.memory_space<vmem>>, vector<8x128xf32>
    tpu.vector_store %arg6[%5, %c0_3], %2 {strides = array<i32>} : memref<8x128xf32, #tpu.memory_space<vmem>>, vector<8x128xf32>,
    %c0_i32 = arith.constant 0 : i32
    %7 = arith.cmpi eq, %arg0, %c0_i32 : i32
    %8 = arith.extui %7 : i1 to i32
    %c0_i32_4 = arith.constant 0 : i32
    %9 = arith.cmpi ne, %8, %c0_i32_4 : i32
    scf.if %9 {
      %c0_5 = arith.constant 0 : index
      %c0_6 = arith.constant 0 : index
      %10 = vector.load %arg6[%c0_5, %c0_6] : memref<8x128xf32, #tpu.memory_space<vmem>>, vector<8x128xf32>
      %cst_7 = arith.constant dense<0.000000e+00> : vector<128xf32>
      %11 = vector.multi_reduction <add>, %10, %cst_7 [0] : vector<8x128xf32> to vector<128xf32>
      %12 = vector.shape_cast %11 : vector<128xf32> to vector<1x128xf32>
      %cst_8 = arith.constant 1.250000e-01 : f32
      %13 = vector.broadcast %cst_8 : f32 to vector<1x128xf32>
      %14 = arith.mulf %12, %13 : vector<1x128xf32>
      %15 = vector.broadcast %14 : vector<1x128xf32> to vector<8x128xf32>
      %16 = arith.subf %10, %15 : vector<8x128xf32>
      %17 = arith.mulf %16, %16 : vector<8x128xf32>
      %cst_9 = arith.constant dense<0.000000e+00> : vector<128xf32>
      %18 = vector.multi_reduction <add>, %17, %cst_9 [0] : vector<8x128xf32> to vector<128xf32>
      %19 = vector.shape_cast %18 : vector<128xf32> to vector<1x128xf32>
      %cst_10 = arith.constant 1.250000e-01 : f32
      %20 = vector.broadcast %cst_10 : f32 to vector<1x128xf32>
      %21 = arith.mulf %19, %20 : vector<1x128xf32>
      %cst_11 = arith.constant 9.99999974E-6 : f32
      %22 = vector.broadcast %cst_11 : f32 to vector<1x128xf32>
      %23 = arith.addf %21, %22 : vector<1x128xf32>
      %24 = math.rsqrt %23 : vector<1x128xf32>
      %c0_12 = arith.constant 0 : index
      %c0_13 = arith.constant 0 : index
      %25 = vector.load %arg3[%c0_12, %c0_13] : memref<1x128xf32, #tpu.memory_space<vmem>>, vector<1x128xf32>
      %26 = arith.mulf %24, %25 : vector<1x128xf32>
      %27 = vector.broadcast %26 : vector<1x128xf32> to vector<8x128xf32>
      %28 = arith.mulf %16, %27 : vector<8x128xf32>
      %c0_14 = arith.constant 0 : index
      %c0_15 = arith.constant 0 : index
      %29 = vector.load %arg4[%c0_14, %c0_15] : memref<1x128xf32, #tpu.memory_space<vmem>>, vector<1x128xf32>
      %30 = vector.broadcast %29 : vector<1x128xf32> to vector<8x128xf32>
      %31 = arith.addf %28, %30 : vector<8x128xf32>
      %cst_16 = arith.constant 0.000000e+00 : f32
      %32 = vector.broadcast %cst_16 : f32 to vector<8x128xf32>
      %33 = arith.cmpf ogt, %31, %32 : vector<8x128xf32>
      %cst_17 = arith.constant 0.00999999977 : f32
      %34 = vector.broadcast %cst_17 : f32 to vector<8x128xf32>
      %35 = arith.mulf %34, %31 : vector<8x128xf32>
      %36 = arith.select %33, %31, %35 : vector<8x128xi1>, vector<8x128xf32>
      %37 = arith.truncf %36 : vector<8x128xf32> to vector<8x128xbf16>
      %c0_18 = arith.constant 0 : index
      %c0_19 = arith.constant 0 : index
      %38 = vector.load %arg5[%c0_18, %c0_19] : memref<8x128xbf16, #tpu.memory_space<vmem>>, vector<8x128xbf16>
      tpu.vector_store %arg5[%c0_18, %c0_19], %37 {strides = array<i32>} : memref<8x128xbf16, #tpu.memory_space<vmem>>, vector<8x128xbf16>,
    } else {
    }
    return
  }
  func.func @transform_0(%arg0: i32) -> (i32, i32) {
    %c0_i32 = arith.constant 0 : i32
    %c0_i32_0 = arith.constant 0 : i32
    return %arg0, %c0_i32 : i32, i32
  }
  func.func @transform_1(%arg0: i32) -> (i32, i32) {
    %c0_i32 = arith.constant 0 : i32
    %c0_i32_0 = arith.constant 0 : i32
    %c0_i32_1 = arith.constant 0 : i32
    return %c0_i32, %c0_i32_0 : i32, i32
  }
  func.func @transform_2(%arg0: i32) -> (i32, i32) {
    %c0_i32 = arith.constant 0 : i32
    %c0_i32_0 = arith.constant 0 : i32
    %c0_i32_1 = arith.constant 0 : i32
    return %c0_i32, %c0_i32_0 : i32, i32
  }
  func.func @transform_3(%arg0: i32) -> (i32, i32) {
    %c0_i32 = arith.constant 0 : i32
    %c0_i32_0 = arith.constant 0 : i32
    %c0_i32_1 = arith.constant 0 : i32
    return %c0_i32, %c0_i32_0 : i32, i32
  }
  func.func @transform_4(%arg0: i32) -> (i32, i32) {
    %c0_i32 = arith.constant 0 : i32
    %c0_i32_0 = arith.constant 0 : i32
    %c0_i32_1 = arith.constant 0 : i32
    return %c0_i32, %c0_i32_0 : i32, i32
  }
}

module attributes {stable_mosaic.version = 11 : i64} {
  func.func @_fc_heads_kernel(%arg0: memref<2x512xbf16, #tpu.memory_space<vmem>>, %arg1: memref<512x128xbf16, #tpu.memory_space<vmem>>, %arg2: memref<1x128xf32, #tpu.memory_space<vmem>>, %arg3: memref<2x128xf32, #tpu.memory_space<vmem>>) attributes {dimension_semantics = [], scalar_prefetch = 0 : i64, scratch_operands = 0 : i64, tpu.core_type = #tpu.core_type<tc>} {
    %c0 = arith.constant 0 : index
    %c0_0 = arith.constant 0 : index
    %0 = vector.load %arg0[%c0, %c0_0] : memref<2x512xbf16, #tpu.memory_space<vmem>>, vector<2x512xbf16>
    %c0_1 = arith.constant 0 : index
    %c0_2 = arith.constant 0 : index
    %1 = vector.load %arg1[%c0_1, %c0_2] : memref<512x128xbf16, #tpu.memory_space<vmem>>, vector<512x128xbf16>
    %cst = arith.constant dense<0.000000e+00> : vector<2x128xf32>
    %2 = tpu.matmul %0, %1, %cst {dimension_numbers = #tpu.dot_dimension_numbers<[1], [0], [0], [1], [0, 0, 1, 1], [], []>} : vector<2x512xbf16>, vector<512x128xbf16>, vector<2x128xf32> -> vector<2x128xf32>
    %c0_3 = arith.constant 0 : index
    %c0_4 = arith.constant 0 : index
    %3 = vector.load %arg2[%c0_3, %c0_4] : memref<1x128xf32, #tpu.memory_space<vmem>>, vector<1x128xf32>
    %4 = vector.broadcast %3 : vector<1x128xf32> to vector<2x128xf32>
    %5 = arith.addf %2, %4 : vector<2x128xf32>
    %c0_5 = arith.constant 0 : index
    %c0_6 = arith.constant 0 : index
    %6 = vector.load %arg3[%c0_5, %c0_6] : memref<2x128xf32, #tpu.memory_space<vmem>>, vector<2x128xf32>
    tpu.vector_store %arg3[%c0_5, %c0_6], %5 {strides = array<i32>} : memref<2x128xf32, #tpu.memory_space<vmem>>, vector<2x128xf32>,
    return
  }
}

</mosaic_0001>

<llo_original>
// kernel: encoder_forward.4
$region0: #{encoder_forward.4}
  #allocation0 [shape = 'u32[]', space=smem, size = 0x4, offset = 0x4, fixed_abs, tag = 'smem constant byte address 0x4 - core index']
  #allocation1 [shape = 'u32[72,128]{1,0:T(1,128)}', space=vmem, size = 0x9000, scoped, tag = 'internal scratch']
  #allocation2 [shape = 'f32[128,128]{1,0:T(8,128)}', space=vmem, size = 0x10000, scoped, tag = 'scratch operand']
  %s0 = inlined_call_operand.vmem [shape: bf16[128,1152], index: 0, kind: input, shape index: {}]
  %s1 = inlined_call_operand.vmem [shape: bf16[1152,128], index: 1, kind: input, shape index: {}]
  %s2 = inlined_call_operand.vmem [shape: f32[1,128], index: 2, kind: input, shape index: {}]
  %s3 = inlined_call_operand.vmem [shape: f32[1,128], index: 3, kind: input, shape index: {}]
  %s4 = inlined_call_operand.vmem [shape: bf16[128,128], index: 4, kind: output, shape index: {}]
  %s5 = sld [smem:[#allocation0]]
  $region30: #{encoder_forward.4} parent=0
    _
  %s7 = ssub.s32 1, %s5
  %s8 = scalar_select 0, %s7, %s5
  // Predicated region
  $region2: #{encoder_forward.4} parent=0 // pred_check
    _
  $region3: #{encoder_forward.4} parent=0 // pred_check_branch
    %10 = sbr.rel (0) target = $region5
  $region4: #{encoder_forward.4} parent=0 // pred_region
    _
  $region5: #{encoder_forward.4} parent=0 // pred_fallthru
    _
  // Predicated region
  $region6: #{encoder_forward.4} parent=0 // pred_check
    _
  $region7: #{encoder_forward.4} parent=0 // pred_check_branch
    %12 = sbr.rel (0) target = $region9
  $region8: #{encoder_forward.4} parent=0 // pred_region
    _
  $region9: #{encoder_forward.4} parent=0 // pred_fallthru
    _
  // Predicated region
  $region10: #{encoder_forward.4} parent=0 // pred_check
    _
  $region11: #{encoder_forward.4} parent=0 // pred_check_branch
    %14 = sbr.rel (0) target = $region13
  $region12: #{encoder_forward.4} parent=0 // pred_region
    _
  $region13: #{encoder_forward.4} parent=0 // pred_fallthru
    _
  // Predicated region
  $region14: #{encoder_forward.4} parent=0 // pred_check
    _
  $region15: #{encoder_forward.4} parent=0 // pred_check_branch
    %16 = sbr.rel (0) target = $region17
  $region16: #{encoder_forward.4} parent=0 // pred_region
    _
  $region17: #{encoder_forward.4} parent=0 // pred_fallthru
    _
  %v17 = vld [vmem:[%s0] sm:$0xff]
  %v18 = vld [vmem:[%s0 + $0x8] sm:$0xff]
  %v19 = vld [vmem:[%s0 + $0x10] sm:$0xff]
  %v20 = vld [vmem:[%s0 + $0x18] sm:$0xff]
  %v21 = vld [vmem:[%s0 + $0x20] sm:$0xf]
  %v22 = vld [vmem:[%s0 + $0x24] sm:$0xff]
  %v23 = vld [vmem:[%s0 + $0x2c] sm:$0xff]
  %v24 = vld [vmem:[%s0 + $0x34] sm:$0xff]
  %v25 = vld [vmem:[%s0 + $0x3c] sm:$0xff]
  %v26 = vld [vmem:[%s0 + $0x44] sm:$0xf]
  %v27 = vld [vmem:[%s0 + $0x48] sm:$0xff]
  %v28 = vld [vmem:[%s0 + $0x50] sm:$0xff]
  %v29 = vld [vmem:[%s0 + $0x58] sm:$0xff]
  %v30 = vld [vmem:[%s0 + $0x60] sm:$0xff]
  %v31 = vld [vmem:[%s0 + $0x68] sm:$0xf]
  %v32 = vld [vmem:[%s0 + $0x6c] sm:$0xff]
  %v33 = vld [vmem:[%s0 + $0x74] sm:$0xff]
  %v34 = vld [vmem:[%s0 + $0x7c] sm:$0xff]
  %v35 = vld [vmem:[%s0 + $0x84] sm:$0xff]
  %v36 = vld [vmem:[%s0 + $0x8c] sm:$0xf]
  %v37 = vld [vmem:[%s0 + $0x90] sm:$0xff]
  %v38 = vld [vmem:[%s0 + $0x98] sm:$0xff]
  %v39 = vld [vmem:[%s0 + $0xa0] sm:$0xff]
  %v40 = vld [vmem:[%s0 + $0xa8] sm:$0xff]
  %v41 = vld [vmem:[%s0 + $0xb0] sm:$0xf]
  %v42 = vld [vmem:[%s0 + $0xb4] sm:$0xff]
  %v43 = vld [vmem:[%s0 + $0xbc] sm:$0xff]
  %v44 = vld [vmem:[%s0 + $0xc4] sm:$0xff]
  %v45 = vld [vmem:[%s0 + $0xcc] sm:$0xff]
  %v46 = vld [vmem:[%s0 + $0xd4] sm:$0xf]
  %v47 = vld [vmem:[%s0 + $0xd8] sm:$0xff]
  %v48 = vld [vmem:[%s0 + $0xe0] sm:$0xff]
  %v49 = vld [vmem:[%s0 + $0xe8] sm:$0xff]
  %v50 = vld [vmem:[%s0 + $0xf0] sm:$0xff]
  %v51 = vld [vmem:[%s0 + $0xf8] sm:$0xf]
  %v52 = vld [vmem:[%s0 + $0xfc] sm:$0xff]
  %v53 = vld [vmem:[%s0 + $0x104] sm:$0xff]
  %v54 = vld [vmem:[%s0 + $0x10c] sm:$0xff]
  %v55 = vld [vmem:[%s0 + $0x114] sm:$0xff]
  %v56 = vld [vmem:[%s0 + $0x11c] sm:$0xf]
  %v57 = vld [vmem:[%s0 + $0x120] sm:$0xff]
  %v58 = vld [vmem:[%s0 + $0x128] sm:$0xff]
  %v59 = vld [vmem:[%s0 + $0x130] sm:$0xff]
  %v60 = vld [vmem:[%s0 + $0x138] sm:$0xff]
  %v61 = vld [vmem:[%s0 + $0x140] sm:$0xf]
  %v62 = vld [vmem:[%s0 + $0x144] sm:$0xff]
  %v63 = vld [vmem:[%s0 + $0x14c] sm:$0xff]
  %v64 = vld [vmem:[%s0 + $0x154] sm:$0xff]
  %v65 = vld [vmem:[%s0 + $0x15c] sm:$0xff]
  %v66 = vld [vmem:[%s0 + $0x164] sm:$0xf]
  %v67 = vld [vmem:[%s0 + $0x168] sm:$0xff]
  %v68 = vld [vmem:[%s0 + $0x170] sm:$0xff]
  %v69 = vld [vmem:[%s0 + $0x178] sm:$0xff]
  %v70 = vld [vmem:[%s0 + $0x180] sm:$0xff]
  %v71 = vld [vmem:[%s0 + $0x188] sm:$0xf]
  %v72 = vld [vmem:[%s0 + $0x18c] sm:$0xff]
  %v73 = vld [vmem:[%s0 + $0x194] sm:$0xff]
  %v74 = vld [vmem:[%s0 + $0x19c] sm:$0xff]
  %v75 = vld [vmem:[%s0 + $0x1a4] sm:$0xff]
  %v76 = vld [vmem:[%s0 + $0x1ac] sm:$0xf]
  %v77 = vld [vmem:[%s0 + $0x1b0] sm:$0xff]
  %v78 = vld [vmem:[%s0 + $0x1b8] sm:$0xff]
  %v79 = vld [vmem:[%s0 + $0x1c0] sm:$0xff]
  %v80 = vld [vmem:[%s0 + $0x1c8] sm:$0xff]
  %v81 = vld [vmem:[%s0 + $0x1d0] sm:$0xf]
  %v82 = vld [vmem:[%s0 + $0x1d4] sm:$0xff]
  %v83 = vld [vmem:[%s0 + $0x1dc] sm:$0xff]
  %v84 = vld [vmem:[%s0 + $0x1e4] sm:$0xff]
  %v85 = vld [vmem:[%s0 + $0x1ec] sm:$0xff]
  %v86 = vld [vmem:[%s0 + $0x1f4] sm:$0xf]
  %v87 = vld [vmem:[%s0 + $0x1f8] sm:$0xff]
  %v88 = vld [vmem:[%s0 + $0x200] sm:$0xff]
  %v89 = vld [vmem:[%s0 + $0x208] sm:$0xff]
  %v90 = vld [vmem:[%s0 + $0x210] sm:$0xff]
  %v91 = vld [vmem:[%s0 + $0x218] sm:$0xf]
  %v92 = vld [vmem:[%s0 + $0x21c] sm:$0xff]
  %v93 = vld [vmem:[%s0 + $0x224] sm:$0xff]
  %v94 = vld [vmem:[%s0 + $0x22c] sm:$0xff]
  %v95 = vld [vmem:[%s0 + $0x234] sm:$0xff]
  %v96 = vld [vmem:[%s0 + $0x23c] sm:$0xf]
  %v97 = vld [vmem:[%s1] sm:$0xf]
  %v98 = vld [vmem:[%s1 + $0x4] sm:$0xf]
  %v99 = vld [vmem:[%s1 + $0x8] sm:$0xf]
  %v100 = vld [vmem:[%s1 + $0xc] sm:$0xf]
  %v101 = vld [vmem:[%s1 + $0x10] sm:$0xf]
  %v102 = vld [vmem:[%s1 + $0x14] sm:$0xf]
  %v103 = vld [vmem:[%s1 + $0x18] sm:$0xf]
  %v104 = vld [vmem:[%s1 + $0x1c] sm:$0xf]
  %v105 = vld [vmem:[%s1 + $0x20] sm:$0xf]
  %v106 = vld [vmem:[%s1 + $0x24] sm:$0xf]
  %v107 = vld [vmem:[%s1 + $0x28] sm:$0xf]
  %v108 = vld [vmem:[%s1 + $0x2c] sm:$0xf]
  %v109 = vld [vmem:[%s1 + $0x30] sm:$0xf]
  %v110 = vld [vmem:[%s1 + $0x34] sm:$0xf]
  %v111 = vld [vmem:[%s1 + $0x38] sm:$0xf]
  %v112 = vld [vmem:[%s1 + $0x3c] sm:$0xf]
  %v113 = vld [vmem:[%s1 + $0x40] sm:$0xf]
  %v114 = vld [vmem:[%s1 + $0x44] sm:$0xf]
  %v115 = vld [vmem:[%s1 + $0x48] sm:$0xf]
  %v116 = vld [vmem:[%s1 + $0x4c] sm:$0xf]
  %v117 = vld [vmem:[%s1 + $0x50] sm:$0xf]
  %v118 = vld [vmem:[%s1 + $0x54] sm:$0xf]
  %v119 = vld [vmem:[%s1 + $0x58] sm:$0xf]
  %v120 = vld [vmem:[%s1 + $0x5c] sm:$0xf]
  %v121 = vld [vmem:[%s1 + $0x60] sm:$0xf]
  %v122 = vld [vmem:[%s1 + $0x64] sm:$0xf]
  %v123 = vld [vmem:[%s1 + $0x68] sm:$0xf]
  %v124 = vld [vmem:[%s1 + $0x6c] sm:$0xf]
  %v125 = vld [vmem:[%s1 + $0x70] sm:$0xf]
  %v126 = vld [vmem:[%s1 + $0x74] sm:$0xf]
  %v127 = vld [vmem:[%s1 + $0x78] sm:$0xf]
  %v128 = vld [vmem:[%s1 + $0x7c] sm:$0xf]
  %v129 = vld [vmem:[%s1 + $0x80] sm:$0xf]
  %v130 = vld [vmem:[%s1 + $0x84] sm:$0xf]
  %v131 = vld [vmem:[%s1 + $0x88] sm:$0xf]
  %v132 = vld [vmem:[%s1 + $0x8c] sm:$0xf]
  %v133 = vld [vmem:[%s1 + $0x90] sm:$0xf]
  %v134 = vld [vmem:[%s1 + $0x94] sm:$0xf]
  %v135 = vld [vmem:[%s1 + $0x98] sm:$0xf]
  %v136 = vld [vmem:[%s1 + $0x9c] sm:$0xf]
  %v137 = vld [vmem:[%s1 + $0xa0] sm:$0xf]
  %v138 = vld [vmem:[%s1 + $0xa4] sm:$0xf]
  %v139 = vld [vmem:[%s1 + $0xa8] sm:$0xf]
  %v140 = vld [vmem:[%s1 + $0xac] sm:$0xf]
  %v141 = vld [vmem:[%s1 + $0xb0] sm:$0xf]
  %v142 = vld [vmem:[%s1 + $0xb4] sm:$0xf]
  %v143 = vld [vmem:[%s1 + $0xb8] sm:$0xf]
  %v144 = vld [vmem:[%s1 + $0xbc] sm:$0xf]
  %v145 = vld [vmem:[%s1 + $0xc0] sm:$0xf]
  %v146 = vld [vmem:[%s1 + $0xc4] sm:$0xf]
  %v147 = vld [vmem:[%s1 + $0xc8] sm:$0xf]
  %v148 = vld [vmem:[%s1 + $0xcc] sm:$0xf]
  %v149 = vld [vmem:[%s1 + $0xd0] sm:$0xf]
  %v150 = vld [vmem:[%s1 + $0xd4] sm:$0xf]
  %v151 = vld [vmem:[%s1 + $0xd8] sm:$0xf]
  %v152 = vld [vmem:[%s1 + $0xdc] sm:$0xf]
  %v153 = vld [vmem:[%s1 + $0xe0] sm:$0xf]
  %v154 = vld [vmem:[%s1 + $0xe4] sm:$0xf]
  %v155 = vld [vmem:[%s1 + $0xe8] sm:$0xf]
  %v156 = vld [vmem:[%s1 + $0xec] sm:$0xf]
  %v157 = vld [vmem:[%s1 + $0xf0] sm:$0xf]
  %v158 = vld [vmem:[%s1 + $0xf4] sm:$0xf]
  %v159 = vld [vmem:[%s1 + $0xf8] sm:$0xf]
  %v160 = vld [vmem:[%s1 + $0xfc] sm:$0xf]
  %v161 = vld [vmem:[%s1 + $0x100] sm:$0xf]
  %v162 = vld [vmem:[%s1 + $0x104] sm:$0xf]
  %v163 = vld [vmem:[%s1 + $0x108] sm:$0xf]
  %v164 = vld [vmem:[%s1 + $0x10c] sm:$0xf]
  %v165 = vld [vmem:[%s1 + $0x110] sm:$0xf]
  %v166 = vld [vmem:[%s1 + $0x114] sm:$0xf]
  %v167 = vld [vmem:[%s1 + $0x118] sm:$0xf]
  %v168 = vld [vmem:[%s1 + $0x11c] sm:$0xf]
  %v169 = vld [vmem:[%s1 + $0x120] sm:$0xf]
  %v170 = vld [vmem:[%s1 + $0x124] sm:$0xf]
  %v171 = vld [vmem:[%s1 + $0x128] sm:$0xf]
  %v172 = vld [vmem:[%s1 + $0x12c] sm:$0xf]
  %v173 = vld [vmem:[%s1 + $0x130] sm:$0xf]
  %v174 = vld [vmem:[%s1 + $0x134] sm:$0xf]
  %v175 = vld [vmem:[%s1 + $0x138] sm:$0xf]
  %v176 = vld [vmem:[%s1 + $0x13c] sm:$0xf]
  %v177 = vld [vmem:[%s1 + $0x140] sm:$0xf]
  %v178 = vld [vmem:[%s1 + $0x144] sm:$0xf]
  %v179 = vld [vmem:[%s1 + $0x148] sm:$0xf]
  %v180 = vld [vmem:[%s1 + $0x14c] sm:$0xf]
  %v181 = vld [vmem:[%s1 + $0x150] sm:$0xf]
  %v182 = vld [vmem:[%s1 + $0x154] sm:$0xf]
  %v183 = vld [vmem:[%s1 + $0x158] sm:$0xf]
  %v184 = vld [vmem:[%s1 + $0x15c] sm:$0xf]
  %v185 = vld [vmem:[%s1 + $0x160] sm:$0xf]
  %v186 = vld [vmem:[%s1 + $0x164] sm:$0xf]
  %v187 = vld [vmem:[%s1 + $0x168] sm:$0xf]
  %v188 = vld [vmem:[%s1 + $0x16c] sm:$0xf]
  %v189 = vld [vmem:[%s1 + $0x170] sm:$0xf]
  %v190 = vld [vmem:[%s1 + $0x174] sm:$0xf]
  %v191 = vld [vmem:[%s1 + $0x178] sm:$0xf]
  %v192 = vld [vmem:[%s1 + $0x17c] sm:$0xf]
  %v193 = vld [vmem:[%s1 + $0x180] sm:$0xf]
  %v194 = vld [vmem:[%s1 + $0x184] sm:$0xf]
  %v195 = vld [vmem:[%s1 + $0x188] sm:$0xf]
  %v196 = vld [vmem:[%s1 + $0x18c] sm:$0xf]
  %v197 = vld [vmem:[%s1 + $0x190] sm:$0xf]
  %v198 = vld [vmem:[%s1 + $0x194] sm:$0xf]
  %v199 = vld [vmem:[%s1 + $0x198] sm:$0xf]
  %v200 = vld [vmem:[%s1 + $0x19c] sm:$0xf]
  %v201 = vld [vmem:[%s1 + $0x1a0] sm:$0xf]
  %v202 = vld [vmem:[%s1 + $0x1a4] sm:$0xf]
  %v203 = vld [vmem:[%s1 + $0x1a8] sm:$0xf]
  %v204 = vld [vmem:[%s1 + $0x1ac] sm:$0xf]
  %v205 = vld [vmem:[%s1 + $0x1b0] sm:$0xf]
  %v206 = vld [vmem:[%s1 + $0x1b4] sm:$0xf]
  %v207 = vld [vmem:[%s1 + $0x1b8] sm:$0xf]
  %v208 = vld [vmem:[%s1 + $0x1bc] sm:$0xf]
  %v209 = vld [vmem:[%s1 + $0x1c0] sm:$0xf]
  %v210 = vld [vmem:[%s1 + $0x1c4] sm:$0xf]
  %v211 = vld [vmem:[%s1 + $0x1c8] sm:$0xf]
  %v212 = vld [vmem:[%s1 + $0x1cc] sm:$0xf]
  %v213 = vld [vmem:[%s1 + $0x1d0] sm:$0xf]
  %v214 = vld [vmem:[%s1 + $0x1d4] sm:$0xf]
  %v215 = vld [vmem:[%s1 + $0x1d8] sm:$0xf]
  %v216 = vld [vmem:[%s1 + $0x1dc] sm:$0xf]
  %v217 = vld [vmem:[%s1 + $0x1e0] sm:$0xf]
  %v218 = vld [vmem:[%s1 + $0x1e4] sm:$0xf]
  %v219 = vld [vmem:[%s1 + $0x1e8] sm:$0xf]
  %v220 = vld [vmem:[%s1 + $0x1ec] sm:$0xf]
  %v221 = vld [vmem:[%s1 + $0x1f0] sm:$0xf]
  %v222 = vld [vmem:[%s1 + $0x1f4] sm:$0xf]
  %v223 = vld [vmem:[%s1 + $0x1f8] sm:$0xf]
  %v224 = vld [vmem:[%s1 + $0x1fc] sm:$0xf]
  %v225 = vld [vmem:[%s1 + $0x200] sm:$0xf]
  %v226 = vld [vmem:[%s1 + $0x204] sm:$0xf]
  %v227 = vld [vmem:[%s1 + $0x208] sm:$0xf]
  %v228 = vld [vmem:[%s1 + $0x20c] sm:$0xf]
  %v229 = vld [vmem:[%s1 + $0x210] sm:$0xf]
  %v230 = vld [vmem:[%s1 + $0x214] sm:$0xf]
  %v231 = vld [vmem:[%s1 + $0x218] sm:$0xf]
  %v232 = vld [vmem:[%s1 + $0x21c] sm:$0xf]
  %v233 = vld [vmem:[%s1 + $0x220] sm:$0xf]
  %v234 = vld [vmem:[%s1 + $0x224] sm:$0xf]
  %v235 = vld [vmem:[%s1 + $0x228] sm:$0xf]
  %v236 = vld [vmem:[%s1 + $0x22c] sm:$0xf]
  %v237 = vld [vmem:[%s1 + $0x230] sm:$0xf]
  %v238 = vld [vmem:[%s1 + $0x234] sm:$0xf]
  %v239 = vld [vmem:[%s1 + $0x238] sm:$0xf]
  %v240 = vld [vmem:[%s1 + $0x23c] sm:$0xf]
  %v321 = vunpack.c.l.b16 %v17
  %v322 = vunpack.c.h.b16 %v17
  %v323 = vunpack.c.l.b16 %v18
  %v324 = vunpack.c.h.b16 %v18
  %v325 = vunpack.c.l.b16 %v19
  %v326 = vunpack.c.h.b16 %v19
  %v327 = vunpack.c.l.b16 %v20
  %v328 = vunpack.c.h.b16 %v20
  %v329 = vunpack.c.l.b16 %v21
  %v330 = vunpack.c.l.b16 %v22
  %v331 = vunpack.c.h.b16 %v22
  %v332 = vunpack.c.l.b16 %v23
  %v333 = vunpack.c.h.b16 %v23
  %v334 = vunpack.c.l.b16 %v24
  %v335 = vunpack.c.h.b16 %v24
  %v336 = vunpack.c.l.b16 %v25
  %v337 = vunpack.c.h.b16 %v25
  %v338 = vunpack.c.l.b16 %v26
  %v339 = vunpack.c.l.b16 %v27
  %v340 = vunpack.c.h.b16 %v27
  %v341 = vunpack.c.l.b16 %v28
  %v342 = vunpack.c.h.b16 %v28
  %v343 = vunpack.c.l.b16 %v29
  %v344 = vunpack.c.h.b16 %v29
  %v345 = vunpack.c.l.b16 %v30
  %v346 = vunpack.c.h.b16 %v30
  %v347 = vunpack.c.l.b16 %v31
  %v348 = vunpack.c.l.b16 %v32
  %v349 = vunpack.c.h.b16 %v32
  %v350 = vunpack.c.l.b16 %v33
  %v351 = vunpack.c.h.b16 %v33
  %v352 = vunpack.c.l.b16 %v34
  %v353 = vunpack.c.h.b16 %v34
  %v354 = vunpack.c.l.b16 %v35
  %v355 = vunpack.c.h.b16 %v35
  %v356 = vunpack.c.l.b16 %v36
  %v357 = vunpack.c.l.b16 %v37
  %v358 = vunpack.c.h.b16 %v37
  %v359 = vunpack.c.l.b16 %v38
  %v360 = vunpack.c.h.b16 %v38
  %v361 = vunpack.c.l.b16 %v39
  %v362 = vunpack.c.h.b16 %v39
  %v363 = vunpack.c.l.b16 %v40
  %v364 = vunpack.c.h.b16 %v40
  %v365 = vunpack.c.l.b16 %v41
  %v366 = vunpack.c.l.b16 %v42
  %v367 = vunpack.c.h.b16 %v42
  %v368 = vunpack.c.l.b16 %v43
  %v369 = vunpack.c.h.b16 %v43
  %v370 = vunpack.c.l.b16 %v44
  %v371 = vunpack.c.h.b16 %v44
  %v372 = vunpack.c.l.b16 %v45
  %v373 = vunpack.c.h.b16 %v45
  %v374 = vunpack.c.l.b16 %v46
  %v375 = vunpack.c.l.b16 %v47
  %v376 = vunpack.c.h.b16 %v47
  %v377 = vunpack.c.l.b16 %v48
  %v378 = vunpack.c.h.b16 %v48
  %v379 = vunpack.c.l.b16 %v49
  %v380 = vunpack.c.h.b16 %v49
  %v381 = vunpack.c.l.b16 %v50
  %v382 = vunpack.c.h.b16 %v50
  %v383 = vunpack.c.l.b16 %v51
  %v384 = vunpack.c.l.b16 %v52
  %v385 = vunpack.c.h.b16 %v52
  %v386 = vunpack.c.l.b16 %v53
  %v387 = vunpack.c.h.b16 %v53
  %v388 = vunpack.c.l.b16 %v54
  %v389 = vunpack.c.h.b16 %v54
  %v390 = vunpack.c.l.b16 %v55
  %v391 = vunpack.c.h.b16 %v55
  %v392 = vunpack.c.l.b16 %v56
  %v393 = vunpack.c.l.b16 %v57
  %v394 = vunpack.c.h.b16 %v57
  %v395 = vunpack.c.l.b16 %v58
  %v396 = vunpack.c.h.b16 %v58
  %v397 = vunpack.c.l.b16 %v59
  %v398 = vunpack.c.h.b16 %v59
  %v399 = vunpack.c.l.b16 %v60
  %v400 = vunpack.c.h.b16 %v60
  %v401 = vunpack.c.l.b16 %v61
  %v402 = vunpack.c.l.b16 %v62
  %v403 = vunpack.c.h.b16 %v62
  %v404 = vunpack.c.l.b16 %v63
  %v405 = vunpack.c.h.b16 %v63
  %v406 = vunpack.c.l.b16 %v64
  %v407 = vunpack.c.h.b16 %v64
  %v408 = vunpack.c.l.b16 %v65
  %v409 = vunpack.c.h.b16 %v65
  %v410 = vunpack.c.l.b16 %v66
  %v411 = vunpack.c.l.b16 %v67
  %v412 = vunpack.c.h.b16 %v67
  %v413 = vunpack.c.l.b16 %v68
  %v414 = vunpack.c.h.b16 %v68
  %v415 = vunpack.c.l.b16 %v69
  %v416 = vunpack.c.h.b16 %v69
  %v417 = vunpack.c.l.b16 %v70
  %v418 = vunpack.c.h.b16 %v70
  %v419 = vunpack.c.l.b16 %v71
  %v420 = vunpack.c.l.b16 %v72
  %v421 = vunpack.c.h.b16 %v72
  %v422 = vunpack.c.l.b16 %v73
  %v423 = vunpack.c.h.b16 %v73
  %v424 = vunpack.c.l.b16 %v74
  %v425 = vunpack.c.h.b16 %v74
  %v426 = vunpack.c.l.b16 %v75
  %v427 = vunpack.c.h.b16 %v75
  %v428 = vunpack.c.l.b16 %v76
  %v429 = vunpack.c.l.b16 %v77
  %v430 = vunpack.c.h.b16 %v77
  %v431 = vunpack.c.l.b16 %v78
  %v432 = vunpack.c.h.b16 %v78
  %v433 = vunpack.c.l.b16 %v79
  %v434 = vunpack.c.h.b16 %v79
  %v435 = vunpack.c.l.b16 %v80
  %v436 = vunpack.c.h.b16 %v80
  %v437 = vunpack.c.l.b16 %v81
  %v438 = vunpack.c.l.b16 %v82
  %v439 = vunpack.c.h.b16 %v82
  %v440 = vunpack.c.l.b16 %v83
  %v441 = vunpack.c.h.b16 %v83
  %v442 = vunpack.c.l.b16 %v84
  %v443 = vunpack.c.h.b16 %v84
  %v444 = vunpack.c.l.b16 %v85
  %v445 = vunpack.c.h.b16 %v85
  %v446 = vunpack.c.l.b16 %v86
  %v447 = vunpack.c.l.b16 %v87
  %v448 = vunpack.c.h.b16 %v87
  %v449 = vunpack.c.l.b16 %v88
  %v450 = vunpack.c.h.b16 %v88
  %v451 = vunpack.c.l.b16 %v89
  %v452 = vunpack.c.h.b16 %v89
  %v453 = vunpack.c.l.b16 %v90
  %v454 = vunpack.c.h.b16 %v90
  %v455 = vunpack.c.l.b16 %v91
  %v456 = vunpack.c.l.b16 %v92
  %v457 = vunpack.c.h.b16 %v92
  %v458 = vunpack.c.l.b16 %v93
  %v459 = vunpack.c.h.b16 %v93
  %v460 = vunpack.c.l.b16 %v94
  %v461 = vunpack.c.h.b16 %v94
  %v462 = vunpack.c.l.b16 %v95
  %v463 = vunpack.c.h.b16 %v95
  %v464 = vunpack.c.l.b16 %v96
  %v465 = vpack.c.b16 %v330, %v321
  %v466 = vpack.c.b16 %v331, %v322
  %v467 = vpack.c.b16 %v332, %v323
  %v468 = vpack.c.b16 %v333, %v324
  %v469 = vpack.c.b16 %v334, %v325
  %v470 = vpack.c.b16 %v335, %v326
  %v471 = vpack.c.b16 %v336, %v327
  %v472 = vpack.c.b16 %v337, %v328
  %v473 = vpack.c.b16 %v338, %v329
  %v474 = vpack.c.b16 %v348, %v339
  %v475 = vpack.c.b16 %v349, %v340
  %v476 = vpack.c.b16 %v350, %v341
  %v477 = vpack.c.b16 %v351, %v342
  %v478 = vpack.c.b16 %v352, %v343
  %v479 = vpack.c.b16 %v353, %v344
  %v480 = vpack.c.b16 %v354, %v345
  %v481 = vpack.c.b16 %v355, %v346
  %v482 = vpack.c.b16 %v356, %v347
  %v483 = vpack.c.b16 %v366, %v357
  %v484 = vpack.c.b16 %v367, %v358
  %v485 = vpack.c.b16 %v368, %v359
  %v486 = vpack.c.b16 %v369, %v360
  %v487 = vpack.c.b16 %v370, %v361
  %v488 = vpack.c.b16 %v371, %v362
  %v489 = vpack.c.b16 %v372, %v363
  %v490 = vpack.c.b16 %v373, %v364
  %v491 = vpack.c.b16 %v374, %v365
  %v492 = vpack.c.b16 %v384, %v375
  %v493 = vpack.c.b16 %v385, %v376
  %v494 = vpack.c.b16 %v386, %v377
  %v495 = vpack.c.b16 %v387, %v378
  %v496 = vpack.c.b16 %v388, %v379
  %v497 = vpack.c.b16 %v389, %v380
  %v498 = vpack.c.b16 %v390, %v381
  %v499 = vpack.c.b16 %v391, %v382
  %v500 = vpack.c.b16 %v392, %v383
  %v501 = vpack.c.b16 %v402, %v393
  %v502 = vpack.c.b16 %v403, %v394
  %v503 = vpack.c.b16 %v404, %v395
  %v504 = vpack.c.b16 %v405, %v396
  %v505 = vpack.c.b16 %v406, %v397
  %v506 = vpack.c.b16 %v407, %v398
  %v507 = vpack.c.b16 %v408, %v399
  %v508 = vpack.c.b16 %v409, %v400
  %v509 = vpack.c.b16 %v410, %v401
  %v510 = vpack.c.b16 %v420, %v411
  %v511 = vpack.c.b16 %v421, %v412
  %v512 = vpack.c.b16 %v422, %v413
  %v513 = vpack.c.b16 %v423, %v414
  %v514 = vpack.c.b16 %v424, %v415
  %v515 = vpack.c.b16 %v425, %v416
  %v516 = vpack.c.b16 %v426, %v417
  %v517 = vpack.c.b16 %v427, %v418
  %v518 = vpack.c.b16 %v428, %v419
  %v519 = vpack.c.b16 %v438, %v429
  %v520 = vpack.c.b16 %v439, %v430
  %v521 = vpack.c.b16 %v440, %v431
  %v522 = vpack.c.b16 %v441, %v432
  %v523 = vpack.c.b16 %v442, %v433
  %v524 = vpack.c.b16 %v443, %v434
  %v525 = vpack.c.b16 %v444, %v435
  %v526 = vpack.c.b16 %v445, %v436
  %v527 = vpack.c.b16 %v446, %v437
  %v528 = vpack.c.b16 %v456, %v447
  %v529 = vpack.c.b16 %v457, %v448
  %v530 = vpack.c.b16 %v458, %v449
  %v531 = vpack.c.b16 %v459, %v450
  %v532 = vpack.c.b16 %v460, %v451
  %v533 = vpack.c.b16 %v461, %v452
  %v534 = vpack.c.b16 %v462, %v453
  %v535 = vpack.c.b16 %v463, %v454
  %v536 = vpack.c.b16 %v464, %v455
  %v753 = vunpack.c.l.b16 %v97
  %v754 = vunpack.c.l.b16 %v98
  %v755 = vunpack.c.l.b16 %v99
  %v756 = vunpack.c.l.b16 %v100
  %v757 = vunpack.c.l.b16 %v101
  %v758 = vunpack.c.l.b16 %v102
  %v759 = vunpack.c.l.b16 %v103
  %v760 = vunpack.c.l.b16 %v104
  %v761 = vunpack.c.l.b16 %v105
  %v762 = vunpack.c.l.b16 %v106
  %v763 = vunpack.c.l.b16 %v107
  %v764 = vunpack.c.l.b16 %v108
  %v765 = vunpack.c.l.b16 %v109
  %v766 = vunpack.c.l.b16 %v110
  %v767 = vunpack.c.l.b16 %v111
  %v768 = vunpack.c.l.b16 %v112
  %v769 = vunpack.c.l.b16 %v113
  %v770 = vunpack.c.l.b16 %v114
  %v771 = vunpack.c.l.b16 %v115
  %v772 = vunpack.c.l.b16 %v116
  %v773 = vunpack.c.l.b16 %v117
  %v774 = vunpack.c.l.b16 %v118
  %v775 = vunpack.c.l.b16 %v119
  %v776 = vunpack.c.l.b16 %v120
  %v777 = vunpack.c.l.b16 %v121
  %v778 = vunpack.c.l.b16 %v122
  %v779 = vunpack.c.l.b16 %v123
  %v780 = vunpack.c.l.b16 %v124
  %v781 = vunpack.c.l.b16 %v125
  %v782 = vunpack.c.l.b16 %v126
  %v783 = vunpack.c.l.b16 %v127
  %v784 = vunpack.c.l.b16 %v128
  %v785 = vunpack.c.l.b16 %v129
  %v786 = vunpack.c.l.b16 %v130
  %v787 = vunpack.c.l.b16 %v131
  %v788 = vunpack.c.l.b16 %v132
  %v789 = vunpack.c.l.b16 %v133
  %v790 = vunpack.c.l.b16 %v134
  %v791 = vunpack.c.l.b16 %v135
  %v792 = vunpack.c.l.b16 %v136
  %v793 = vunpack.c.l.b16 %v137
  %v794 = vunpack.c.l.b16 %v138
  %v795 = vunpack.c.l.b16 %v139
  %v796 = vunpack.c.l.b16 %v140
  %v797 = vunpack.c.l.b16 %v141
  %v798 = vunpack.c.l.b16 %v142
  %v799 = vunpack.c.l.b16 %v143
  %v800 = vunpack.c.l.b16 %v144
  %v801 = vunpack.c.l.b16 %v145
  %v802 = vunpack.c.l.b16 %v146
  %v803 = vunpack.c.l.b16 %v147
  %v804 = vunpack.c.l.b16 %v148
  %v805 = vunpack.c.l.b16 %v149
  %v806 = vunpack.c.l.b16 %v150
  %v807 = vunpack.c.l.b16 %v151
  %v808 = vunpack.c.l.b16 %v152
  %v809 = vunpack.c.l.b16 %v153
  %v810 = vunpack.c.l.b16 %v154
  %v811 = vunpack.c.l.b16 %v155
  %v812 = vunpack.c.l.b16 %v156
  %v813 = vunpack.c.l.b16 %v157
  %v814 = vunpack.c.l.b16 %v158
  %v815 = vunpack.c.l.b16 %v159
  %v816 = vunpack.c.l.b16 %v160
  %v817 = vunpack.c.l.b16 %v161
  %v818 = vunpack.c.l.b16 %v162
  %v819 = vunpack.c.l.b16 %v163
  %v820 = vunpack.c.l.b16 %v164
  %v821 = vunpack.c.l.b16 %v165
  %v822 = vunpack.c.l.b16 %v166
  %v823 = vunpack.c.l.b16 %v167
  %v824 = vunpack.c.l.b16 %v168
  %v825 = vunpack.c.l.b16 %v169
  %v826 = vunpack.c.l.b16 %v170
  %v827 = vunpack.c.l.b16 %v171
  %v828 = vunpack.c.l.b16 %v172
  %v829 = vunpack.c.l.b16 %v173
  %v830 = vunpack.c.l.b16 %v174
  %v831 = vunpack.c.l.b16 %v175
  %v832 = vunpack.c.l.b16 %v176
  %v833 = vunpack.c.l.b16 %v177
  %v834 = vunpack.c.l.b16 %v178
  %v835 = vunpack.c.l.b16 %v179
  %v836 = vunpack.c.l.b16 %v180
  %v837 = vunpack.c.l.b16 %v181
  %v838 = vunpack.c.l.b16 %v182
  %v839 = vunpack.c.l.b16 %v183
  %v840 = vunpack.c.l.b16 %v184
  %v841 = vunpack.c.l.b16 %v185
  %v842 = vunpack.c.l.b16 %v186
  %v843 = vunpack.c.l.b16 %v187
  %v844 = vunpack.c.l.b16 %v188
  %v845 = vunpack.c.l.b16 %v189
  %v846 = vunpack.c.l.b16 %v190
  %v847 = vunpack.c.l.b16 %v191
  %v848 = vunpack.c.l.b16 %v192
  %v849 = vunpack.c.l.b16 %v193
  %v850 = vunpack.c.l.b16 %v194
  %v851 = vunpack.c.l.b16 %v195
  %v852 = vunpack.c.l.b16 %v196
  %v853 = vunpack.c.l.b16 %v197
  %v854 = vunpack.c.l.b16 %v198
  %v855 = vunpack.c.l.b16 %v199
  %v856 = vunpack.c.l.b16 %v200
  %v857 = vunpack.c.l.b16 %v201
  %v858 = vunpack.c.l.b16 %v202
  %v859 = vunpack.c.l.b16 %v203
  %v860 = vunpack.c.l.b16 %v204
  %v861 = vunpack.c.l.b16 %v205
  %v862 = vunpack.c.l.b16 %v206
  %v863 = vunpack.c.l.b16 %v207
  %v864 = vunpack.c.l.b16 %v208
  %v865 = vunpack.c.l.b16 %v209
  %v866 = vunpack.c.l.b16 %v210
  %v867 = vunpack.c.l.b16 %v211
  %v868 = vunpack.c.l.b16 %v212
  %v869 = vunpack.c.l.b16 %v213
  %v870 = vunpack.c.l.b16 %v214
  %v871 = vunpack.c.l.b16 %v215
  %v872 = vunpack.c.l.b16 %v216
  %v873 = vunpack.c.l.b16 %v217
  %v874 = vunpack.c.l.b16 %v218
  %v875 = vunpack.c.l.b16 %v219
  %v876 = vunpack.c.l.b16 %v220
  %v877 = vunpack.c.l.b16 %v221
  %v878 = vunpack.c.l.b16 %v222
  %v879 = vunpack.c.l.b16 %v223
  %v880 = vunpack.c.l.b16 %v224
  %v881 = vunpack.c.l.b16 %v225
  %v882 = vunpack.c.l.b16 %v226
  %v883 = vunpack.c.l.b16 %v227
  %v884 = vunpack.c.l.b16 %v228
  %v885 = vunpack.c.l.b16 %v229
  %v886 = vunpack.c.l.b16 %v230
  %v887 = vunpack.c.l.b16 %v231
  %v888 = vunpack.c.l.b16 %v232
  %v889 = vunpack.c.l.b16 %v233
  %v890 = vunpack.c.l.b16 %v234
  %v891 = vunpack.c.l.b16 %v235
  %v892 = vunpack.c.l.b16 %v236
  %v893 = vunpack.c.l.b16 %v237
  %v894 = vunpack.c.l.b16 %v238
  %v895 = vunpack.c.l.b16 %v239
  %v896 = vunpack.c.l.b16 %v240
  %v897 = vpack.c.b16 %v754, %v753
  %v898 = vpack.c.b16 %v756, %v755
  %v899 = vpack.c.b16 %v758, %v757
  %v900 = vpack.c.b16 %v760, %v759
  %v901 = vpack.c.b16 %v762, %v761
  %v902 = vpack.c.b16 %v764, %v763
  %v903 = vpack.c.b16 %v766, %v765
  %v904 = vpack.c.b16 %v768, %v767
  %v905 = vpack.c.b16 %v770, %v769
  %v906 = vpack.c.b16 %v772, %v771
  %v907 = vpack.c.b16 %v774, %v773
  %v908 = vpack.c.b16 %v776, %v775
  %v909 = vpack.c.b16 %v778, %v777
  %v910 = vpack.c.b16 %v780, %v779
  %v911 = vpack.c.b16 %v782, %v781
  %v912 = vpack.c.b16 %v784, %v783
  %v913 = vpack.c.b16 %v786, %v785
  %v914 = vpack.c.b16 %v788, %v787
  %v915 = vpack.c.b16 %v790, %v789
  %v916 = vpack.c.b16 %v792, %v791
  %v917 = vpack.c.b16 %v794, %v793
  %v918 = vpack.c.b16 %v796, %v795
  %v919 = vpack.c.b16 %v798, %v797
  %v920 = vpack.c.b16 %v800, %v799
  %v921 = vpack.c.b16 %v802, %v801
  %v922 = vpack.c.b16 %v804, %v803
  %v923 = vpack.c.b16 %v806, %v805
  %v924 = vpack.c.b16 %v808, %v807
  %v925 = vpack.c.b16 %v810, %v809
  %v926 = vpack.c.b16 %v812, %v811
  %v927 = vpack.c.b16 %v814, %v813
  %v928 = vpack.c.b16 %v816, %v815
  %v929 = vpack.c.b16 %v818, %v817
  %v930 = vpack.c.b16 %v820, %v819
  %v931 = vpack.c.b16 %v822, %v821
  %v932 = vpack.c.b16 %v824, %v823
  %v933 = vpack.c.b16 %v826, %v825
  %v934 = vpack.c.b16 %v828, %v827
  %v935 = vpack.c.b16 %v830, %v829
  %v936 = vpack.c.b16 %v832, %v831
  %v937 = vpack.c.b16 %v834, %v833
  %v938 = vpack.c.b16 %v836, %v835
  %v939 = vpack.c.b16 %v838, %v837
  %v940 = vpack.c.b16 %v840, %v839
  %v941 = vpack.c.b16 %v842, %v841
  %v942 = vpack.c.b16 %v844, %v843
  %v943 = vpack.c.b16 %v846, %v845
  %v944 = vpack.c.b16 %v848, %v847
  %v945 = vpack.c.b16 %v850, %v849
  %v946 = vpack.c.b16 %v852, %v851
  %v947 = vpack.c.b16 %v854, %v853
  %v948 = vpack.c.b16 %v856, %v855
  %v949 = vpack.c.b16 %v858, %v857
  %v950 = vpack.c.b16 %v860, %v859
  %v951 = vpack.c.b16 %v862, %v861
  %v952 = vpack.c.b16 %v864, %v863
  %v953 = vpack.c.b16 %v866, %v865
  %v954 = vpack.c.b16 %v868, %v867
  %v955 = vpack.c.b16 %v870, %v869
  %v956 = vpack.c.b16 %v872, %v871
  %v957 = vpack.c.b16 %v874, %v873
  %v958 = vpack.c.b16 %v876, %v875
  %v959 = vpack.c.b16 %v878, %v877
  %v960 = vpack.c.b16 %v880, %v879
  %v961 = vpack.c.b16 %v882, %v881
  %v962 = vpack.c.b16 %v884, %v883
  %v963 = vpack.c.b16 %v886, %v885
  %v964 = vpack.c.b16 %v888, %v887
  %v965 = vpack.c.b16 %v890, %v889
  %v966 = vpack.c.b16 %v892, %v891
  %v967 = vpack.c.b16 %v894, %v893
  %v968 = vpack.c.b16 %v896, %v895
  %1041 = vmatpush.bf16.msra.mxu0 %v904
  %1042 = vmatpush.bf16.msra.mxu0 %v903
  %1043 = vmatpush.bf16.msra.mxu0 %v902
  %1044 = vmatpush.bf16.msra.mxu0 %v901
  %1045 = vmatpush.bf16.msra.mxu0 %v900
  %1046 = vmatpush.bf16.msra.mxu0 %v899
  %1047 = vmatpush.bf16.msra.mxu0 %v898
  %1048 = vmatpush.bf16.msra.mxu0 %v897
  %1049 = vmatmul.bf16.gmra.mxu0 %v465
  %v1050 = vpop.f32.mrf.mxu0
  %v1051 = vadd.f32 0.0, %v1050
  %v1052 = vpop.f32.mrf.mxu0
  %v1053 = vadd.f32 0.0, %v1052
  %1054 = vmatmul.bf16.gmra.mxu0 %v474
  %v1055 = vpop.f32.mrf.mxu0
  %v1056 = vadd.f32 0.0, %v1055
  %v1057 = vpop.f32.mrf.mxu0
  %v1058 = vadd.f32 0.0, %v1057
  %1059 = vmatmul.bf16.gmra.mxu0 %v483
  %v1060 = vpop.f32.mrf.mxu0
  %v1061 = vadd.f32 0.0, %v1060
  %v1062 = vpop.f32.mrf.mxu0
  %v1063 = vadd.f32 0.0, %v1062
  %1064 = vmatmul.bf16.gmra.mxu0 %v492
  %v1065 = vpop.f32.mrf.mxu0
  %v1066 = vadd.f32 0.0, %v1065
  %v1067 = vpop.f32.mrf.mxu0
  %v1068 = vadd.f32 0.0, %v1067
  %1069 = vmatmul.bf16.gmra.mxu0 %v501
  %v1070 = vpop.f32.mrf.mxu0
  %v1071 = vadd.f32 0.0, %v1070
  %v1072 = vpop.f32.mrf.mxu0
  %v1073 = vadd.f32 0.0, %v1072
  %1074 = vmatmul.bf16.gmra.mxu0 %v510
  %v1075 = vpop.f32.mrf.mxu0
  %v1076 = vadd.f32 0.0, %v1075
  %v1077 = vpop.f32.mrf.mxu0
  %v1078 = vadd.f32 0.0, %v1077
  %1079 = vmatmul.bf16.gmra.mxu0 %v519
  %v1080 = vpop.f32.mrf.mxu0
  %v1081 = vadd.f32 0.0, %v1080
  %v1082 = vpop.f32.mrf.mxu0
  %v1083 = vadd.f32 0.0, %v1082
  %1084 = vmatmul.bf16.gmra.mxu0 %v528
  %v1085 = vpop.f32.mrf.mxu0
  %v1086 = vadd.f32 0.0, %v1085
  %v1087 = vpop.f32.mrf.mxu0
  %v1088 = vadd.f32 0.0, %v1087
  %1089 = vdwg.mxu0
  %1090 = vmatpush.bf16.msra.mxu0 %v912
  %1091 = vmatpush.bf16.msra.mxu0 %v911
  %1092 = vmatpush.bf16.msra.mxu0 %v910
  %1093 = vmatpush.bf16.msra.mxu0 %v909
  %1094 = vmatpush.bf16.msra.mxu0 %v908
  %1095 = vmatpush.bf16.msra.mxu0 %v907
  %1096 = vmatpush.bf16.msra.mxu0 %v906
  %1097 = vmatpush.bf16.msra.mxu0 %v905
  %1098 = vmatmul.bf16.gmra.mxu0 %v466
  %v1099 = vpop.f32.mrf.mxu0
  %v1100 = vadd.f32 %v1051, %v1099
  %v1101 = vpop.f32.mrf.mxu0
  %v1102 = vadd.f32 %v1053, %v1101
  %1103 = vmatmul.bf16.gmra.mxu0 %v475
  %v1104 = vpop.f32.mrf.mxu0
  %v1105 = vadd.f32 %v1056, %v1104
  %v1106 = vpop.f32.mrf.mxu0
  %v1107 = vadd.f32 %v1058, %v1106
  %1108 = vmatmul.bf16.gmra.mxu0 %v484
  %v1109 = vpop.f32.mrf.mxu0
  %v1110 = vadd.f32 %v1061, %v1109
  %v1111 = vpop.f32.mrf.mxu0
  %v1112 = vadd.f32 %v1063, %v1111
  %1113 = vmatmul.bf16.gmra.mxu0 %v493
  %v1114 = vpop.f32.mrf.mxu0
  %v1115 = vadd.f32 %v1066, %v1114
  %v1116 = vpop.f32.mrf.mxu0
  %v1117 = vadd.f32 %v1068, %v1116
  %1118 = vmatmul.bf16.gmra.mxu0 %v502
  %v1119 = vpop.f32.mrf.mxu0
  %v1120 = vadd.f32 %v1071, %v1119
  %v1121 = vpop.f32.mrf.mxu0
  %v1122 = vadd.f32 %v1073, %v1121
  %1123 = vmatmul.bf16.gmra.mxu0 %v511
  %v1124 = vpop.f32.mrf.mxu0
  %v1125 = vadd.f32 %v1076, %v1124
  %v1126 = vpop.f32.mrf.mxu0
  %v1127 = vadd.f32 %v1078, %v1126
  %1128 = vmatmul.bf16.gmra.mxu0 %v520
  %v1129 = vpop.f32.mrf.mxu0
  %v1130 = vadd.f32 %v1081, %v1129
  %v1131 = vpop.f32.mrf.mxu0
  %v1132 = vadd.f32 %v1083, %v1131
  %1133 = vmatmul.bf16.gmra.mxu0 %v529
  %v1134 = vpop.f32.mrf.mxu0
  %v1135 = vadd.f32 %v1086, %v1134
  %v1136 = vpop.f32.mrf.mxu0
  %v1137 = vadd.f32 %v1088, %v1136
  %1138 = vdwg.mxu0
  %1139 = vmatpush.bf16.msra.mxu0 %v920
  %1140 = vmatpush.bf16.msra.mxu0 %v919
  %1141 = vmatpush.bf16.msra.mxu0 %v918
  %1142 = vmatpush.bf16.msra.mxu0 %v917
  %1143 = vmatpush.bf16.msra.mxu0 %v916
  %1144 = vmatpush.bf16.msra.mxu0 %v915
  %1145 = vmatpush.bf16.msra.mxu0 %v914
  %1146 = vmatpush.bf16.msra.mxu0 %v913
  %1147 = vmatmul.bf16.gmra.mxu0 %v467
  %v1148 = vpop.f32.mrf.mxu0
  %v1149 = vadd.f32 %v1100, %v1148
  %v1150 = vpop.f32.mrf.mxu0
  %v1151 = vadd.f32 %v1102, %v1150
  %1152 = vmatmul.bf16.gmra.mxu0 %v476
  %v1153 = vpop.f32.mrf.mxu0
  %v1154 = vadd.f32 %v1105, %v1153
  %v1155 = vpop.f32.mrf.mxu0
  %v1156 = vadd.f32 %v1107, %v1155
  %1157 = vmatmul.bf16.gmra.mxu0 %v485
  %v1158 = vpop.f32.mrf.mxu0
  %v1159 = vadd.f32 %v1110, %v1158
  %v1160 = vpop.f32.mrf.mxu0
  %v1161 = vadd.f32 %v1112, %v1160
  %1162 = vmatmul.bf16.gmra.mxu0 %v494
  %v1163 = vpop.f32.mrf.mxu0
  %v1164 = vadd.f32 %v1115, %v1163
  %v1165 = vpop.f32.mrf.mxu0
  %v1166 = vadd.f32 %v1117, %v1165
  %1167 = vmatmul.bf16.gmra.mxu0 %v503
  %v1168 = vpop.f32.mrf.mxu0
  %v1169 = vadd.f32 %v1120, %v1168
  %v1170 = vpop.f32.mrf.mxu0
  %v1171 = vadd.f32 %v1122, %v1170
  %1172 = vmatmul.bf16.gmra.mxu0 %v512
  %v1173 = vpop.f32.mrf.mxu0
  %v1174 = vadd.f32 %v1125, %v1173
  %v1175 = vpop.f32.mrf.mxu0
  %v1176 = vadd.f32 %v1127, %v1175
  %1177 = vmatmul.bf16.gmra.mxu0 %v521
  %v1178 = vpop.f32.mrf.mxu0
  %v1179 = vadd.f32 %v1130, %v1178
  %v1180 = vpop.f32.mrf.mxu0
  %v1181 = vadd.f32 %v1132, %v1180
  %1182 = vmatmul.bf16.gmra.mxu0 %v530
  %v1183 = vpop.f32.mrf.mxu0
  %v1184 = vadd.f32 %v1135, %v1183
  %v1185 = vpop.f32.mrf.mxu0
  %v1186 = vadd.f32 %v1137, %v1185
  %1187 = vdwg.mxu0
  %1188 = vmatpush.bf16.msra.mxu0 %v928
  %1189 = vmatpush.bf16.msra.mxu0 %v927
  %1190 = vmatpush.bf16.msra.mxu0 %v926
  %1191 = vmatpush.bf16.msra.mxu0 %v925
  %1192 = vmatpush.bf16.msra.mxu0 %v924
  %1193 = vmatpush.bf16.msra.mxu0 %v923
  %1194 = vmatpush.bf16.msra.mxu0 %v922
  %1195 = vmatpush.bf16.msra.mxu0 %v921
  %1196 = vmatmul.bf16.gmra.mxu0 %v468
  %v1197 = vpop.f32.mrf.mxu0
  %v1198 = vadd.f32 %v1149, %v1197
  %v1199 = vpop.f32.mrf.mxu0
  %v1200 = vadd.f32 %v1151, %v1199
  %1201 = vmatmul.bf16.gmra.mxu0 %v477
  %v1202 = vpop.f32.mrf.mxu0
  %v1203 = vadd.f32 %v1154, %v1202
  %v1204 = vpop.f32.mrf.mxu0
  %v1205 = vadd.f32 %v1156, %v1204
  %1206 = vmatmul.bf16.gmra.mxu0 %v486
  %v1207 = vpop.f32.mrf.mxu0
  %v1208 = vadd.f32 %v1159, %v1207
  %v1209 = vpop.f32.mrf.mxu0
  %v1210 = vadd.f32 %v1161, %v1209
  %1211 = vmatmul.bf16.gmra.mxu0 %v495
  %v1212 = vpop.f32.mrf.mxu0
  %v1213 = vadd.f32 %v1164, %v1212
  %v1214 = vpop.f32.mrf.mxu0
  %v1215 = vadd.f32 %v1166, %v1214
  %1216 = vmatmul.bf16.gmra.mxu0 %v504
  %v1217 = vpop.f32.mrf.mxu0
  %v1218 = vadd.f32 %v1169, %v1217
  %v1219 = vpop.f32.mrf.mxu0
  %v1220 = vadd.f32 %v1171, %v1219
  %1221 = vmatmul.bf16.gmra.mxu0 %v513
  %v1222 = vpop.f32.mrf.mxu0
  %v1223 = vadd.f32 %v1174, %v1222
  %v1224 = vpop.f32.mrf.mxu0
  %v1225 = vadd.f32 %v1176, %v1224
  %1226 = vmatmul.bf16.gmra.mxu0 %v522
  %v1227 = vpop.f32.mrf.mxu0
  %v1228 = vadd.f32 %v1179, %v1227
  %v1229 = vpop.f32.mrf.mxu0
  %v1230 = vadd.f32 %v1181, %v1229
  %1231 = vmatmul.bf16.gmra.mxu0 %v531
  %v1232 = vpop.f32.mrf.mxu0
  %v1233 = vadd.f32 %v1184, %v1232
  %v1234 = vpop.f32.mrf.mxu0
  %v1235 = vadd.f32 %v1186, %v1234
  %1236 = vdwg.mxu0
  %1237 = vmatpush.bf16.msra.mxu0 %v936
  %1238 = vmatpush.bf16.msra.mxu0 %v935
  %1239 = vmatpush.bf16.msra.mxu0 %v934
  %1240 = vmatpush.bf16.msra.mxu0 %v933
  %1241 = vmatpush.bf16.msra.mxu0 %v932
  %1242 = vmatpush.bf16.msra.mxu0 %v931
  %1243 = vmatpush.bf16.msra.mxu0 %v930
  %1244 = vmatpush.bf16.msra.mxu0 %v929
  %1245 = vmatmul.bf16.gmra.mxu0 %v469
  %v1246 = vpop.f32.mrf.mxu0
  %v1247 = vadd.f32 %v1198, %v1246
  %v1248 = vpop.f32.mrf.mxu0
  %v1249 = vadd.f32 %v1200, %v1248
  %1250 = vmatmul.bf16.gmra.mxu0 %v478
  %v1251 = vpop.f32.mrf.mxu0
  %v1252 = vadd.f32 %v1203, %v1251
  %v1253 = vpop.f32.mrf.mxu0
  %v1254 = vadd.f32 %v1205, %v1253
  %1255 = vmatmul.bf16.gmra.mxu0 %v487
  %v1256 = vpop.f32.mrf.mxu0
  %v1257 = vadd.f32 %v1208, %v1256
  %v1258 = vpop.f32.mrf.mxu0
  %v1259 = vadd.f32 %v1210, %v1258
  %1260 = vmatmul.bf16.gmra.mxu0 %v496
  %v1261 = vpop.f32.mrf.mxu0
  %v1262 = vadd.f32 %v1213, %v1261
  %v1263 = vpop.f32.mrf.mxu0
  %v1264 = vadd.f32 %v1215, %v1263
  %1265 = vmatmul.bf16.gmra.mxu0 %v505
  %v1266 = vpop.f32.mrf.mxu0
  %v1267 = vadd.f32 %v1218, %v1266
  %v1268 = vpop.f32.mrf.mxu0
  %v1269 = vadd.f32 %v1220, %v1268
  %1270 = vmatmul.bf16.gmra.mxu0 %v514
  %v1271 = vpop.f32.mrf.mxu0
  %v1272 = vadd.f32 %v1223, %v1271
  %v1273 = vpop.f32.mrf.mxu0
  %v1274 = vadd.f32 %v1225, %v1273
  %1275 = vmatmul.bf16.gmra.mxu0 %v523
  %v1276 = vpop.f32.mrf.mxu0
  %v1277 = vadd.f32 %v1228, %v1276
  %v1278 = vpop.f32.mrf.mxu0
  %v1279 = vadd.f32 %v1230, %v1278
  %1280 = vmatmul.bf16.gmra.mxu0 %v532
  %v1281 = vpop.f32.mrf.mxu0
  %v1282 = vadd.f32 %v1233, %v1281
  %v1283 = vpop.f32.mrf.mxu0
  %v1284 = vadd.f32 %v1235, %v1283
  %1285 = vdwg.mxu0
  %1286 = vmatpush.bf16.msra.mxu0 %v944
  %1287 = vmatpush.bf16.msra.mxu0 %v943
  %1288 = vmatpush.bf16.msra.mxu0 %v942
  %1289 = vmatpush.bf16.msra.mxu0 %v941
  %1290 = vmatpush.bf16.msra.mxu0 %v940
  %1291 = vmatpush.bf16.msra.mxu0 %v939
  %1292 = vmatpush.bf16.msra.mxu0 %v938
  %1293 = vmatpush.bf16.msra.mxu0 %v937
  %1294 = vmatmul.bf16.gmra.mxu0 %v470
  %v1295 = vpop.f32.mrf.mxu0
  %v1296 = vadd.f32 %v1247, %v1295
  %v1297 = vpop.f32.mrf.mxu0
  %v1298 = vadd.f32 %v1249, %v1297
  %1299 = vmatmul.bf16.gmra.mxu0 %v479
  %v1300 = vpop.f32.mrf.mxu0
  %v1301 = vadd.f32 %v1252, %v1300
  %v1302 = vpop.f32.mrf.mxu0
  %v1303 = vadd.f32 %v1254, %v1302
  %1304 = vmatmul.bf16.gmra.mxu0 %v488
  %v1305 = vpop.f32.mrf.mxu0
  %v1306 = vadd.f32 %v1257, %v1305
  %v1307 = vpop.f32.mrf.mxu0
  %v1308 = vadd.f32 %v1259, %v1307
  %1309 = vmatmul.bf16.gmra.mxu0 %v497
  %v1310 = vpop.f32.mrf.mxu0
  %v1311 = vadd.f32 %v1262, %v1310
  %v1312 = vpop.f32.mrf.mxu0
  %v1313 = vadd.f32 %v1264, %v1312
  %1314 = vmatmul.bf16.gmra.mxu0 %v506
  %v1315 = vpop.f32.mrf.mxu0
  %v1316 = vadd.f32 %v1267, %v1315
  %v1317 = vpop.f32.mrf.mxu0
  %v1318 = vadd.f32 %v1269, %v1317
  %1319 = vmatmul.bf16.gmra.mxu0 %v515
  %v1320 = vpop.f32.mrf.mxu0
  %v1321 = vadd.f32 %v1272, %v1320
  %v1322 = vpop.f32.mrf.mxu0
  %v1323 = vadd.f32 %v1274, %v1322
  %1324 = vmatmul.bf16.gmra.mxu0 %v524
  %v1325 = vpop.f32.mrf.mxu0
  %v1326 = vadd.f32 %v1277, %v1325
  %v1327 = vpop.f32.mrf.mxu0
  %v1328 = vadd.f32 %v1279, %v1327
  %1329 = vmatmul.bf16.gmra.mxu0 %v533
  %v1330 = vpop.f32.mrf.mxu0
  %v1331 = vadd.f32 %v1282, %v1330
  %v1332 = vpop.f32.mrf.mxu0
  %v1333 = vadd.f32 %v1284, %v1332
  %1334 = vdwg.mxu0
  %1335 = vmatpush.bf16.msra.mxu0 %v952
  %1336 = vmatpush.bf16.msra.mxu0 %v951
  %1337 = vmatpush.bf16.msra.mxu0 %v950
  %1338 = vmatpush.bf16.msra.mxu0 %v949
  %1339 = vmatpush.bf16.msra.mxu0 %v948
  %1340 = vmatpush.bf16.msra.mxu0 %v947
  %1341 = vmatpush.bf16.msra.mxu0 %v946
  %1342 = vmatpush.bf16.msra.mxu0 %v945
  %1343 = vmatmul.bf16.gmra.mxu0 %v471
  %v1344 = vpop.f32.mrf.mxu0
  %v1345 = vadd.f32 %v1296, %v1344
  %v1346 = vpop.f32.mrf.mxu0
  %v1347 = vadd.f32 %v1298, %v1346
  %1348 = vmatmul.bf16.gmra.mxu0 %v480
  %v1349 = vpop.f32.mrf.mxu0
  %v1350 = vadd.f32 %v1301, %v1349
  %v1351 = vpop.f32.mrf.mxu0
  %v1352 = vadd.f32 %v1303, %v1351
  %1353 = vmatmul.bf16.gmra.mxu0 %v489
  %v1354 = vpop.f32.mrf.mxu0
  %v1355 = vadd.f32 %v1306, %v1354
  %v1356 = vpop.f32.mrf.mxu0
  %v1357 = vadd.f32 %v1308, %v1356
  %1358 = vmatmul.bf16.gmra.mxu0 %v498
  %v1359 = vpop.f32.mrf.mxu0
  %v1360 = vadd.f32 %v1311, %v1359
  %v1361 = vpop.f32.mrf.mxu0
  %v1362 = vadd.f32 %v1313, %v1361
  %1363 = vmatmul.bf16.gmra.mxu0 %v507
  %v1364 = vpop.f32.mrf.mxu0
  %v1365 = vadd.f32 %v1316, %v1364
  %v1366 = vpop.f32.mrf.mxu0
  %v1367 = vadd.f32 %v1318, %v1366
  %1368 = vmatmul.bf16.gmra.mxu0 %v516
  %v1369 = vpop.f32.mrf.mxu0
  %v1370 = vadd.f32 %v1321, %v1369
  %v1371 = vpop.f32.mrf.mxu0
  %v1372 = vadd.f32 %v1323, %v1371
  %1373 = vmatmul.bf16.gmra.mxu0 %v525
  %v1374 = vpop.f32.mrf.mxu0
  %v1375 = vadd.f32 %v1326, %v1374
  %v1376 = vpop.f32.mrf.mxu0
  %v1377 = vadd.f32 %v1328, %v1376
  %1378 = vmatmul.bf16.gmra.mxu0 %v534
  %v1379 = vpop.f32.mrf.mxu0
  %v1380 = vadd.f32 %v1331, %v1379
  %v1381 = vpop.f32.mrf.mxu0
  %v1382 = vadd.f32 %v1333, %v1381
  %1383 = vdwg.mxu0
  %1384 = vmatpush.bf16.msra.mxu0 %v960
  %1385 = vmatpush.bf16.msra.mxu0 %v959
  %1386 = vmatpush.bf16.msra.mxu0 %v958
  %1387 = vmatpush.bf16.msra.mxu0 %v957
  %1388 = vmatpush.bf16.msra.mxu0 %v956
  %1389 = vmatpush.bf16.msra.mxu0 %v955
  %1390 = vmatpush.bf16.msra.mxu0 %v954
  %1391 = vmatpush.bf16.msra.mxu0 %v953
  %1392 = vmatmul.bf16.gmra.mxu0 %v472
  %v1393 = vpop.f32.mrf.mxu0
  %v1394 = vadd.f32 %v1345, %v1393
  %v1395 = vpop.f32.mrf.mxu0
  %v1396 = vadd.f32 %v1347, %v1395
  %1397 = vmatmul.bf16.gmra.mxu0 %v481
  %v1398 = vpop.f32.mrf.mxu0
  %v1399 = vadd.f32 %v1350, %v1398
  %v1400 = vpop.f32.mrf.mxu0
  %v1401 = vadd.f32 %v1352, %v1400
  %1402 = vmatmul.bf16.gmra.mxu0 %v490
  %v1403 = vpop.f32.mrf.mxu0
  %v1404 = vadd.f32 %v1355, %v1403
  %v1405 = vpop.f32.mrf.mxu0
  %v1406 = vadd.f32 %v1357, %v1405
  %1407 = vmatmul.bf16.gmra.mxu0 %v499
  %v1408 = vpop.f32.mrf.mxu0
  %v1409 = vadd.f32 %v1360, %v1408
  %v1410 = vpop.f32.mrf.mxu0
  %v1411 = vadd.f32 %v1362, %v1410
  %1412 = vmatmul.bf16.gmra.mxu0 %v508
  %v1413 = vpop.f32.mrf.mxu0
  %v1414 = vadd.f32 %v1365, %v1413
  %v1415 = vpop.f32.mrf.mxu0
  %v1416 = vadd.f32 %v1367, %v1415
  %1417 = vmatmul.bf16.gmra.mxu0 %v517
  %v1418 = vpop.f32.mrf.mxu0
  %v1419 = vadd.f32 %v1370, %v1418
  %v1420 = vpop.f32.mrf.mxu0
  %v1421 = vadd.f32 %v1372, %v1420
  %1422 = vmatmul.bf16.gmra.mxu0 %v526
  %v1423 = vpop.f32.mrf.mxu0
  %v1424 = vadd.f32 %v1375, %v1423
  %v1425 = vpop.f32.mrf.mxu0
  %v1426 = vadd.f32 %v1377, %v1425
  %1427 = vmatmul.bf16.gmra.mxu0 %v535
  %v1428 = vpop.f32.mrf.mxu0
  %v1429 = vadd.f32 %v1380, %v1428
  %v1430 = vpop.f32.mrf.mxu0
  %v1431 = vadd.f32 %v1382, %v1430
  %1432 = vdwg.mxu0
  %1433 = vmatpush.bf16.msra.mxu0 %v968
  %1434 = vmatpush.bf16.msra.mxu0 %v967
  %1435 = vmatpush.bf16.msra.mxu0 %v966
  %1436 = vmatpush.bf16.msra.mxu0 %v965
  %1437 = vmatpush.bf16.msra.mxu0 %v964
  %1438 = vmatpush.bf16.msra.mxu0 %v963
  %1439 = vmatpush.bf16.msra.mxu0 %v962
  %1440 = vmatpush.bf16.msra.mxu0 %v961
  %1441 = vmatmul.bf16.gmra.mxu0 %v473
  %v1442 = vpop.f32.mrf.mxu0
  %v1443 = vadd.f32 %v1394, %v1442
  %v1444 = vpop.f32.mrf.mxu0
  %v1445 = vadd.f32 %v1396, %v1444
  %1446 = vmatmul.bf16.gmra.mxu0 %v482
  %v1447 = vpop.f32.mrf.mxu0
  %v1448 = vadd.f32 %v1399, %v1447
  %v1449 = vpop.f32.mrf.mxu0
  %v1450 = vadd.f32 %v1401, %v1449
  %1451 = vmatmul.bf16.gmra.mxu0 %v491
  %v1452 = vpop.f32.mrf.mxu0
  %v1453 = vadd.f32 %v1404, %v1452
  %v1454 = vpop.f32.mrf.mxu0
  %v1455 = vadd.f32 %v1406, %v1454
  %1456 = vmatmul.bf16.gmra.mxu0 %v500
  %v1457 = vpop.f32.mrf.mxu0
  %v1458 = vadd.f32 %v1409, %v1457
  %v1459 = vpop.f32.mrf.mxu0
  %v1460 = vadd.f32 %v1411, %v1459
  %1461 = vmatmul.bf16.gmra.mxu0 %v509
  %v1462 = vpop.f32.mrf.mxu0
  %v1463 = vadd.f32 %v1414, %v1462
  %v1464 = vpop.f32.mrf.mxu0
  %v1465 = vadd.f32 %v1416, %v1464
  %1466 = vmatmul.bf16.gmra.mxu0 %v518
  %v1467 = vpop.f32.mrf.mxu0
  %v1468 = vadd.f32 %v1419, %v1467
  %v1469 = vpop.f32.mrf.mxu0
  %v1470 = vadd.f32 %v1421, %v1469
  %1471 = vmatmul.bf16.gmra.mxu0 %v527
  %v1472 = vpop.f32.mrf.mxu0
  %v1473 = vadd.f32 %v1424, %v1472
  %v1474 = vpop.f32.mrf.mxu0
  %v1475 = vadd.f32 %v1426, %v1474
  %1476 = vmatmul.bf16.gmra.mxu0 %v536
  %v1477 = vpop.f32.mrf.mxu0
  %v1478 = vadd.f32 %v1429, %v1477
  %v1479 = vpop.f32.mrf.mxu0
  %v1480 = vadd.f32 %v1431, %v1479
  %1481 = vdwg.mxu0
  %s1482 = smul.u32 0, 128
  %s1483 = scalar_lea.vmem [#allocation2], %s1482
  %1484 = vst [vmem:[%s1483] sm:$0xff] %v1443
  %1485 = vst [vmem:[%s1483 + $0x8] sm:$0xff] %v1445
  %1486 = vst [vmem:[%s1483 + $0x10] sm:$0xff] %v1448
  %1487 = vst [vmem:[%s1483 + $0x18] sm:$0xff] %v1450
  %1488 = vst [vmem:[%s1483 + $0x20] sm:$0xff] %v1453
  %1489 = vst [vmem:[%s1483 + $0x28] sm:$0xff] %v1455
  %1490 = vst [vmem:[%s1483 + $0x30] sm:$0xff] %v1458
  %1491 = vst [vmem:[%s1483 + $0x38] sm:$0xff] %v1460
  %1492 = vst [vmem:[%s1483 + $0x40] sm:$0xff] %v1463
  %1493 = vst [vmem:[%s1483 + $0x48] sm:$0xff] %v1465
  %1494 = vst [vmem:[%s1483 + $0x50] sm:$0xff] %v1468
  %1495 = vst [vmem:[%s1483 + $0x58] sm:$0xff] %v1470
  %1496 = vst [vmem:[%s1483 + $0x60] sm:$0xff] %v1473
  %1497 = vst [vmem:[%s1483 + $0x68] sm:$0xff] %v1475
  %1498 = vst [vmem:[%s1483 + $0x70] sm:$0xff] %v1478
  %1499 = vst [vmem:[%s1483 + $0x78] sm:$0xff] %v1480
  %p1500 = scmp.eq.s32.totalorder 0, 0
  // Predicated region
  $region18: #{encoder_forward.4} parent=0 // pred_check
    %p1501 = pneg %p1500
  $region19: #{encoder_forward.4} parent=0 // pred_check_branch
    %1503 = sbr.rel (%p1501) target = $region21
  $region20: #{encoder_forward.4} parent=0 // pred_region
    %v1504 = vld [vmem:[#allocation2] sm:$0xff]
    %v1505 = vld [vmem:[#allocation2 + $0x8] sm:$0xff]
    %v1506 = vld [vmem:[#allocation2 + $0x10] sm:$0xff]
    %v1507 = vld [vmem:[#allocation2 + $0x18] sm:$0xff]
    %v1508 = vld [vmem:[#allocation2 + $0x20] sm:$0xff]
    %v1509 = vld [vmem:[#allocation2 + $0x28] sm:$0xff]
    %v1510 = vld [vmem:[#allocation2 + $0x30] sm:$0xff]
    %v1511 = vld [vmem:[#allocation2 + $0x38] sm:$0xff]
    %v1512 = vld [vmem:[#allocation2 + $0x40] sm:$0xff]
    %v1513 = vld [vmem:[#allocation2 + $0x48] sm:$0xff]
    %v1514 = vld [vmem:[#allocation2 + $0x50] sm:$0xff]
    %v1515 = vld [vmem:[#allocation2 + $0x58] sm:$0xff]
    %v1516 = vld [vmem:[#allocation2 + $0x60] sm:$0xff]
    %v1517 = vld [vmem:[#allocation2 + $0x68] sm:$0xff]
    %v1518 = vld [vmem:[#allocation2 + $0x70] sm:$0xff]
    %v1519 = vld [vmem:[#allocation2 + $0x78] sm:$0xff]
    %v1520 = vadd.f32 %v1504, %v1505
    %v1521 = vadd.f32 %v1520, %v1506
    %v1522 = vadd.f32 %v1521, %v1507
    %v1523 = vadd.f32 %v1522, %v1508
    %v1524 = vadd.f32 %v1523, %v1509
    %v1525 = vadd.f32 %v1524, %v1510
    %v1526 = vadd.f32 %v1525, %v1511
    %v1527 = vadd.f32 %v1526, %v1512
    %v1528 = vadd.f32 %v1527, %v1513
    %v1529 = vadd.f32 %v1528, %v1514
    %v1530 = vadd.f32 %v1529, %v1515
    %v1531 = vadd.f32 %v1530, %v1516
    %v1532 = vadd.f32 %v1531, %v1517
    %v1533 = vadd.f32 %v1532, %v1518
    %v1534 = vadd.f32 %v1533, %v1519
    %v1535 = vrot.slane %v1534, 4
    %v1536 = vadd.f32 %v1534, %v1535
    %v1537 = vrot.slane %v1536, 2
    %v1538 = vadd.f32 %v1536, %v1537
    %v1539 = vrot.slane %v1538, 1
    %v1540 = vadd.f32 %v1538, %v1539
    %v1541 = vmul.f32 %v1540, 0.0078125
    %v1542 = vsub.f32 %v1504, %v1541
    %v1543 = vsub.f32 %v1505, %v1541
    %v1544 = vsub.f32 %v1506, %v1541
    %v1545 = vsub.f32 %v1507, %v1541
    %v1546 = vsub.f32 %v1508, %v1541
    %v1547 = vsub.f32 %v1509, %v1541
    %v1548 = vsub.f32 %v1510, %v1541
    %v1549 = vsub.f32 %v1511, %v1541
    %v1550 = vsub.f32 %v1512, %v1541
    %v1551 = vsub.f32 %v1513, %v1541
    %v1552 = vsub.f32 %v1514, %v1541
    %v1553 = vsub.f32 %v1515, %v1541
    %v1554 = vsub.f32 %v1516, %v1541
    %v1555 = vsub.f32 %v1517, %v1541
    %v1556 = vsub.f32 %v1518, %v1541
    %v1557 = vsub.f32 %v1519, %v1541
    %v1558 = vmul.f32 %v1542, %v1542
    %v1559 = vmul.f32 %v1543, %v1543
    %v1560 = vmul.f32 %v1544, %v1544
    %v1561 = vmul.f32 %v1545, %v1545
    %v1562 = vmul.f32 %v1546, %v1546
    %v1563 = vmul.f32 %v1547, %v1547
    %v1564 = vmul.f32 %v1548, %v1548
    %v1565 = vmul.f32 %v1549, %v1549
    %v1566 = vmul.f32 %v1550, %v1550
    %v1567 = vmul.f32 %v1551, %v1551
    %v1568 = vmul.f32 %v1552, %v1552
    %v1569 = vmul.f32 %v1553, %v1553
    %v1570 = vmul.f32 %v1554, %v1554
    %v1571 = vmul.f32 %v1555, %v1555
    %v1572 = vmul.f32 %v1556, %v1556
    %v1573 = vmul.f32 %v1557, %v1557
    %v1574 = vadd.f32 %v1558, %v1559
    %v1575 = vadd.f32 %v1574, %v1560
    %v1576 = vadd.f32 %v1575, %v1561
    %v1577 = vadd.f32 %v1576, %v1562
    %v1578 = vadd.f32 %v1577, %v1563
    %v1579 = vadd.f32 %v1578, %v1564
    %v1580 = vadd.f32 %v1579, %v1565
    %v1581 = vadd.f32 %v1580, %v1566
    %v1582 = vadd.f32 %v1581, %v1567
    %v1583 = vadd.f32 %v1582, %v1568
    %v1584 = vadd.f32 %v1583, %v1569
    %v1585 = vadd.f32 %v1584, %v1570
    %v1586 = vadd.f32 %v1585, %v1571
    %v1587 = vadd.f32 %v1586, %v1572
    %v1588 = vadd.f32 %v1587, %v1573
    %v1589 = vrot.slane %v1588, 4
    %v1590 = vadd.f32 %v1588, %v1589
    %v1591 = vrot.slane %v1590, 2
    %v1592 = vadd.f32 %v1590, %v1591
    %v1593 = vrot.slane %v1592, 1
    %v1594 = vadd.f32 %v1592, %v1593
    %v1595 = vmul.f32 %v1594, 0.0078125
    %v1596 = vadd.f32 %v1595, 1e-05
    %v1597 = vrsqrt.pop %v1596
    %v1598 = vmul.f32 %v1597, %v1596
    %v1599 = vmul.f32 %v1598, %v1597
    %v1600 = vmul.f32 0.5, %v1599
    %v1601 = vsub.f32 1.5, %v1600
    %v1602 = vmul.f32 %v1597, %v1601
    %vm1603 = vweird.f32 %v1596
    %vm1604 = vweird.f32 %v1597
    %vm1605 = vmor %vm1603, %vm1604
    %v1606 = vsel %vm1605, %v1597, %v1602
    %v1607 = vld [vmem:[%s2] sm:$0x1]
    %v1608 = vmul.f32 %v1606, %v1607
    %v1609 = vperm.slane %v1608, 0
    %v1610 = vmul.f32 %v1542, %v1609
    %v1611 = vmul.f32 %v1543, %v1609
    %v1612 = vmul.f32 %v1544, %v1609
    %v1613 = vmul.f32 %v1545, %v1609
    %v1614 = vmul.f32 %v1546, %v1609
    %v1615 = vmul.f32 %v1547, %v1609
    %v1616 = vmul.f32 %v1548, %v1609
    %v1617 = vmul.f32 %v1549, %v1609
    %v1618 = vmul.f32 %v1550, %v1609
    %v1619 = vmul.f32 %v1551, %v1609
    %v1620 = vmul.f32 %v1552, %v1609
    %v1621 = vmul.f32 %v1553, %v1609
    %v1622 = vmul.f32 %v1554, %v1609
    %v1623 = vmul.f32 %v1555, %v1609
    %v1624 = vmul.f32 %v1556, %v1609
    %v1625 = vmul.f32 %v1557, %v1609
    %v1626 = vld [vmem:[%s3] sm:$0x1]
    %v1628 = vperm.slane %v1626, 0
    %v1630 = vadd.f32 %v1610, %v1628
    %v1631 = vadd.f32 %v1611, %v1628
    %v1632 = vadd.f32 %v1612, %v1628
    %v1633 = vadd.f32 %v1613, %v1628
    %v1634 = vadd.f32 %v1614, %v1628
    %v1635 = vadd.f32 %v1615, %v1628
    %v1636 = vadd.f32 %v1616, %v1628
    %v1637 = vadd.f32 %v1617, %v1628
    %v1638 = vadd.f32 %v1618, %v1628
    %v1639 = vadd.f32 %v1619, %v1628
    %v1640 = vadd.f32 %v1620, %v1628
    %v1641 = vadd.f32 %v1621, %v1628
    %v1642 = vadd.f32 %v1622, %v1628
    %v1643 = vadd.f32 %v1623, %v1628
    %v1644 = vadd.f32 %v1624, %v1628
    %v1645 = vadd.f32 %v1625, %v1628
    %vm1646 = vcmp.gt.f32.partialorder %v1630, 0.0
    %vm1647 = vcmp.gt.f32.partialorder %v1631, 0.0
    %vm1648 = vcmp.gt.f32.partialorder %v1632, 0.0
    %vm1649 = vcmp.gt.f32.partialorder %v1633, 0.0
    %vm1650 = vcmp.gt.f32.partialorder %v1634, 0.0
    %vm1651 = vcmp.gt.f32.partialorder %v1635, 0.0
    %vm1652 = vcmp.gt.f32.partialorder %v1636, 0.0
    %vm1653 = vcmp.gt.f32.partialorder %v1637, 0.0
    %vm1654 = vcmp.gt.f32.partialorder %v1638, 0.0
    %vm1655 = vcmp.gt.f32.partialorder %v1639, 0.0
    %vm1656 = vcmp.gt.f32.partialorder %v1640, 0.0
    %vm1657 = vcmp.gt.f32.partialorder %v1641, 0.0
    %vm1658 = vcmp.gt.f32.partialorder %v1642, 0.0
    %vm1659 = vcmp.gt.f32.partialorder %v1643, 0.0
    %vm1660 = vcmp.gt.f32.partialorder %v1644, 0.0
    %vm1661 = vcmp.gt.f32.partialorder %v1645, 0.0
    %v1662 = vmul.f32 %v1630, 0.01
    %v1663 = vmul.f32 %v1631, 0.01
    %v1664 = vmul.f32 %v1632, 0.01
    %v1665 = vmul.f32 %v1633, 0.01
    %v1666 = vmul.f32 %v1634, 0.01
    %v1667 = vmul.f32 %v1635, 0.01
    %v1668 = vmul.f32 %v1636, 0.01
    %v1669 = vmul.f32 %v1637, 0.01
    %v1670 = vmul.f32 %v1638, 0.01
    %v1671 = vmul.f32 %v1639, 0.01
    %v1672 = vmul.f32 %v1640, 0.01
    %v1673 = vmul.f32 %v1641, 0.01
    %v1674 = vmul.f32 %v1642, 0.01
    %v1675 = vmul.f32 %v1643, 0.01
    %v1676 = vmul.f32 %v1644, 0.01
    %v1677 = vmul.f32 %v1645, 0.01
    %v1678 = vsel %vm1646, %v1630, %v1662
    %v1679 = vsel %vm1647, %v1631, %v1663
    %v1680 = vsel %vm1648, %v1632, %v1664
    %v1681 = vsel %vm1649, %v1633, %v1665
    %v1682 = vsel %vm1650, %v1634, %v1666
    %v1683 = vsel %vm1651, %v1635, %v1667
    %v1684 = vsel %vm1652, %v1636, %v1668
    %v1685 = vsel %vm1653, %v1637, %v1669
    %v1686 = vsel %vm1654, %v1638, %v1670
    %v1687 = vsel %vm1655, %v1639, %v1671
    %v1688 = vsel %vm1656, %v1640, %v1672
    %v1689 = vsel %vm1657, %v1641, %v1673
    %v1690 = vsel %vm1658, %v1642, %v1674
    %v1691 = vsel %vm1659, %v1643, %v1675
    %v1692 = vsel %vm1660, %v1644, %v1676
    %v1693 = vsel %vm1661, %v1645, %v1677
    %v1694 = vpack.c.bf16 %v1678, %v1678
    %v1695 = vpack.c.bf16 %v1679, %v1679
    %v1696 = vpack.c.bf16 %v1680, %v1680
    %v1697 = vpack.c.bf16 %v1681, %v1681
    %v1698 = vpack.c.bf16 %v1682, %v1682
    %v1699 = vpack.c.bf16 %v1683, %v1683
    %v1700 = vpack.c.bf16 %v1684, %v1684
    %v1701 = vpack.c.bf16 %v1685, %v1685
    %v1702 = vpack.c.bf16 %v1686, %v1686
    %v1703 = vpack.c.bf16 %v1687, %v1687
    %v1704 = vpack.c.bf16 %v1688, %v1688
    %v1705 = vpack.c.bf16 %v1689, %v1689
    %v1706 = vpack.c.bf16 %v1690, %v1690
    %v1707 = vpack.c.bf16 %v1691, %v1691
    %v1708 = vpack.c.bf16 %v1692, %v1692
    %v1709 = vpack.c.bf16 %v1693, %v1693
    %1710 = vst [vmem:[%s4] sm:$0xf] %v1694
    %1711 = vst [vmem:[%s4 + $0x4] sm:$0xf] %v1695
    %1712 = vst [vmem:[%s4 + $0x8] sm:$0xf] %v1696
    %1713 = vst [vmem:[%s4 + $0xc] sm:$0xf] %v1697
    %1714 = vst [vmem:[%s4 + $0x10] sm:$0xf] %v1698
    %1715 = vst [vmem:[%s4 + $0x14] sm:$0xf] %v1699
    %1716 = vst [vmem:[%s4 + $0x18] sm:$0xf] %v1700
    %1717 = vst [vmem:[%s4 + $0x1c] sm:$0xf] %v1701
    %1718 = vst [vmem:[%s4 + $0x20] sm:$0xf] %v1702
    %1719 = vst [vmem:[%s4 + $0x24] sm:$0xf] %v1703
    %1720 = vst [vmem:[%s4 + $0x28] sm:$0xf] %v1704
    %1721 = vst [vmem:[%s4 + $0x2c] sm:$0xf] %v1705
    %1722 = vst [vmem:[%s4 + $0x30] sm:$0xf] %v1706
    %1723 = vst [vmem:[%s4 + $0x34] sm:$0xf] %v1707
    %1724 = vst [vmem:[%s4 + $0x38] sm:$0xf] %v1708
    %1725 = vst [vmem:[%s4 + $0x3c] sm:$0xf] %v1709
  $region21: #{encoder_forward.4} parent=0 // pred_fallthru
    _
  // Predicated region
  $region22: #{encoder_forward.4} parent=0 // pred_check
    _
  $region23: #{encoder_forward.4} parent=0 // pred_check_branch
    %1727 = sbr.rel (0) target = $region25
  $region24: #{encoder_forward.4} parent=0 // pred_region
    _
  $region25: #{encoder_forward.4} parent=0 // pred_fallthru
    _
  // Predicated region
  $region26: #{encoder_forward.4} parent=0 // pred_check
    _
  $region27: #{encoder_forward.4} parent=0 // pred_check_branch
    %1729 = sbr.rel (0) target = $region29
  $region28: #{encoder_forward.4} parent=0 // pred_region
    _
  $region29: #{encoder_forward.4} parent=0 // pred_fallthru
    _

// kernel: encoder_forward.5
$region0: #{encoder_forward.5}
  #allocation0 [shape = 'u32[]', space=smem, size = 0x4, offset = 0x4, fixed_abs, tag = 'smem constant byte address 0x4 - core index']
  #allocation1 [shape = 'u32[72,128]{1,0:T(1,128)}', space=vmem, size = 0x9000, scoped, tag = 'internal scratch']
  #allocation2 [shape = 'f32[32,128]{1,0:T(8,128)}', space=vmem, size = 0x4000, scoped, tag = 'scratch operand']
  %s0 = inlined_call_operand.vmem [shape: bf16[32,1152], index: 0, kind: input, shape index: {}]
  %s1 = inlined_call_operand.vmem [shape: bf16[1152,128], index: 1, kind: input, shape index: {}]
  %s2 = inlined_call_operand.vmem [shape: f32[1,128], index: 2, kind: input, shape index: {}]
  %s3 = inlined_call_operand.vmem [shape: f32[1,128], index: 3, kind: input, shape index: {}]
  %s4 = inlined_call_operand.vmem [shape: bf16[32,128], index: 4, kind: output, shape index: {}]
  %s5 = sld [smem:[#allocation0]]
  $region30: #{encoder_forward.5} parent=0
    _
  %s7 = ssub.s32 1, %s5
  %s8 = scalar_select 0, %s7, %s5
  // Predicated region
  $region2: #{encoder_forward.5} parent=0 // pred_check
    _
  $region3: #{encoder_forward.5} parent=0 // pred_check_branch
    %10 = sbr.rel (0) target = $region5
  $region4: #{encoder_forward.5} parent=0 // pred_region
    _
  $region5: #{encoder_forward.5} parent=0 // pred_fallthru
    _
  // Predicated region
  $region6: #{encoder_forward.5} parent=0 // pred_check
    _
  $region7: #{encoder_forward.5} parent=0 // pred_check_branch
    %12 = sbr.rel (0) target = $region9
  $region8: #{encoder_forward.5} parent=0 // pred_region
    _
  $region9: #{encoder_forward.5} parent=0 // pred_fallthru
    _
  // Predicated region
  $region10: #{encoder_forward.5} parent=0 // pred_check
    _
  $region11: #{encoder_forward.5} parent=0 // pred_check_branch
    %14 = sbr.rel (0) target = $region13
  $region12: #{encoder_forward.5} parent=0 // pred_region
    _
  $region13: #{encoder_forward.5} parent=0 // pred_fallthru
    _
  // Predicated region
  $region14: #{encoder_forward.5} parent=0 // pred_check
    _
  $region15: #{encoder_forward.5} parent=0 // pred_check_branch
    %16 = sbr.rel (0) target = $region17
  $region16: #{encoder_forward.5} parent=0 // pred_region
    _
  $region17: #{encoder_forward.5} parent=0 // pred_fallthru
    _
  %v17 = vld [vmem:[%s0] sm:$0xff]
  %v18 = vld [vmem:[%s0 + $0x8] sm:$0xff]
  %v19 = vld [vmem:[%s0 + $0x10] sm:$0xff]
  %v20 = vld [vmem:[%s0 + $0x18] sm:$0xff]
  %v21 = vld [vmem:[%s0 + $0x20] sm:$0xf]
  %v22 = vld [vmem:[%s0 + $0x24] sm:$0xff]
  %v23 = vld [vmem:[%s0 + $0x2c] sm:$0xff]
  %v24 = vld [vmem:[%s0 + $0x34] sm:$0xff]
  %v25 = vld [vmem:[%s0 + $0x3c] sm:$0xff]
  %v26 = vld [vmem:[%s0 + $0x44] sm:$0xf]
  %v27 = vld [vmem:[%s0 + $0x48] sm:$0xff]
  %v28 = vld [vmem:[%s0 + $0x50] sm:$0xff]
  %v29 = vld [vmem:[%s0 + $0x58] sm:$0xff]
  %v30 = vld [vmem:[%s0 + $0x60] sm:$0xff]
  %v31 = vld [vmem:[%s0 + $0x68] sm:$0xf]
  %v32 = vld [vmem:[%s0 + $0x6c] sm:$0xff]
  %v33 = vld [vmem:[%s0 + $0x74] sm:$0xff]
  %v34 = vld [vmem:[%s0 + $0x7c] sm:$0xff]
  %v35 = vld [vmem:[%s0 + $0x84] sm:$0xff]
  %v36 = vld [vmem:[%s0 + $0x8c] sm:$0xf]
  %v37 = vld [vmem:[%s1] sm:$0xf]
  %v38 = vld [vmem:[%s1 + $0x4] sm:$0xf]
  %v39 = vld [vmem:[%s1 + $0x8] sm:$0xf]
  %v40 = vld [vmem:[%s1 + $0xc] sm:$0xf]
  %v41 = vld [vmem:[%s1 + $0x10] sm:$0xf]
  %v42 = vld [vmem:[%s1 + $0x14] sm:$0xf]
  %v43 = vld [vmem:[%s1 + $0x18] sm:$0xf]
  %v44 = vld [vmem:[%s1 + $0x1c] sm:$0xf]
  %v45 = vld [vmem:[%s1 + $0x20] sm:$0xf]
  %v46 = vld [vmem:[%s1 + $0x24] sm:$0xf]
  %v47 = vld [vmem:[%s1 + $0x28] sm:$0xf]
  %v48 = vld [vmem:[%s1 + $0x2c] sm:$0xf]
  %v49 = vld [vmem:[%s1 + $0x30] sm:$0xf]
  %v50 = vld [vmem:[%s1 + $0x34] sm:$0xf]
  %v51 = vld [vmem:[%s1 + $0x38] sm:$0xf]
  %v52 = vld [vmem:[%s1 + $0x3c] sm:$0xf]
  %v53 = vld [vmem:[%s1 + $0x40] sm:$0xf]
  %v54 = vld [vmem:[%s1 + $0x44] sm:$0xf]
  %v55 = vld [vmem:[%s1 + $0x48] sm:$0xf]
  %v56 = vld [vmem:[%s1 + $0x4c] sm:$0xf]
  %v57 = vld [vmem:[%s1 + $0x50] sm:$0xf]
  %v58 = vld [vmem:[%s1 + $0x54] sm:$0xf]
  %v59 = vld [vmem:[%s1 + $0x58] sm:$0xf]
  %v60 = vld [vmem:[%s1 + $0x5c] sm:$0xf]
  %v61 = vld [vmem:[%s1 + $0x60] sm:$0xf]
  %v62 = vld [vmem:[%s1 + $0x64] sm:$0xf]
  %v63 = vld [vmem:[%s1 + $0x68] sm:$0xf]
  %v64 = vld [vmem:[%s1 + $0x6c] sm:$0xf]
  %v65 = vld [vmem:[%s1 + $0x70] sm:$0xf]
  %v66 = vld [vmem:[%s1 + $0x74] sm:$0xf]
  %v67 = vld [vmem:[%s1 + $0x78] sm:$0xf]
  %v68 = vld [vmem:[%s1 + $0x7c] sm:$0xf]
  %v69 = vld [vmem:[%s1 + $0x80] sm:$0xf]
  %v70 = vld [vmem:[%s1 + $0x84] sm:$0xf]
  %v71 = vld [vmem:[%s1 + $0x88] sm:$0xf]
  %v72 = vld [vmem:[%s1 + $0x8c] sm:$0xf]
  %v73 = vld [vmem:[%s1 + $0x90] sm:$0xf]
  %v74 = vld [vmem:[%s1 + $0x94] sm:$0xf]
  %v75 = vld [vmem:[%s1 + $0x98] sm:$0xf]
  %v76 = vld [vmem:[%s1 + $0x9c] sm:$0xf]
  %v77 = vld [vmem:[%s1 + $0xa0] sm:$0xf]
  %v78 = vld [vmem:[%s1 + $0xa4] sm:$0xf]
  %v79 = vld [vmem:[%s1 + $0xa8] sm:$0xf]
  %v80 = vld [vmem:[%s1 + $0xac] sm:$0xf]
  %v81 = vld [vmem:[%s1 + $0xb0] sm:$0xf]
  %v82 = vld [vmem:[%s1 + $0xb4] sm:$0xf]
  %v83 = vld [vmem:[%s1 + $0xb8] sm:$0xf]
  %v84 = vld [vmem:[%s1 + $0xbc] sm:$0xf]
  %v85 = vld [vmem:[%s1 + $0xc0] sm:$0xf]
  %v86 = vld [vmem:[%s1 + $0xc4] sm:$0xf]
  %v87 = vld [vmem:[%s1 + $0xc8] sm:$0xf]
  %v88 = vld [vmem:[%s1 + $0xcc] sm:$0xf]
  %v89 = vld [vmem:[%s1 + $0xd0] sm:$0xf]
  %v90 = vld [vmem:[%s1 + $0xd4] sm:$0xf]
  %v91 = vld [vmem:[%s1 + $0xd8] sm:$0xf]
  %v92 = vld [vmem:[%s1 + $0xdc] sm:$0xf]
  %v93 = vld [vmem:[%s1 + $0xe0] sm:$0xf]
  %v94 = vld [vmem:[%s1 + $0xe4] sm:$0xf]
  %v95 = vld [vmem:[%s1 + $0xe8] sm:$0xf]
  %v96 = vld [vmem:[%s1 + $0xec] sm:$0xf]
  %v97 = vld [vmem:[%s1 + $0xf0] sm:$0xf]
  %v98 = vld [vmem:[%s1 + $0xf4] sm:$0xf]
  %v99 = vld [vmem:[%s1 + $0xf8] sm:$0xf]
  %v100 = vld [vmem:[%s1 + $0xfc] sm:$0xf]
  %v101 = vld [vmem:[%s1 + $0x100] sm:$0xf]
  %v102 = vld [vmem:[%s1 + $0x104] sm:$0xf]
  %v103 = vld [vmem:[%s1 + $0x108] sm:$0xf]
  %v104 = vld [vmem:[%s1 + $0x10c] sm:$0xf]
  %v105 = vld [vmem:[%s1 + $0x110] sm:$0xf]
  %v106 = vld [vmem:[%s1 + $0x114] sm:$0xf]
  %v107 = vld [vmem:[%s1 + $0x118] sm:$0xf]
  %v108 = vld [vmem:[%s1 + $0x11c] sm:$0xf]
  %v109 = vld [vmem:[%s1 + $0x120] sm:$0xf]
  %v110 = vld [vmem:[%s1 + $0x124] sm:$0xf]
  %v111 = vld [vmem:[%s1 + $0x128] sm:$0xf]
  %v112 = vld [vmem:[%s1 + $0x12c] sm:$0xf]
  %v113 = vld [vmem:[%s1 + $0x130] sm:$0xf]
  %v114 = vld [vmem:[%s1 + $0x134] sm:$0xf]
  %v115 = vld [vmem:[%s1 + $0x138] sm:$0xf]
  %v116 = vld [vmem:[%s1 + $0x13c] sm:$0xf]
  %v117 = vld [vmem:[%s1 + $0x140] sm:$0xf]
  %v118 = vld [vmem:[%s1 + $0x144] sm:$0xf]
  %v119 = vld [vmem:[%s1 + $0x148] sm:$0xf]
  %v120 = vld [vmem:[%s1 + $0x14c] sm:$0xf]
  %v121 = vld [vmem:[%s1 + $0x150] sm:$0xf]
  %v122 = vld [vmem:[%s1 + $0x154] sm:$0xf]
  %v123 = vld [vmem:[%s1 + $0x158] sm:$0xf]
  %v124 = vld [vmem:[%s1 + $0x15c] sm:$0xf]
  %v125 = vld [vmem:[%s1 + $0x160] sm:$0xf]
  %v126 = vld [vmem:[%s1 + $0x164] sm:$0xf]
  %v127 = vld [vmem:[%s1 + $0x168] sm:$0xf]
  %v128 = vld [vmem:[%s1 + $0x16c] sm:$0xf]
  %v129 = vld [vmem:[%s1 + $0x170] sm:$0xf]
  %v130 = vld [vmem:[%s1 + $0x174] sm:$0xf]
  %v131 = vld [vmem:[%s1 + $0x178] sm:$0xf]
  %v132 = vld [vmem:[%s1 + $0x17c] sm:$0xf]
  %v133 = vld [vmem:[%s1 + $0x180] sm:$0xf]
  %v134 = vld [vmem:[%s1 + $0x184] sm:$0xf]
  %v135 = vld [vmem:[%s1 + $0x188] sm:$0xf]
  %v136 = vld [vmem:[%s1 + $0x18c] sm:$0xf]
  %v137 = vld [vmem:[%s1 + $0x190] sm:$0xf]
  %v138 = vld [vmem:[%s1 + $0x194] sm:$0xf]
  %v139 = vld [vmem:[%s1 + $0x198] sm:$0xf]
  %v140 = vld [vmem:[%s1 + $0x19c] sm:$0xf]
  %v141 = vld [vmem:[%s1 + $0x1a0] sm:$0xf]
  %v142 = vld [vmem:[%s1 + $0x1a4] sm:$0xf]
  %v143 = vld [vmem:[%s1 + $0x1a8] sm:$0xf]
  %v144 = vld [vmem:[%s1 + $0x1ac] sm:$0xf]
  %v145 = vld [vmem:[%s1 + $0x1b0] sm:$0xf]
  %v146 = vld [vmem:[%s1 + $0x1b4] sm:$0xf]
  %v147 = vld [vmem:[%s1 + $0x1b8] sm:$0xf]
  %v148 = vld [vmem:[%s1 + $0x1bc] sm:$0xf]
  %v149 = vld [vmem:[%s1 + $0x1c0] sm:$0xf]
  %v150 = vld [vmem:[%s1 + $0x1c4] sm:$0xf]
  %v151 = vld [vmem:[%s1 + $0x1c8] sm:$0xf]
  %v152 = vld [vmem:[%s1 + $0x1cc] sm:$0xf]
  %v153 = vld [vmem:[%s1 + $0x1d0] sm:$0xf]
  %v154 = vld [vmem:[%s1 + $0x1d4] sm:$0xf]
  %v155 = vld [vmem:[%s1 + $0x1d8] sm:$0xf]
  %v156 = vld [vmem:[%s1 + $0x1dc] sm:$0xf]
  %v157 = vld [vmem:[%s1 + $0x1e0] sm:$0xf]
  %v158 = vld [vmem:[%s1 + $0x1e4] sm:$0xf]
  %v159 = vld [vmem:[%s1 + $0x1e8] sm:$0xf]
  %v160 = vld [vmem:[%s1 + $0x1ec] sm:$0xf]
  %v161 = vld [vmem:[%s1 + $0x1f0] sm:$0xf]
  %v162 = vld [vmem:[%s1 + $0x1f4] sm:$0xf]
  %v163 = vld [vmem:[%s1 + $0x1f8] sm:$0xf]
  %v164 = vld [vmem:[%s1 + $0x1fc] sm:$0xf]
  %v165 = vld [vmem:[%s1 + $0x200] sm:$0xf]
  %v166 = vld [vmem:[%s1 + $0x204] sm:$0xf]
  %v167 = vld [vmem:[%s1 + $0x208] sm:$0xf]
  %v168 = vld [vmem:[%s1 + $0x20c] sm:$0xf]
  %v169 = vld [vmem:[%s1 + $0x210] sm:$0xf]
  %v170 = vld [vmem:[%s1 + $0x214] sm:$0xf]
  %v171 = vld [vmem:[%s1 + $0x218] sm:$0xf]
  %v172 = vld [vmem:[%s1 + $0x21c] sm:$0xf]
  %v173 = vld [vmem:[%s1 + $0x220] sm:$0xf]
  %v174 = vld [vmem:[%s1 + $0x224] sm:$0xf]
  %v175 = vld [vmem:[%s1 + $0x228] sm:$0xf]
  %v176 = vld [vmem:[%s1 + $0x22c] sm:$0xf]
  %v177 = vld [vmem:[%s1 + $0x230] sm:$0xf]
  %v178 = vld [vmem:[%s1 + $0x234] sm:$0xf]
  %v179 = vld [vmem:[%s1 + $0x238] sm:$0xf]
  %v180 = vld [vmem:[%s1 + $0x23c] sm:$0xf]
  %v201 = vunpack.c.l.b16 %v17
  %v202 = vunpack.c.h.b16 %v17
  %v203 = vunpack.c.l.b16 %v18
  %v204 = vunpack.c.h.b16 %v18
  %v205 = vunpack.c.l.b16 %v19
  %v206 = vunpack.c.h.b16 %v19
  %v207 = vunpack.c.l.b16 %v20
  %v208 = vunpack.c.h.b16 %v20
  %v209 = vunpack.c.l.b16 %v21
  %v210 = vunpack.c.l.b16 %v22
  %v211 = vunpack.c.h.b16 %v22
  %v212 = vunpack.c.l.b16 %v23
  %v213 = vunpack.c.h.b16 %v23
  %v214 = vunpack.c.l.b16 %v24
  %v215 = vunpack.c.h.b16 %v24
  %v216 = vunpack.c.l.b16 %v25
  %v217 = vunpack.c.h.b16 %v25
  %v218 = vunpack.c.l.b16 %v26
  %v219 = vunpack.c.l.b16 %v27
  %v220 = vunpack.c.h.b16 %v27
  %v221 = vunpack.c.l.b16 %v28
  %v222 = vunpack.c.h.b16 %v28
  %v223 = vunpack.c.l.b16 %v29
  %v224 = vunpack.c.h.b16 %v29
  %v225 = vunpack.c.l.b16 %v30
  %v226 = vunpack.c.h.b16 %v30
  %v227 = vunpack.c.l.b16 %v31
  %v228 = vunpack.c.l.b16 %v32
  %v229 = vunpack.c.h.b16 %v32
  %v230 = vunpack.c.l.b16 %v33
  %v231 = vunpack.c.h.b16 %v33
  %v232 = vunpack.c.l.b16 %v34
  %v233 = vunpack.c.h.b16 %v34
  %v234 = vunpack.c.l.b16 %v35
  %v235 = vunpack.c.h.b16 %v35
  %v236 = vunpack.c.l.b16 %v36
  %v237 = vpack.c.b16 %v210, %v201
  %v238 = vpack.c.b16 %v211, %v202
  %v239 = vpack.c.b16 %v212, %v203
  %v240 = vpack.c.b16 %v213, %v204
  %v241 = vpack.c.b16 %v214, %v205
  %v242 = vpack.c.b16 %v215, %v206
  %v243 = vpack.c.b16 %v216, %v207
  %v244 = vpack.c.b16 %v217, %v208
  %v245 = vpack.c.b16 %v218, %v209
  %v246 = vpack.c.b16 %v228, %v219
  %v247 = vpack.c.b16 %v229, %v220
  %v248 = vpack.c.b16 %v230, %v221
  %v249 = vpack.c.b16 %v231, %v222
  %v250 = vpack.c.b16 %v232, %v223
  %v251 = vpack.c.b16 %v233, %v224
  %v252 = vpack.c.b16 %v234, %v225
  %v253 = vpack.c.b16 %v235, %v226
  %v254 = vpack.c.b16 %v236, %v227
  %v417 = vunpack.c.l.b16 %v37
  %v418 = vunpack.c.l.b16 %v38
  %v419 = vunpack.c.l.b16 %v39
  %v420 = vunpack.c.l.b16 %v40
  %v421 = vunpack.c.l.b16 %v41
  %v422 = vunpack.c.l.b16 %v42
  %v423 = vunpack.c.l.b16 %v43
  %v424 = vunpack.c.l.b16 %v44
  %v425 = vunpack.c.l.b16 %v45
  %v426 = vunpack.c.l.b16 %v46
  %v427 = vunpack.c.l.b16 %v47
  %v428 = vunpack.c.l.b16 %v48
  %v429 = vunpack.c.l.b16 %v49
  %v430 = vunpack.c.l.b16 %v50
  %v431 = vunpack.c.l.b16 %v51
  %v432 = vunpack.c.l.b16 %v52
  %v433 = vunpack.c.l.b16 %v53
  %v434 = vunpack.c.l.b16 %v54
  %v435 = vunpack.c.l.b16 %v55
  %v436 = vunpack.c.l.b16 %v56
  %v437 = vunpack.c.l.b16 %v57
  %v438 = vunpack.c.l.b16 %v58
  %v439 = vunpack.c.l.b16 %v59
  %v440 = vunpack.c.l.b16 %v60
  %v441 = vunpack.c.l.b16 %v61
  %v442 = vunpack.c.l.b16 %v62
  %v443 = vunpack.c.l.b16 %v63
  %v444 = vunpack.c.l.b16 %v64
  %v445 = vunpack.c.l.b16 %v65
  %v446 = vunpack.c.l.b16 %v66
  %v447 = vunpack.c.l.b16 %v67
  %v448 = vunpack.c.l.b16 %v68
  %v449 = vunpack.c.l.b16 %v69
  %v450 = vunpack.c.l.b16 %v70
  %v451 = vunpack.c.l.b16 %v71
  %v452 = vunpack.c.l.b16 %v72
  %v453 = vunpack.c.l.b16 %v73
  %v454 = vunpack.c.l.b16 %v74
  %v455 = vunpack.c.l.b16 %v75
  %v456 = vunpack.c.l.b16 %v76
  %v457 = vunpack.c.l.b16 %v77
  %v458 = vunpack.c.l.b16 %v78
  %v459 = vunpack.c.l.b16 %v79
  %v460 = vunpack.c.l.b16 %v80
  %v461 = vunpack.c.l.b16 %v81
  %v462 = vunpack.c.l.b16 %v82
  %v463 = vunpack.c.l.b16 %v83
  %v464 = vunpack.c.l.b16 %v84
  %v465 = vunpack.c.l.b16 %v85
  %v466 = vunpack.c.l.b16 %v86
  %v467 = vunpack.c.l.b16 %v87
  %v468 = vunpack.c.l.b16 %v88
  %v469 = vunpack.c.l.b16 %v89
  %v470 = vunpack.c.l.b16 %v90
  %v471 = vunpack.c.l.b16 %v91
  %v472 = vunpack.c.l.b16 %v92
  %v473 = vunpack.c.l.b16 %v93
  %v474 = vunpack.c.l.b16 %v94
  %v475 = vunpack.c.l.b16 %v95
  %v476 = vunpack.c.l.b16 %v96
  %v477 = vunpack.c.l.b16 %v97
  %v478 = vunpack.c.l.b16 %v98
  %v479 = vunpack.c.l.b16 %v99
  %v480 = vunpack.c.l.b16 %v100
  %v481 = vunpack.c.l.b16 %v101
  %v482 = vunpack.c.l.b16 %v102
  %v483 = vunpack.c.l.b16 %v103
  %v484 = vunpack.c.l.b16 %v104
  %v485 = vunpack.c.l.b16 %v105
  %v486 = vunpack.c.l.b16 %v106
  %v487 = vunpack.c.l.b16 %v107
  %v488 = vunpack.c.l.b16 %v108
  %v489 = vunpack.c.l.b16 %v109
  %v490 = vunpack.c.l.b16 %v110
  %v491 = vunpack.c.l.b16 %v111
  %v492 = vunpack.c.l.b16 %v112
  %v493 = vunpack.c.l.b16 %v113
  %v494 = vunpack.c.l.b16 %v114
  %v495 = vunpack.c.l.b16 %v115
  %v496 = vunpack.c.l.b16 %v116
  %v497 = vunpack.c.l.b16 %v117
  %v498 = vunpack.c.l.b16 %v118
  %v499 = vunpack.c.l.b16 %v119
  %v500 = vunpack.c.l.b16 %v120
  %v501 = vunpack.c.l.b16 %v121
  %v502 = vunpack.c.l.b16 %v122
  %v503 = vunpack.c.l.b16 %v123
  %v504 = vunpack.c.l.b16 %v124
  %v505 = vunpack.c.l.b16 %v125
  %v506 = vunpack.c.l.b16 %v126
  %v507 = vunpack.c.l.b16 %v127
  %v508 = vunpack.c.l.b16 %v128
  %v509 = vunpack.c.l.b16 %v129
  %v510 = vunpack.c.l.b16 %v130
  %v511 = vunpack.c.l.b16 %v131
  %v512 = vunpack.c.l.b16 %v132
  %v513 = vunpack.c.l.b16 %v133
  %v514 = vunpack.c.l.b16 %v134
  %v515 = vunpack.c.l.b16 %v135
  %v516 = vunpack.c.l.b16 %v136
  %v517 = vunpack.c.l.b16 %v137
  %v518 = vunpack.c.l.b16 %v138
  %v519 = vunpack.c.l.b16 %v139
  %v520 = vunpack.c.l.b16 %v140
  %v521 = vunpack.c.l.b16 %v141
  %v522 = vunpack.c.l.b16 %v142
  %v523 = vunpack.c.l.b16 %v143
  %v524 = vunpack.c.l.b16 %v144
  %v525 = vunpack.c.l.b16 %v145
  %v526 = vunpack.c.l.b16 %v146
  %v527 = vunpack.c.l.b16 %v147
  %v528 = vunpack.c.l.b16 %v148
  %v529 = vunpack.c.l.b16 %v149
  %v530 = vunpack.c.l.b16 %v150
  %v531 = vunpack.c.l.b16 %v151
  %v532 = vunpack.c.l.b16 %v152
  %v533 = vunpack.c.l.b16 %v153
  %v534 = vunpack.c.l.b16 %v154
  %v535 = vunpack.c.l.b16 %v155
  %v536 = vunpack.c.l.b16 %v156
  %v537 = vunpack.c.l.b16 %v157
  %v538 = vunpack.c.l.b16 %v158
  %v539 = vunpack.c.l.b16 %v159
  %v540 = vunpack.c.l.b16 %v160
  %v541 = vunpack.c.l.b16 %v161
  %v542 = vunpack.c.l.b16 %v162
  %v543 = vunpack.c.l.b16 %v163
  %v544 = vunpack.c.l.b16 %v164
  %v545 = vunpack.c.l.b16 %v165
  %v546 = vunpack.c.l.b16 %v166
  %v547 = vunpack.c.l.b16 %v167
  %v548 = vunpack.c.l.b16 %v168
  %v549 = vunpack.c.l.b16 %v169
  %v550 = vunpack.c.l.b16 %v170
  %v551 = vunpack.c.l.b16 %v171
  %v552 = vunpack.c.l.b16 %v172
  %v553 = vunpack.c.l.b16 %v173
  %v554 = vunpack.c.l.b16 %v174
  %v555 = vunpack.c.l.b16 %v175
  %v556 = vunpack.c.l.b16 %v176
  %v557 = vunpack.c.l.b16 %v177
  %v558 = vunpack.c.l.b16 %v178
  %v559 = vunpack.c.l.b16 %v179
  %v560 = vunpack.c.l.b16 %v180
  %v561 = vpack.c.b16 %v418, %v417
  %v562 = vpack.c.b16 %v420, %v419
  %v563 = vpack.c.b16 %v422, %v421
  %v564 = vpack.c.b16 %v424, %v423
  %v565 = vpack.c.b16 %v426, %v425
  %v566 = vpack.c.b16 %v428, %v427
  %v567 = vpack.c.b16 %v430, %v429
  %v568 = vpack.c.b16 %v432, %v431
  %v569 = vpack.c.b16 %v434, %v433
  %v570 = vpack.c.b16 %v436, %v435
  %v571 = vpack.c.b16 %v438, %v437
  %v572 = vpack.c.b16 %v440, %v439
  %v573 = vpack.c.b16 %v442, %v441
  %v574 = vpack.c.b16 %v444, %v443
  %v575 = vpack.c.b16 %v446, %v445
  %v576 = vpack.c.b16 %v448, %v447
  %v577 = vpack.c.b16 %v450, %v449
  %v578 = vpack.c.b16 %v452, %v451
  %v579 = vpack.c.b16 %v454, %v453
  %v580 = vpack.c.b16 %v456, %v455
  %v581 = vpack.c.b16 %v458, %v457
  %v582 = vpack.c.b16 %v460, %v459
  %v583 = vpack.c.b16 %v462, %v461
  %v584 = vpack.c.b16 %v464, %v463
  %v585 = vpack.c.b16 %v466, %v465
  %v586 = vpack.c.b16 %v468, %v467
  %v587 = vpack.c.b16 %v470, %v469
  %v588 = vpack.c.b16 %v472, %v471
  %v589 = vpack.c.b16 %v474, %v473
  %v590 = vpack.c.b16 %v476, %v475
  %v591 = vpack.c.b16 %v478, %v477
  %v592 = vpack.c.b16 %v480, %v479
  %v593 = vpack.c.b16 %v482, %v481
  %v594 = vpack.c.b16 %v484, %v483
  %v595 = vpack.c.b16 %v486, %v485
  %v596 = vpack.c.b16 %v488, %v487
  %v597 = vpack.c.b16 %v490, %v489
  %v598 = vpack.c.b16 %v492, %v491
  %v599 = vpack.c.b16 %v494, %v493
  %v600 = vpack.c.b16 %v496, %v495
  %v601 = vpack.c.b16 %v498, %v497
  %v602 = vpack.c.b16 %v500, %v499
  %v603 = vpack.c.b16 %v502, %v501
  %v604 = vpack.c.b16 %v504, %v503
  %v605 = vpack.c.b16 %v506, %v505
  %v606 = vpack.c.b16 %v508, %v507
  %v607 = vpack.c.b16 %v510, %v509
  %v608 = vpack.c.b16 %v512, %v511
  %v609 = vpack.c.b16 %v514, %v513
  %v610 = vpack.c.b16 %v516, %v515
  %v611 = vpack.c.b16 %v518, %v517
  %v612 = vpack.c.b16 %v520, %v519
  %v613 = vpack.c.b16 %v522, %v521
  %v614 = vpack.c.b16 %v524, %v523
  %v615 = vpack.c.b16 %v526, %v525
  %v616 = vpack.c.b16 %v528, %v527
  %v617 = vpack.c.b16 %v530, %v529
  %v618 = vpack.c.b16 %v532, %v531
  %v619 = vpack.c.b16 %v534, %v533
  %v620 = vpack.c.b16 %v536, %v535
  %v621 = vpack.c.b16 %v538, %v537
  %v622 = vpack.c.b16 %v540, %v539
  %v623 = vpack.c.b16 %v542, %v541
  %v624 = vpack.c.b16 %v544, %v543
  %v625 = vpack.c.b16 %v546, %v545
  %v626 = vpack.c.b16 %v548, %v547
  %v627 = vpack.c.b16 %v550, %v549
  %v628 = vpack.c.b16 %v552, %v551
  %v629 = vpack.c.b16 %v554, %v553
  %v630 = vpack.c.b16 %v556, %v555
  %v631 = vpack.c.b16 %v558, %v557
  %v632 = vpack.c.b16 %v560, %v559
  %705 = vmatpush.bf16.msra.mxu0 %v568
  %706 = vmatpush.bf16.msra.mxu0 %v567
  %707 = vmatpush.bf16.msra.mxu0 %v566
  %708 = vmatpush.bf16.msra.mxu0 %v565
  %709 = vmatpush.bf16.msra.mxu0 %v564
  %710 = vmatpush.bf16.msra.mxu0 %v563
  %711 = vmatpush.bf16.msra.mxu0 %v562
  %712 = vmatpush.bf16.msra.mxu0 %v561
  %713 = vmatmul.bf16.gmra.mxu0 %v237
  %v714 = vpop.f32.mrf.mxu0
  %v715 = vadd.f32 0.0, %v714
  %v716 = vpop.f32.mrf.mxu0
  %v717 = vadd.f32 0.0, %v716
  %718 = vmatmul.bf16.gmra.mxu0 %v246
  %v719 = vpop.f32.mrf.mxu0
  %v720 = vadd.f32 0.0, %v719
  %v721 = vpop.f32.mrf.mxu0
  %v722 = vadd.f32 0.0, %v721
  %723 = vdwg.mxu0
  %724 = vmatpush.bf16.msra.mxu0 %v576
  %725 = vmatpush.bf16.msra.mxu0 %v575
  %726 = vmatpush.bf16.msra.mxu0 %v574
  %727 = vmatpush.bf16.msra.mxu0 %v573
  %728 = vmatpush.bf16.msra.mxu0 %v572
  %729 = vmatpush.bf16.msra.mxu0 %v571
  %730 = vmatpush.bf16.msra.mxu0 %v570
  %731 = vmatpush.bf16.msra.mxu0 %v569
  %732 = vmatmul.bf16.gmra.mxu0 %v238
  %v733 = vpop.f32.mrf.mxu0
  %v734 = vadd.f32 %v715, %v733
  %v735 = vpop.f32.mrf.mxu0
  %v736 = vadd.f32 %v717, %v735
  %737 = vmatmul.bf16.gmra.mxu0 %v247
  %v738 = vpop.f32.mrf.mxu0
  %v739 = vadd.f32 %v720, %v738
  %v740 = vpop.f32.mrf.mxu0
  %v741 = vadd.f32 %v722, %v740
  %742 = vdwg.mxu0
  %743 = vmatpush.bf16.msra.mxu0 %v584
  %744 = vmatpush.bf16.msra.mxu0 %v583
  %745 = vmatpush.bf16.msra.mxu0 %v582
  %746 = vmatpush.bf16.msra.mxu0 %v581
  %747 = vmatpush.bf16.msra.mxu0 %v580
  %748 = vmatpush.bf16.msra.mxu0 %v579
  %749 = vmatpush.bf16.msra.mxu0 %v578
  %750 = vmatpush.bf16.msra.mxu0 %v577
  %751 = vmatmul.bf16.gmra.mxu0 %v239
  %v752 = vpop.f32.mrf.mxu0
  %v753 = vadd.f32 %v734, %v752
  %v754 = vpop.f32.mrf.mxu0
  %v755 = vadd.f32 %v736, %v754
  %756 = vmatmul.bf16.gmra.mxu0 %v248
  %v757 = vpop.f32.mrf.mxu0
  %v758 = vadd.f32 %v739, %v757
  %v759 = vpop.f32.mrf.mxu0
  %v760 = vadd.f32 %v741, %v759
  %761 = vdwg.mxu0
  %762 = vmatpush.bf16.msra.mxu0 %v592
  %763 = vmatpush.bf16.msra.mxu0 %v591
  %764 = vmatpush.bf16.msra.mxu0 %v590
  %765 = vmatpush.bf16.msra.mxu0 %v589
  %766 = vmatpush.bf16.msra.mxu0 %v588
  %767 = vmatpush.bf16.msra.mxu0 %v587
  %768 = vmatpush.bf16.msra.mxu0 %v586
  %769 = vmatpush.bf16.msra.mxu0 %v585
  %770 = vmatmul.bf16.gmra.mxu0 %v240
  %v771 = vpop.f32.mrf.mxu0
  %v772 = vadd.f32 %v753, %v771
  %v773 = vpop.f32.mrf.mxu0
  %v774 = vadd.f32 %v755, %v773
  %775 = vmatmul.bf16.gmra.mxu0 %v249
  %v776 = vpop.f32.mrf.mxu0
  %v777 = vadd.f32 %v758, %v776
  %v778 = vpop.f32.mrf.mxu0
  %v779 = vadd.f32 %v760, %v778
  %780 = vdwg.mxu0
  %781 = vmatpush.bf16.msra.mxu0 %v600
  %782 = vmatpush.bf16.msra.mxu0 %v599
  %783 = vmatpush.bf16.msra.mxu0 %v598
  %784 = vmatpush.bf16.msra.mxu0 %v597
  %785 = vmatpush.bf16.msra.mxu0 %v596
  %786 = vmatpush.bf16.msra.mxu0 %v595
  %787 = vmatpush.bf16.msra.mxu0 %v594
  %788 = vmatpush.bf16.msra.mxu0 %v593
  %789 = vmatmul.bf16.gmra.mxu0 %v241
  %v790 = vpop.f32.mrf.mxu0
  %v791 = vadd.f32 %v772, %v790
  %v792 = vpop.f32.mrf.mxu0
  %v793 = vadd.f32 %v774, %v792
  %794 = vmatmul.bf16.gmra.mxu0 %v250
  %v795 = vpop.f32.mrf.mxu0
  %v796 = vadd.f32 %v777, %v795
  %v797 = vpop.f32.mrf.mxu0
  %v798 = vadd.f32 %v779, %v797
  %799 = vdwg.mxu0
  %800 = vmatpush.bf16.msra.mxu0 %v608
  %801 = vmatpush.bf16.msra.mxu0 %v607
  %802 = vmatpush.bf16.msra.mxu0 %v606
  %803 = vmatpush.bf16.msra.mxu0 %v605
  %804 = vmatpush.bf16.msra.mxu0 %v604
  %805 = vmatpush.bf16.msra.mxu0 %v603
  %806 = vmatpush.bf16.msra.mxu0 %v602
  %807 = vmatpush.bf16.msra.mxu0 %v601
  %808 = vmatmul.bf16.gmra.mxu0 %v242
  %v809 = vpop.f32.mrf.mxu0
  %v810 = vadd.f32 %v791, %v809
  %v811 = vpop.f32.mrf.mxu0
  %v812 = vadd.f32 %v793, %v811
  %813 = vmatmul.bf16.gmra.mxu0 %v251
  %v814 = vpop.f32.mrf.mxu0
  %v815 = vadd.f32 %v796, %v814
  %v816 = vpop.f32.mrf.mxu0
  %v817 = vadd.f32 %v798, %v816
  %818 = vdwg.mxu0
  %819 = vmatpush.bf16.msra.mxu0 %v616
  %820 = vmatpush.bf16.msra.mxu0 %v615
  %821 = vmatpush.bf16.msra.mxu0 %v614
  %822 = vmatpush.bf16.msra.mxu0 %v613
  %823 = vmatpush.bf16.msra.mxu0 %v612
  %824 = vmatpush.bf16.msra.mxu0 %v611
  %825 = vmatpush.bf16.msra.mxu0 %v610
  %826 = vmatpush.bf16.msra.mxu0 %v609
  %827 = vmatmul.bf16.gmra.mxu0 %v243
  %v828 = vpop.f32.mrf.mxu0
  %v829 = vadd.f32 %v810, %v828
  %v830 = vpop.f32.mrf.mxu0
  %v831 = vadd.f32 %v812, %v830
  %832 = vmatmul.bf16.gmra.mxu0 %v252
  %v833 = vpop.f32.mrf.mxu0
  %v834 = vadd.f32 %v815, %v833
  %v835 = vpop.f32.mrf.mxu0
  %v836 = vadd.f32 %v817, %v835
  %837 = vdwg.mxu0
  %838 = vmatpush.bf16.msra.mxu0 %v624
  %839 = vmatpush.bf16.msra.mxu0 %v623
  %840 = vmatpush.bf16.msra.mxu0 %v622
  %841 = vmatpush.bf16.msra.mxu0 %v621
  %842 = vmatpush.bf16.msra.mxu0 %v620
  %843 = vmatpush.bf16.msra.mxu0 %v619
  %844 = vmatpush.bf16.msra.mxu0 %v618
  %845 = vmatpush.bf16.msra.mxu0 %v617
  %846 = vmatmul.bf16.gmra.mxu0 %v244
  %v847 = vpop.f32.mrf.mxu0
  %v848 = vadd.f32 %v829, %v847
  %v849 = vpop.f32.mrf.mxu0
  %v850 = vadd.f32 %v831, %v849
  %851 = vmatmul.bf16.gmra.mxu0 %v253
  %v852 = vpop.f32.mrf.mxu0
  %v853 = vadd.f32 %v834, %v852
  %v854 = vpop.f32.mrf.mxu0
  %v855 = vadd.f32 %v836, %v854
  %856 = vdwg.mxu0
  %857 = vmatpush.bf16.msra.mxu0 %v632
  %858 = vmatpush.bf16.msra.mxu0 %v631
  %859 = vmatpush.bf16.msra.mxu0 %v630
  %860 = vmatpush.bf16.msra.mxu0 %v629
  %861 = vmatpush.bf16.msra.mxu0 %v628
  %862 = vmatpush.bf16.msra.mxu0 %v627
  %863 = vmatpush.bf16.msra.mxu0 %v626
  %864 = vmatpush.bf16.msra.mxu0 %v625
  %865 = vmatmul.bf16.gmra.mxu0 %v245
  %v866 = vpop.f32.mrf.mxu0
  %v867 = vadd.f32 %v848, %v866
  %v868 = vpop.f32.mrf.mxu0
  %v869 = vadd.f32 %v850, %v868
  %870 = vmatmul.bf16.gmra.mxu0 %v254
  %v871 = vpop.f32.mrf.mxu0
  %v872 = vadd.f32 %v853, %v871
  %v873 = vpop.f32.mrf.mxu0
  %v874 = vadd.f32 %v855, %v873
  %875 = vdwg.mxu0
  %s876 = smul.u32 0, 32
  %s877 = scalar_lea.vmem [#allocation2], %s876
  %878 = vst [vmem:[%s877] sm:$0xff] %v867
  %879 = vst [vmem:[%s877 + $0x8] sm:$0xff] %v869
  %880 = vst [vmem:[%s877 + $0x10] sm:$0xff] %v872
  %881 = vst [vmem:[%s877 + $0x18] sm:$0xff] %v874
  %p882 = scmp.eq.s32.totalorder 0, 0
  // Predicated region
  $region18: #{encoder_forward.5} parent=0 // pred_check
    %p883 = pneg %p882
  $region19: #{encoder_forward.5} parent=0 // pred_check_branch
    %885 = sbr.rel (%p883) target = $region21
  $region20: #{encoder_forward.5} parent=0 // pred_region
    %v886 = vld [vmem:[#allocation2] sm:$0xff]
    %v887 = vld [vmem:[#allocation2 + $0x8] sm:$0xff]
    %v888 = vld [vmem:[#allocation2 + $0x10] sm:$0xff]
    %v889 = vld [vmem:[#allocation2 + $0x18] sm:$0xff]
    %v890 = vadd.f32 %v886, %v887
    %v891 = vadd.f32 %v890, %v888
    %v892 = vadd.f32 %v891, %v889
    %v893 = vrot.slane %v892, 4
    %v894 = vadd.f32 %v892, %v893
    %v895 = vrot.slane %v894, 2
    %v896 = vadd.f32 %v894, %v895
    %v897 = vrot.slane %v896, 1
    %v898 = vadd.f32 %v896, %v897
    %v899 = vmul.f32 %v898, 0.03125
    %v900 = vsub.f32 %v886, %v899
    %v901 = vsub.f32 %v887, %v899
    %v902 = vsub.f32 %v888, %v899
    %v903 = vsub.f32 %v889, %v899
    %v904 = vmul.f32 %v900, %v900
    %v905 = vmul.f32 %v901, %v901
    %v906 = vmul.f32 %v902, %v902
    %v907 = vmul.f32 %v903, %v903
    %v908 = vadd.f32 %v904, %v905
    %v909 = vadd.f32 %v908, %v906
    %v910 = vadd.f32 %v909, %v907
    %v911 = vrot.slane %v910, 4
    %v912 = vadd.f32 %v910, %v911
    %v913 = vrot.slane %v912, 2
    %v914 = vadd.f32 %v912, %v913
    %v915 = vrot.slane %v914, 1
    %v916 = vadd.f32 %v914, %v915
    %v917 = vmul.f32 %v916, 0.03125
    %v918 = vadd.f32 %v917, 1e-05
    %v919 = vrsqrt.pop %v918
    %v920 = vmul.f32 %v919, %v918
    %v921 = vmul.f32 %v920, %v919
    %v922 = vmul.f32 0.5, %v921
    %v923 = vsub.f32 1.5, %v922
    %v924 = vmul.f32 %v919, %v923
    %vm925 = vweird.f32 %v918
    %vm926 = vweird.f32 %v919
    %vm927 = vmor %vm925, %vm926
    %v928 = vsel %vm927, %v919, %v924
    %v929 = vld [vmem:[%s2] sm:$0x1]
    %v930 = vmul.f32 %v928, %v929
    %v931 = vperm.slane %v930, 0
    %v932 = vmul.f32 %v900, %v931
    %v933 = vmul.f32 %v901, %v931
    %v934 = vmul.f32 %v902, %v931
    %v935 = vmul.f32 %v903, %v931
    %v936 = vld [vmem:[%s3] sm:$0x1]
    %v938 = vperm.slane %v936, 0
    %v940 = vadd.f32 %v932, %v938
    %v941 = vadd.f32 %v933, %v938
    %v942 = vadd.f32 %v934, %v938
    %v943 = vadd.f32 %v935, %v938
    %vm944 = vcmp.gt.f32.partialorder %v940, 0.0
    %vm945 = vcmp.gt.f32.partialorder %v941, 0.0
    %vm946 = vcmp.gt.f32.partialorder %v942, 0.0
    %vm947 = vcmp.gt.f32.partialorder %v943, 0.0
    %v948 = vmul.f32 %v940, 0.01
    %v949 = vmul.f32 %v941, 0.01
    %v950 = vmul.f32 %v942, 0.01
    %v951 = vmul.f32 %v943, 0.01
    %v952 = vsel %vm944, %v940, %v948
    %v953 = vsel %vm945, %v941, %v949
    %v954 = vsel %vm946, %v942, %v950
    %v955 = vsel %vm947, %v943, %v951
    %v956 = vpack.c.bf16 %v952, %v952
    %v957 = vpack.c.bf16 %v953, %v953
    %v958 = vpack.c.bf16 %v954, %v954
    %v959 = vpack.c.bf16 %v955, %v955
    %960 = vst [vmem:[%s4] sm:$0xf] %v956
    %961 = vst [vmem:[%s4 + $0x4] sm:$0xf] %v957
    %962 = vst [vmem:[%s4 + $0x8] sm:$0xf] %v958
    %963 = vst [vmem:[%s4 + $0xc] sm:$0xf] %v959
  $region21: #{encoder_forward.5} parent=0 // pred_fallthru
    _
  // Predicated region
  $region22: #{encoder_forward.5} parent=0 // pred_check
    _
  $region23: #{encoder_forward.5} parent=0 // pred_check_branch
    %965 = sbr.rel (0) target = $region25
  $region24: #{encoder_forward.5} parent=0 // pred_region
    _
  $region25: #{encoder_forward.5} parent=0 // pred_fallthru
    _
  // Predicated region
  $region26: #{encoder_forward.5} parent=0 // pred_check
    _
  $region27: #{encoder_forward.5} parent=0 // pred_check_branch
    %967 = sbr.rel (0) target = $region29
  $region28: #{encoder_forward.5} parent=0 // pred_region
    _
  $region29: #{encoder_forward.5} parent=0 // pred_fallthru
    _

// kernel: encoder_forward.7
$region0: #{encoder_forward.7}
  #allocation0 [shape = 'u32[]', space=smem, size = 0x4, offset = 0x4, fixed_abs, tag = 'smem constant byte address 0x4 - core index']
  #allocation1 [shape = 'u32[72,128]{1,0:T(1,128)}', space=vmem, size = 0x9000, scoped, tag = 'internal scratch']
  %s0 = inlined_call_operand.vmem [shape: bf16[2,512], index: 0, kind: input, shape index: {}]
  %s1 = inlined_call_operand.vmem [shape: bf16[512,128], index: 1, kind: input, shape index: {}]
  %s2 = inlined_call_operand.vmem [shape: f32[1,128], index: 2, kind: input, shape index: {}]
  %s3 = inlined_call_operand.vmem [shape: f32[2,128], index: 3, kind: output, shape index: {}]
  %s4 = sld [smem:[#allocation0]]
  $region22: #{encoder_forward.7} parent=0
    _
  %s6 = ssub.s32 1, %s4
  %s7 = scalar_select 0, %s6, %s4
  // Predicated region
  $region2: #{encoder_forward.7} parent=0 // pred_check
    _
  $region3: #{encoder_forward.7} parent=0 // pred_check_branch
    %9 = sbr.rel (0) target = $region5
  $region4: #{encoder_forward.7} parent=0 // pred_region
    _
  $region5: #{encoder_forward.7} parent=0 // pred_fallthru
    _
  // Predicated region
  $region6: #{encoder_forward.7} parent=0 // pred_check
    _
  $region7: #{encoder_forward.7} parent=0 // pred_check_branch
    %11 = sbr.rel (0) target = $region9
  $region8: #{encoder_forward.7} parent=0 // pred_region
    _
  $region9: #{encoder_forward.7} parent=0 // pred_fallthru
    _
  // Predicated region
  $region10: #{encoder_forward.7} parent=0 // pred_check
    _
  $region11: #{encoder_forward.7} parent=0 // pred_check_branch
    %13 = sbr.rel (0) target = $region13
  $region12: #{encoder_forward.7} parent=0 // pred_region
    _
  $region13: #{encoder_forward.7} parent=0 // pred_fallthru
    _
  %v14 = vld [vmem:[%s0] sm:$0xf]
  %v15 = vld [vmem:[%s1] sm:$0xf]
  %v16 = vld [vmem:[%s1 + $0x4] sm:$0xf]
  %v17 = vld [vmem:[%s1 + $0x8] sm:$0xf]
  %v18 = vld [vmem:[%s1 + $0xc] sm:$0xf]
  %v19 = vld [vmem:[%s1 + $0x10] sm:$0xf]
  %v20 = vld [vmem:[%s1 + $0x14] sm:$0xf]
  %v21 = vld [vmem:[%s1 + $0x18] sm:$0xf]
  %v22 = vld [vmem:[%s1 + $0x1c] sm:$0xf]
  %v23 = vld [vmem:[%s1 + $0x20] sm:$0xf]
  %v24 = vld [vmem:[%s1 + $0x24] sm:$0xf]
  %v25 = vld [vmem:[%s1 + $0x28] sm:$0xf]
  %v26 = vld [vmem:[%s1 + $0x2c] sm:$0xf]
  %v27 = vld [vmem:[%s1 + $0x30] sm:$0xf]
  %v28 = vld [vmem:[%s1 + $0x34] sm:$0xf]
  %v29 = vld [vmem:[%s1 + $0x38] sm:$0xf]
  %v30 = vld [vmem:[%s1 + $0x3c] sm:$0xf]
  %v31 = vld [vmem:[%s1 + $0x40] sm:$0xf]
  %v32 = vld [vmem:[%s1 + $0x44] sm:$0xf]
  %v33 = vld [vmem:[%s1 + $0x48] sm:$0xf]
  %v34 = vld [vmem:[%s1 + $0x4c] sm:$0xf]
  %v35 = vld [vmem:[%s1 + $0x50] sm:$0xf]
  %v36 = vld [vmem:[%s1 + $0x54] sm:$0xf]
  %v37 = vld [vmem:[%s1 + $0x58] sm:$0xf]
  %v38 = vld [vmem:[%s1 + $0x5c] sm:$0xf]
  %v39 = vld [vmem:[%s1 + $0x60] sm:$0xf]
  %v40 = vld [vmem:[%s1 + $0x64] sm:$0xf]
  %v41 = vld [vmem:[%s1 + $0x68] sm:$0xf]
  %v42 = vld [vmem:[%s1 + $0x6c] sm:$0xf]
  %v43 = vld [vmem:[%s1 + $0x70] sm:$0xf]
  %v44 = vld [vmem:[%s1 + $0x74] sm:$0xf]
  %v45 = vld [vmem:[%s1 + $0x78] sm:$0xf]
  %v46 = vld [vmem:[%s1 + $0x7c] sm:$0xf]
  %v47 = vld [vmem:[%s1 + $0x80] sm:$0xf]
  %v48 = vld [vmem:[%s1 + $0x84] sm:$0xf]
  %v49 = vld [vmem:[%s1 + $0x88] sm:$0xf]
  %v50 = vld [vmem:[%s1 + $0x8c] sm:$0xf]
  %v51 = vld [vmem:[%s1 + $0x90] sm:$0xf]
  %v52 = vld [vmem:[%s1 + $0x94] sm:$0xf]
  %v53 = vld [vmem:[%s1 + $0x98] sm:$0xf]
  %v54 = vld [vmem:[%s1 + $0x9c] sm:$0xf]
  %v55 = vld [vmem:[%s1 + $0xa0] sm:$0xf]
  %v56 = vld [vmem:[%s1 + $0xa4] sm:$0xf]
  %v57 = vld [vmem:[%s1 + $0xa8] sm:$0xf]
  %v58 = vld [vmem:[%s1 + $0xac] sm:$0xf]
  %v59 = vld [vmem:[%s1 + $0xb0] sm:$0xf]
  %v60 = vld [vmem:[%s1 + $0xb4] sm:$0xf]
  %v61 = vld [vmem:[%s1 + $0xb8] sm:$0xf]
  %v62 = vld [vmem:[%s1 + $0xbc] sm:$0xf]
  %v63 = vld [vmem:[%s1 + $0xc0] sm:$0xf]
  %v64 = vld [vmem:[%s1 + $0xc4] sm:$0xf]
  %v65 = vld [vmem:[%s1 + $0xc8] sm:$0xf]
  %v66 = vld [vmem:[%s1 + $0xcc] sm:$0xf]
  %v67 = vld [vmem:[%s1 + $0xd0] sm:$0xf]
  %v68 = vld [vmem:[%s1 + $0xd4] sm:$0xf]
  %v69 = vld [vmem:[%s1 + $0xd8] sm:$0xf]
  %v70 = vld [vmem:[%s1 + $0xdc] sm:$0xf]
  %v71 = vld [vmem:[%s1 + $0xe0] sm:$0xf]
  %v72 = vld [vmem:[%s1 + $0xe4] sm:$0xf]
  %v73 = vld [vmem:[%s1 + $0xe8] sm:$0xf]
  %v74 = vld [vmem:[%s1 + $0xec] sm:$0xf]
  %v75 = vld [vmem:[%s1 + $0xf0] sm:$0xf]
  %v76 = vld [vmem:[%s1 + $0xf4] sm:$0xf]
  %v77 = vld [vmem:[%s1 + $0xf8] sm:$0xf]
  %v78 = vld [vmem:[%s1 + $0xfc] sm:$0xf]
  %v79 = vld [vmem:[%s2] sm:$0x1]
  %v81 = vperm.slane %v79, 0
  %84 = vst [vmem:[#allocation1] ss:$9 sm:$0xff] %v14
  %v85 = vld [vmem:[#allocation1] sm:$0xff]
  %v86 = vld [vmem:[#allocation1 + $0x9] sm:$0xff]
  %v87 = vld [vmem:[#allocation1 + $0x12] sm:$0xff]
  %v88 = vld [vmem:[#allocation1 + $0x1b] sm:$0xff]
  %v157 = vunpack.c.l.b16 %v15
  %v158 = vunpack.c.l.b16 %v16
  %v159 = vunpack.c.l.b16 %v17
  %v160 = vunpack.c.l.b16 %v18
  %v161 = vunpack.c.l.b16 %v19
  %v162 = vunpack.c.l.b16 %v20
  %v163 = vunpack.c.l.b16 %v21
  %v164 = vunpack.c.l.b16 %v22
  %v165 = vunpack.c.l.b16 %v23
  %v166 = vunpack.c.l.b16 %v24
  %v167 = vunpack.c.l.b16 %v25
  %v168 = vunpack.c.l.b16 %v26
  %v169 = vunpack.c.l.b16 %v27
  %v170 = vunpack.c.l.b16 %v28
  %v171 = vunpack.c.l.b16 %v29
  %v172 = vunpack.c.l.b16 %v30
  %v173 = vunpack.c.l.b16 %v31
  %v174 = vunpack.c.l.b16 %v32
  %v175 = vunpack.c.l.b16 %v33
  %v176 = vunpack.c.l.b16 %v34
  %v177 = vunpack.c.l.b16 %v35
  %v178 = vunpack.c.l.b16 %v36
  %v179 = vunpack.c.l.b16 %v37
  %v180 = vunpack.c.l.b16 %v38
  %v181 = vunpack.c.l.b16 %v39
  %v182 = vunpack.c.l.b16 %v40
  %v183 = vunpack.c.l.b16 %v41
  %v184 = vunpack.c.l.b16 %v42
  %v185 = vunpack.c.l.b16 %v43
  %v186 = vunpack.c.l.b16 %v44
  %v187 = vunpack.c.l.b16 %v45
  %v188 = vunpack.c.l.b16 %v46
  %v189 = vunpack.c.l.b16 %v47
  %v190 = vunpack.c.l.b16 %v48
  %v191 = vunpack.c.l.b16 %v49
  %v192 = vunpack.c.l.b16 %v50
  %v193 = vunpack.c.l.b16 %v51
  %v194 = vunpack.c.l.b16 %v52
  %v195 = vunpack.c.l.b16 %v53
  %v196 = vunpack.c.l.b16 %v54
  %v197 = vunpack.c.l.b16 %v55
  %v198 = vunpack.c.l.b16 %v56
  %v199 = vunpack.c.l.b16 %v57
  %v200 = vunpack.c.l.b16 %v58
  %v201 = vunpack.c.l.b16 %v59
  %v202 = vunpack.c.l.b16 %v60
  %v203 = vunpack.c.l.b16 %v61
  %v204 = vunpack.c.l.b16 %v62
  %v205 = vunpack.c.l.b16 %v63
  %v206 = vunpack.c.l.b16 %v64
  %v207 = vunpack.c.l.b16 %v65
  %v208 = vunpack.c.l.b16 %v66
  %v209 = vunpack.c.l.b16 %v67
  %v210 = vunpack.c.l.b16 %v68
  %v211 = vunpack.c.l.b16 %v69
  %v212 = vunpack.c.l.b16 %v70
  %v213 = vunpack.c.l.b16 %v71
  %v214 = vunpack.c.l.b16 %v72
  %v215 = vunpack.c.l.b16 %v73
  %v216 = vunpack.c.l.b16 %v74
  %v217 = vunpack.c.l.b16 %v75
  %v218 = vunpack.c.l.b16 %v76
  %v219 = vunpack.c.l.b16 %v77
  %v220 = vunpack.c.l.b16 %v78
  %v221 = vpack.c.b16 %v158, %v157
  %v222 = vpack.c.b16 %v160, %v159
  %v223 = vpack.c.b16 %v162, %v161
  %v224 = vpack.c.b16 %v164, %v163
  %v225 = vpack.c.b16 %v166, %v165
  %v226 = vpack.c.b16 %v168, %v167
  %v227 = vpack.c.b16 %v170, %v169
  %v228 = vpack.c.b16 %v172, %v171
  %v229 = vpack.c.b16 %v174, %v173
  %v230 = vpack.c.b16 %v176, %v175
  %v231 = vpack.c.b16 %v178, %v177
  %v232 = vpack.c.b16 %v180, %v179
  %v233 = vpack.c.b16 %v182, %v181
  %v234 = vpack.c.b16 %v184, %v183
  %v235 = vpack.c.b16 %v186, %v185
  %v236 = vpack.c.b16 %v188, %v187
  %v237 = vpack.c.b16 %v190, %v189
  %v238 = vpack.c.b16 %v192, %v191
  %v239 = vpack.c.b16 %v194, %v193
  %v240 = vpack.c.b16 %v196, %v195
  %v241 = vpack.c.b16 %v198, %v197
  %v242 = vpack.c.b16 %v200, %v199
  %v243 = vpack.c.b16 %v202, %v201
  %v244 = vpack.c.b16 %v204, %v203
  %v245 = vpack.c.b16 %v206, %v205
  %v246 = vpack.c.b16 %v208, %v207
  %v247 = vpack.c.b16 %v210, %v209
  %v248 = vpack.c.b16 %v212, %v211
  %v249 = vpack.c.b16 %v214, %v213
  %v250 = vpack.c.b16 %v216, %v215
  %v251 = vpack.c.b16 %v218, %v217
  %v252 = vpack.c.b16 %v220, %v219
  %285 = vmatpush.bf16.msra.mxu0 %v228
  %286 = vmatpush.bf16.msra.mxu0 %v227
  %287 = vmatpush.bf16.msra.mxu0 %v226
  %288 = vmatpush.bf16.msra.mxu0 %v225
  %289 = vmatpush.bf16.msra.mxu0 %v224
  %290 = vmatpush.bf16.msra.mxu0 %v223
  %291 = vmatpush.bf16.msra.mxu0 %v222
  %292 = vmatpush.bf16.msra.mxu0 %v221
  %293 = vmatmul.bf16.gmra.mxu0 %v85
  %v294 = vpop.f32.mrf.mxu0
  %v295 = vadd.f32 %v81, %v294
  %v296 = vpop.f32.mrf.mxu0
  %297 = vdwg.mxu0
  %298 = vmatpush.bf16.msra.mxu0 %v236
  %299 = vmatpush.bf16.msra.mxu0 %v235
  %300 = vmatpush.bf16.msra.mxu0 %v234
  %301 = vmatpush.bf16.msra.mxu0 %v233
  %302 = vmatpush.bf16.msra.mxu0 %v232
  %303 = vmatpush.bf16.msra.mxu0 %v231
  %304 = vmatpush.bf16.msra.mxu0 %v230
  %305 = vmatpush.bf16.msra.mxu0 %v229
  %306 = vmatmul.bf16.gmra.mxu0 %v86
  %v307 = vpop.f32.mrf.mxu0
  %v308 = vadd.f32 %v295, %v307
  %v309 = vpop.f32.mrf.mxu0
  %310 = vdwg.mxu0
  %311 = vmatpush.bf16.msra.mxu0 %v244
  %312 = vmatpush.bf16.msra.mxu0 %v243
  %313 = vmatpush.bf16.msra.mxu0 %v242
  %314 = vmatpush.bf16.msra.mxu0 %v241
  %315 = vmatpush.bf16.msra.mxu0 %v240
  %316 = vmatpush.bf16.msra.mxu0 %v239
  %317 = vmatpush.bf16.msra.mxu0 %v238
  %318 = vmatpush.bf16.msra.mxu0 %v237
  %319 = vmatmul.bf16.gmra.mxu0 %v87
  %v320 = vpop.f32.mrf.mxu0
  %v321 = vadd.f32 %v308, %v320
  %v322 = vpop.f32.mrf.mxu0
  %323 = vdwg.mxu0
  %324 = vmatpush.bf16.msra.mxu0 %v252
  %325 = vmatpush.bf16.msra.mxu0 %v251
  %326 = vmatpush.bf16.msra.mxu0 %v250
  %327 = vmatpush.bf16.msra.mxu0 %v249
  %328 = vmatpush.bf16.msra.mxu0 %v248
  %329 = vmatpush.bf16.msra.mxu0 %v247
  %330 = vmatpush.bf16.msra.mxu0 %v246
  %331 = vmatpush.bf16.msra.mxu0 %v245
  %332 = vmatmul.bf16.gmra.mxu0 %v88
  %v333 = vpop.f32.mrf.mxu0
  %v334 = vadd.f32 %v321, %v333
  %v335 = vpop.f32.mrf.mxu0
  %336 = vdwg.mxu0
  %337 = vst [vmem:[%s3] sm:$0x3] %v334
  // Predicated region
  $region14: #{encoder_forward.7} parent=0 // pred_check
    _
  $region15: #{encoder_forward.7} parent=0 // pred_check_branch
    %339 = sbr.rel (0) target = $region17
  $region16: #{encoder_forward.7} parent=0 // pred_region
    _
  $region17: #{encoder_forward.7} parent=0 // pred_fallthru
    _
  // Predicated region
  $region18: #{encoder_forward.7} parent=0 // pred_check
    _
  $region19: #{encoder_forward.7} parent=0 // pred_check_branch
    %341 = sbr.rel (0) target = $region21
  $region20: #{encoder_forward.7} parent=0 // pred_region
    _
  $region21: #{encoder_forward.7} parent=0 // pred_fallthru
    _

// kernel: encoder_forward.6
$region0: #{encoder_forward.6}
  #allocation0 [shape = 'u32[]', space=smem, size = 0x4, offset = 0x4, fixed_abs, tag = 'smem constant byte address 0x4 - core index']
  #allocation1 [shape = 'u32[72,128]{1,0:T(1,128)}', space=vmem, size = 0x9000, scoped, tag = 'internal scratch']
  #allocation2 [shape = 'f32[8,128]{1,0:T(8,128)}', space=vmem, size = 0x1000, scoped, tag = 'scratch operand']
  %s0 = inlined_call_operand.vmem [shape: bf16[8,1152], index: 0, kind: input, shape index: {}]
  %s1 = inlined_call_operand.vmem [shape: bf16[1152,128], index: 1, kind: input, shape index: {}]
  %s2 = inlined_call_operand.vmem [shape: f32[1,128], index: 2, kind: input, shape index: {}]
  %s3 = inlined_call_operand.vmem [shape: f32[1,128], index: 3, kind: input, shape index: {}]
  %s4 = inlined_call_operand.vmem [shape: bf16[8,128], index: 4, kind: output, shape index: {}]
  %s5 = sld [smem:[#allocation0]]
  $region30: #{encoder_forward.6} parent=0
    _
  %s7 = ssub.s32 1, %s5
  %s8 = scalar_select 0, %s7, %s5
  // Predicated region
  $region2: #{encoder_forward.6} parent=0 // pred_check
    _
  $region3: #{encoder_forward.6} parent=0 // pred_check_branch
    %10 = sbr.rel (0) target = $region5
  $region4: #{encoder_forward.6} parent=0 // pred_region
    _
  $region5: #{encoder_forward.6} parent=0 // pred_fallthru
    _
  // Predicated region
  $region6: #{encoder_forward.6} parent=0 // pred_check
    _
  $region7: #{encoder_forward.6} parent=0 // pred_check_branch
    %12 = sbr.rel (0) target = $region9
  $region8: #{encoder_forward.6} parent=0 // pred_region
    _
  $region9: #{encoder_forward.6} parent=0 // pred_fallthru
    _
  // Predicated region
  $region10: #{encoder_forward.6} parent=0 // pred_check
    _
  $region11: #{encoder_forward.6} parent=0 // pred_check_branch
    %14 = sbr.rel (0) target = $region13
  $region12: #{encoder_forward.6} parent=0 // pred_region
    _
  $region13: #{encoder_forward.6} parent=0 // pred_fallthru
    _
  // Predicated region
  $region14: #{encoder_forward.6} parent=0 // pred_check
    _
  $region15: #{encoder_forward.6} parent=0 // pred_check_branch
    %16 = sbr.rel (0) target = $region17
  $region16: #{encoder_forward.6} parent=0 // pred_region
    _
  $region17: #{encoder_forward.6} parent=0 // pred_fallthru
    _
  %v17 = vld [vmem:[%s0] sm:$0xff]
  %v18 = vld [vmem:[%s0 + $0x8] sm:$0xff]
  %v19 = vld [vmem:[%s0 + $0x10] sm:$0xff]
  %v20 = vld [vmem:[%s0 + $0x18] sm:$0xff]
  %v21 = vld [vmem:[%s0 + $0x20] sm:$0xf]
  %v22 = vld [vmem:[%s1] sm:$0xf]
  %v23 = vld [vmem:[%s1 + $0x4] sm:$0xf]
  %v24 = vld [vmem:[%s1 + $0x8] sm:$0xf]
  %v25 = vld [vmem:[%s1 + $0xc] sm:$0xf]
  %v26 = vld [vmem:[%s1 + $0x10] sm:$0xf]
  %v27 = vld [vmem:[%s1 + $0x14] sm:$0xf]
  %v28 = vld [vmem:[%s1 + $0x18] sm:$0xf]
  %v29 = vld [vmem:[%s1 + $0x1c] sm:$0xf]
  %v30 = vld [vmem:[%s1 + $0x20] sm:$0xf]
  %v31 = vld [vmem:[%s1 + $0x24] sm:$0xf]
  %v32 = vld [vmem:[%s1 + $0x28] sm:$0xf]
  %v33 = vld [vmem:[%s1 + $0x2c] sm:$0xf]
  %v34 = vld [vmem:[%s1 + $0x30] sm:$0xf]
  %v35 = vld [vmem:[%s1 + $0x34] sm:$0xf]
  %v36 = vld [vmem:[%s1 + $0x38] sm:$0xf]
  %v37 = vld [vmem:[%s1 + $0x3c] sm:$0xf]
  %v38 = vld [vmem:[%s1 + $0x40] sm:$0xf]
  %v39 = vld [vmem:[%s1 + $0x44] sm:$0xf]
  %v40 = vld [vmem:[%s1 + $0x48] sm:$0xf]
  %v41 = vld [vmem:[%s1 + $0x4c] sm:$0xf]
  %v42 = vld [vmem:[%s1 + $0x50] sm:$0xf]
  %v43 = vld [vmem:[%s1 + $0x54] sm:$0xf]
  %v44 = vld [vmem:[%s1 + $0x58] sm:$0xf]
  %v45 = vld [vmem:[%s1 + $0x5c] sm:$0xf]
  %v46 = vld [vmem:[%s1 + $0x60] sm:$0xf]
  %v47 = vld [vmem:[%s1 + $0x64] sm:$0xf]
  %v48 = vld [vmem:[%s1 + $0x68] sm:$0xf]
  %v49 = vld [vmem:[%s1 + $0x6c] sm:$0xf]
  %v50 = vld [vmem:[%s1 + $0x70] sm:$0xf]
  %v51 = vld [vmem:[%s1 + $0x74] sm:$0xf]
  %v52 = vld [vmem:[%s1 + $0x78] sm:$0xf]
  %v53 = vld [vmem:[%s1 + $0x7c] sm:$0xf]
  %v54 = vld [vmem:[%s1 + $0x80] sm:$0xf]
  %v55 = vld [vmem:[%s1 + $0x84] sm:$0xf]
  %v56 = vld [vmem:[%s1 + $0x88] sm:$0xf]
  %v57 = vld [vmem:[%s1 + $0x8c] sm:$0xf]
  %v58 = vld [vmem:[%s1 + $0x90] sm:$0xf]
  %v59 = vld [vmem:[%s1 + $0x94] sm:$0xf]
  %v60 = vld [vmem:[%s1 + $0x98] sm:$0xf]
  %v61 = vld [vmem:[%s1 + $0x9c] sm:$0xf]
  %v62 = vld [vmem:[%s1 + $0xa0] sm:$0xf]
  %v63 = vld [vmem:[%s1 + $0xa4] sm:$0xf]
  %v64 = vld [vmem:[%s1 + $0xa8] sm:$0xf]
  %v65 = vld [vmem:[%s1 + $0xac] sm:$0xf]
  %v66 = vld [vmem:[%s1 + $0xb0] sm:$0xf]
  %v67 = vld [vmem:[%s1 + $0xb4] sm:$0xf]
  %v68 = vld [vmem:[%s1 + $0xb8] sm:$0xf]
  %v69 = vld [vmem:[%s1 + $0xbc] sm:$0xf]
  %v70 = vld [vmem:[%s1 + $0xc0] sm:$0xf]
  %v71 = vld [vmem:[%s1 + $0xc4] sm:$0xf]
  %v72 = vld [vmem:[%s1 + $0xc8] sm:$0xf]
  %v73 = vld [vmem:[%s1 + $0xcc] sm:$0xf]
  %v74 = vld [vmem:[%s1 + $0xd0] sm:$0xf]
  %v75 = vld [vmem:[%s1 + $0xd4] sm:$0xf]
  %v76 = vld [vmem:[%s1 + $0xd8] sm:$0xf]
  %v77 = vld [vmem:[%s1 + $0xdc] sm:$0xf]
  %v78 = vld [vmem:[%s1 + $0xe0] sm:$0xf]
  %v79 = vld [vmem:[%s1 + $0xe4] sm:$0xf]
  %v80 = vld [vmem:[%s1 + $0xe8] sm:$0xf]
  %v81 = vld [vmem:[%s1 + $0xec] sm:$0xf]
  %v82 = vld [vmem:[%s1 + $0xf0] sm:$0xf]
  %v83 = vld [vmem:[%s1 + $0xf4] sm:$0xf]
  %v84 = vld [vmem:[%s1 + $0xf8] sm:$0xf]
  %v85 = vld [vmem:[%s1 + $0xfc] sm:$0xf]
  %v86 = vld [vmem:[%s1 + $0x100] sm:$0xf]
  %v87 = vld [vmem:[%s1 + $0x104] sm:$0xf]
  %v88 = vld [vmem:[%s1 + $0x108] sm:$0xf]
  %v89 = vld [vmem:[%s1 + $0x10c] sm:$0xf]
  %v90 = vld [vmem:[%s1 + $0x110] sm:$0xf]
  %v91 = vld [vmem:[%s1 + $0x114] sm:$0xf]
  %v92 = vld [vmem:[%s1 + $0x118] sm:$0xf]
  %v93 = vld [vmem:[%s1 + $0x11c] sm:$0xf]
  %v94 = vld [vmem:[%s1 + $0x120] sm:$0xf]
  %v95 = vld [vmem:[%s1 + $0x124] sm:$0xf]
  %v96 = vld [vmem:[%s1 + $0x128] sm:$0xf]
  %v97 = vld [vmem:[%s1 + $0x12c] sm:$0xf]
  %v98 = vld [vmem:[%s1 + $0x130] sm:$0xf]
  %v99 = vld [vmem:[%s1 + $0x134] sm:$0xf]
  %v100 = vld [vmem:[%s1 + $0x138] sm:$0xf]
  %v101 = vld [vmem:[%s1 + $0x13c] sm:$0xf]
  %v102 = vld [vmem:[%s1 + $0x140] sm:$0xf]
  %v103 = vld [vmem:[%s1 + $0x144] sm:$0xf]
  %v104 = vld [vmem:[%s1 + $0x148] sm:$0xf]
  %v105 = vld [vmem:[%s1 + $0x14c] sm:$0xf]
  %v106 = vld [vmem:[%s1 + $0x150] sm:$0xf]
  %v107 = vld [vmem:[%s1 + $0x154] sm:$0xf]
  %v108 = vld [vmem:[%s1 + $0x158] sm:$0xf]
  %v109 = vld [vmem:[%s1 + $0x15c] sm:$0xf]
  %v110 = vld [vmem:[%s1 + $0x160] sm:$0xf]
  %v111 = vld [vmem:[%s1 + $0x164] sm:$0xf]
  %v112 = vld [vmem:[%s1 + $0x168] sm:$0xf]
  %v113 = vld [vmem:[%s1 + $0x16c] sm:$0xf]
  %v114 = vld [vmem:[%s1 + $0x170] sm:$0xf]
  %v115 = vld [vmem:[%s1 + $0x174] sm:$0xf]
  %v116 = vld [vmem:[%s1 + $0x178] sm:$0xf]
  %v117 = vld [vmem:[%s1 + $0x17c] sm:$0xf]
  %v118 = vld [vmem:[%s1 + $0x180] sm:$0xf]
  %v119 = vld [vmem:[%s1 + $0x184] sm:$0xf]
  %v120 = vld [vmem:[%s1 + $0x188] sm:$0xf]
  %v121 = vld [vmem:[%s1 + $0x18c] sm:$0xf]
  %v122 = vld [vmem:[%s1 + $0x190] sm:$0xf]
  %v123 = vld [vmem:[%s1 + $0x194] sm:$0xf]
  %v124 = vld [vmem:[%s1 + $0x198] sm:$0xf]
  %v125 = vld [vmem:[%s1 + $0x19c] sm:$0xf]
  %v126 = vld [vmem:[%s1 + $0x1a0] sm:$0xf]
  %v127 = vld [vmem:[%s1 + $0x1a4] sm:$0xf]
  %v128 = vld [vmem:[%s1 + $0x1a8] sm:$0xf]
  %v129 = vld [vmem:[%s1 + $0x1ac] sm:$0xf]
  %v130 = vld [vmem:[%s1 + $0x1b0] sm:$0xf]
  %v131 = vld [vmem:[%s1 + $0x1b4] sm:$0xf]
  %v132 = vld [vmem:[%s1 + $0x1b8] sm:$0xf]
  %v133 = vld [vmem:[%s1 + $0x1bc] sm:$0xf]
  %v134 = vld [vmem:[%s1 + $0x1c0] sm:$0xf]
  %v135 = vld [vmem:[%s1 + $0x1c4] sm:$0xf]
  %v136 = vld [vmem:[%s1 + $0x1c8] sm:$0xf]
  %v137 = vld [vmem:[%s1 + $0x1cc] sm:$0xf]
  %v138 = vld [vmem:[%s1 + $0x1d0] sm:$0xf]
  %v139 = vld [vmem:[%s1 + $0x1d4] sm:$0xf]
  %v140 = vld [vmem:[%s1 + $0x1d8] sm:$0xf]
  %v141 = vld [vmem:[%s1 + $0x1dc] sm:$0xf]
  %v142 = vld [vmem:[%s1 + $0x1e0] sm:$0xf]
  %v143 = vld [vmem:[%s1 + $0x1e4] sm:$0xf]
  %v144 = vld [vmem:[%s1 + $0x1e8] sm:$0xf]
  %v145 = vld [vmem:[%s1 + $0x1ec] sm:$0xf]
  %v146 = vld [vmem:[%s1 + $0x1f0] sm:$0xf]
  %v147 = vld [vmem:[%s1 + $0x1f4] sm:$0xf]
  %v148 = vld [vmem:[%s1 + $0x1f8] sm:$0xf]
  %v149 = vld [vmem:[%s1 + $0x1fc] sm:$0xf]
  %v150 = vld [vmem:[%s1 + $0x200] sm:$0xf]
  %v151 = vld [vmem:[%s1 + $0x204] sm:$0xf]
  %v152 = vld [vmem:[%s1 + $0x208] sm:$0xf]
  %v153 = vld [vmem:[%s1 + $0x20c] sm:$0xf]
  %v154 = vld [vmem:[%s1 + $0x210] sm:$0xf]
  %v155 = vld [vmem:[%s1 + $0x214] sm:$0xf]
  %v156 = vld [vmem:[%s1 + $0x218] sm:$0xf]
  %v157 = vld [vmem:[%s1 + $0x21c] sm:$0xf]
  %v158 = vld [vmem:[%s1 + $0x220] sm:$0xf]
  %v159 = vld [vmem:[%s1 + $0x224] sm:$0xf]
  %v160 = vld [vmem:[%s1 + $0x228] sm:$0xf]
  %v161 = vld [vmem:[%s1 + $0x22c] sm:$0xf]
  %v162 = vld [vmem:[%s1 + $0x230] sm:$0xf]
  %v163 = vld [vmem:[%s1 + $0x234] sm:$0xf]
  %v164 = vld [vmem:[%s1 + $0x238] sm:$0xf]
  %v165 = vld [vmem:[%s1 + $0x23c] sm:$0xf]
  %v171 = vunpack.c.l.b16 %v17
  %v172 = vunpack.c.h.b16 %v17
  %v173 = vunpack.c.l.b16 %v18
  %v174 = vunpack.c.h.b16 %v18
  %v175 = vunpack.c.l.b16 %v19
  %v176 = vunpack.c.h.b16 %v19
  %v177 = vunpack.c.l.b16 %v20
  %v178 = vunpack.c.h.b16 %v20
  %v179 = vunpack.c.l.b16 %v21
  %v180 = vpack.c.b16 %v171, %v171
  %v181 = vpack.c.b16 %v172, %v172
  %v182 = vpack.c.b16 %v173, %v173
  %v183 = vpack.c.b16 %v174, %v174
  %v184 = vpack.c.b16 %v175, %v175
  %v185 = vpack.c.b16 %v176, %v176
  %v186 = vpack.c.b16 %v177, %v177
  %v187 = vpack.c.b16 %v178, %v178
  %v188 = vpack.c.b16 %v179, %v179
  %v342 = vunpack.c.l.b16 %v22
  %v343 = vunpack.c.l.b16 %v23
  %v344 = vunpack.c.l.b16 %v24
  %v345 = vunpack.c.l.b16 %v25
  %v346 = vunpack.c.l.b16 %v26
  %v347 = vunpack.c.l.b16 %v27
  %v348 = vunpack.c.l.b16 %v28
  %v349 = vunpack.c.l.b16 %v29
  %v350 = vunpack.c.l.b16 %v30
  %v351 = vunpack.c.l.b16 %v31
  %v352 = vunpack.c.l.b16 %v32
  %v353 = vunpack.c.l.b16 %v33
  %v354 = vunpack.c.l.b16 %v34
  %v355 = vunpack.c.l.b16 %v35
  %v356 = vunpack.c.l.b16 %v36
  %v357 = vunpack.c.l.b16 %v37
  %v358 = vunpack.c.l.b16 %v38
  %v359 = vunpack.c.l.b16 %v39
  %v360 = vunpack.c.l.b16 %v40
  %v361 = vunpack.c.l.b16 %v41
  %v362 = vunpack.c.l.b16 %v42
  %v363 = vunpack.c.l.b16 %v43
  %v364 = vunpack.c.l.b16 %v44
  %v365 = vunpack.c.l.b16 %v45
  %v366 = vunpack.c.l.b16 %v46
  %v367 = vunpack.c.l.b16 %v47
  %v368 = vunpack.c.l.b16 %v48
  %v369 = vunpack.c.l.b16 %v49
  %v370 = vunpack.c.l.b16 %v50
  %v371 = vunpack.c.l.b16 %v51
  %v372 = vunpack.c.l.b16 %v52
  %v373 = vunpack.c.l.b16 %v53
  %v374 = vunpack.c.l.b16 %v54
  %v375 = vunpack.c.l.b16 %v55
  %v376 = vunpack.c.l.b16 %v56
  %v377 = vunpack.c.l.b16 %v57
  %v378 = vunpack.c.l.b16 %v58
  %v379 = vunpack.c.l.b16 %v59
  %v380 = vunpack.c.l.b16 %v60
  %v381 = vunpack.c.l.b16 %v61
  %v382 = vunpack.c.l.b16 %v62
  %v383 = vunpack.c.l.b16 %v63
  %v384 = vunpack.c.l.b16 %v64
  %v385 = vunpack.c.l.b16 %v65
  %v386 = vunpack.c.l.b16 %v66
  %v387 = vunpack.c.l.b16 %v67
  %v388 = vunpack.c.l.b16 %v68
  %v389 = vunpack.c.l.b16 %v69
  %v390 = vunpack.c.l.b16 %v70
  %v391 = vunpack.c.l.b16 %v71
  %v392 = vunpack.c.l.b16 %v72
  %v393 = vunpack.c.l.b16 %v73
  %v394 = vunpack.c.l.b16 %v74
  %v395 = vunpack.c.l.b16 %v75
  %v396 = vunpack.c.l.b16 %v76
  %v397 = vunpack.c.l.b16 %v77
  %v398 = vunpack.c.l.b16 %v78
  %v399 = vunpack.c.l.b16 %v79
  %v400 = vunpack.c.l.b16 %v80
  %v401 = vunpack.c.l.b16 %v81
  %v402 = vunpack.c.l.b16 %v82
  %v403 = vunpack.c.l.b16 %v83
  %v404 = vunpack.c.l.b16 %v84
  %v405 = vunpack.c.l.b16 %v85
  %v406 = vunpack.c.l.b16 %v86
  %v407 = vunpack.c.l.b16 %v87
  %v408 = vunpack.c.l.b16 %v88
  %v409 = vunpack.c.l.b16 %v89
  %v410 = vunpack.c.l.b16 %v90
  %v411 = vunpack.c.l.b16 %v91
  %v412 = vunpack.c.l.b16 %v92
  %v413 = vunpack.c.l.b16 %v93
  %v414 = vunpack.c.l.b16 %v94
  %v415 = vunpack.c.l.b16 %v95
  %v416 = vunpack.c.l.b16 %v96
  %v417 = vunpack.c.l.b16 %v97
  %v418 = vunpack.c.l.b16 %v98
  %v419 = vunpack.c.l.b16 %v99
  %v420 = vunpack.c.l.b16 %v100
  %v421 = vunpack.c.l.b16 %v101
  %v422 = vunpack.c.l.b16 %v102
  %v423 = vunpack.c.l.b16 %v103
  %v424 = vunpack.c.l.b16 %v104
  %v425 = vunpack.c.l.b16 %v105
  %v426 = vunpack.c.l.b16 %v106
  %v427 = vunpack.c.l.b16 %v107
  %v428 = vunpack.c.l.b16 %v108
  %v429 = vunpack.c.l.b16 %v109
  %v430 = vunpack.c.l.b16 %v110
  %v431 = vunpack.c.l.b16 %v111
  %v432 = vunpack.c.l.b16 %v112
  %v433 = vunpack.c.l.b16 %v113
  %v434 = vunpack.c.l.b16 %v114
  %v435 = vunpack.c.l.b16 %v115
  %v436 = vunpack.c.l.b16 %v116
  %v437 = vunpack.c.l.b16 %v117
  %v438 = vunpack.c.l.b16 %v118
  %v439 = vunpack.c.l.b16 %v119
  %v440 = vunpack.c.l.b16 %v120
  %v441 = vunpack.c.l.b16 %v121
  %v442 = vunpack.c.l.b16 %v122
  %v443 = vunpack.c.l.b16 %v123
  %v444 = vunpack.c.l.b16 %v124
  %v445 = vunpack.c.l.b16 %v125
  %v446 = vunpack.c.l.b16 %v126
  %v447 = vunpack.c.l.b16 %v127
  %v448 = vunpack.c.l.b16 %v128
  %v449 = vunpack.c.l.b16 %v129
  %v450 = vunpack.c.l.b16 %v130
  %v451 = vunpack.c.l.b16 %v131
  %v452 = vunpack.c.l.b16 %v132
  %v453 = vunpack.c.l.b16 %v133
  %v454 = vunpack.c.l.b16 %v134
  %v455 = vunpack.c.l.b16 %v135
  %v456 = vunpack.c.l.b16 %v136
  %v457 = vunpack.c.l.b16 %v137
  %v458 = vunpack.c.l.b16 %v138
  %v459 = vunpack.c.l.b16 %v139
  %v460 = vunpack.c.l.b16 %v140
  %v461 = vunpack.c.l.b16 %v141
  %v462 = vunpack.c.l.b16 %v142
  %v463 = vunpack.c.l.b16 %v143
  %v464 = vunpack.c.l.b16 %v144
  %v465 = vunpack.c.l.b16 %v145
  %v466 = vunpack.c.l.b16 %v146
  %v467 = vunpack.c.l.b16 %v147
  %v468 = vunpack.c.l.b16 %v148
  %v469 = vunpack.c.l.b16 %v149
  %v470 = vunpack.c.l.b16 %v150
  %v471 = vunpack.c.l.b16 %v151
  %v472 = vunpack.c.l.b16 %v152
  %v473 = vunpack.c.l.b16 %v153
  %v474 = vunpack.c.l.b16 %v154
  %v475 = vunpack.c.l.b16 %v155
  %v476 = vunpack.c.l.b16 %v156
  %v477 = vunpack.c.l.b16 %v157
  %v478 = vunpack.c.l.b16 %v158
  %v479 = vunpack.c.l.b16 %v159
  %v480 = vunpack.c.l.b16 %v160
  %v481 = vunpack.c.l.b16 %v161
  %v482 = vunpack.c.l.b16 %v162
  %v483 = vunpack.c.l.b16 %v163
  %v484 = vunpack.c.l.b16 %v164
  %v485 = vunpack.c.l.b16 %v165
  %v486 = vpack.c.b16 %v343, %v342
  %v487 = vpack.c.b16 %v345, %v344
  %v488 = vpack.c.b16 %v347, %v346
  %v489 = vpack.c.b16 %v349, %v348
  %v490 = vpack.c.b16 %v351, %v350
  %v491 = vpack.c.b16 %v353, %v352
  %v492 = vpack.c.b16 %v355, %v354
  %v493 = vpack.c.b16 %v357, %v356
  %v494 = vpack.c.b16 %v359, %v358
  %v495 = vpack.c.b16 %v361, %v360
  %v496 = vpack.c.b16 %v363, %v362
  %v497 = vpack.c.b16 %v365, %v364
  %v498 = vpack.c.b16 %v367, %v366
  %v499 = vpack.c.b16 %v369, %v368
  %v500 = vpack.c.b16 %v371, %v370
  %v501 = vpack.c.b16 %v373, %v372
  %v502 = vpack.c.b16 %v375, %v374
  %v503 = vpack.c.b16 %v377, %v376
  %v504 = vpack.c.b16 %v379, %v378
  %v505 = vpack.c.b16 %v381, %v380
  %v506 = vpack.c.b16 %v383, %v382
  %v507 = vpack.c.b16 %v385, %v384
  %v508 = vpack.c.b16 %v387, %v386
  %v509 = vpack.c.b16 %v389, %v388
  %v510 = vpack.c.b16 %v391, %v390
  %v511 = vpack.c.b16 %v393, %v392
  %v512 = vpack.c.b16 %v395, %v394
  %v513 = vpack.c.b16 %v397, %v396
  %v514 = vpack.c.b16 %v399, %v398
  %v515 = vpack.c.b16 %v401, %v400
  %v516 = vpack.c.b16 %v403, %v402
  %v517 = vpack.c.b16 %v405, %v404
  %v518 = vpack.c.b16 %v407, %v406
  %v519 = vpack.c.b16 %v409, %v408
  %v520 = vpack.c.b16 %v411, %v410
  %v521 = vpack.c.b16 %v413, %v412
  %v522 = vpack.c.b16 %v415, %v414
  %v523 = vpack.c.b16 %v417, %v416
  %v524 = vpack.c.b16 %v419, %v418
  %v525 = vpack.c.b16 %v421, %v420
  %v526 = vpack.c.b16 %v423, %v422
  %v527 = vpack.c.b16 %v425, %v424
  %v528 = vpack.c.b16 %v427, %v426
  %v529 = vpack.c.b16 %v429, %v428
  %v530 = vpack.c.b16 %v431, %v430
  %v531 = vpack.c.b16 %v433, %v432
  %v532 = vpack.c.b16 %v435, %v434
  %v533 = vpack.c.b16 %v437, %v436
  %v534 = vpack.c.b16 %v439, %v438
  %v535 = vpack.c.b16 %v441, %v440
  %v536 = vpack.c.b16 %v443, %v442
  %v537 = vpack.c.b16 %v445, %v444
  %v538 = vpack.c.b16 %v447, %v446
  %v539 = vpack.c.b16 %v449, %v448
  %v540 = vpack.c.b16 %v451, %v450
  %v541 = vpack.c.b16 %v453, %v452
  %v542 = vpack.c.b16 %v455, %v454
  %v543 = vpack.c.b16 %v457, %v456
  %v544 = vpack.c.b16 %v459, %v458
  %v545 = vpack.c.b16 %v461, %v460
  %v546 = vpack.c.b16 %v463, %v462
  %v547 = vpack.c.b16 %v465, %v464
  %v548 = vpack.c.b16 %v467, %v466
  %v549 = vpack.c.b16 %v469, %v468
  %v550 = vpack.c.b16 %v471, %v470
  %v551 = vpack.c.b16 %v473, %v472
  %v552 = vpack.c.b16 %v475, %v474
  %v553 = vpack.c.b16 %v477, %v476
  %v554 = vpack.c.b16 %v479, %v478
  %v555 = vpack.c.b16 %v481, %v480
  %v556 = vpack.c.b16 %v483, %v482
  %v557 = vpack.c.b16 %v485, %v484
  %630 = vmatpush.bf16.msra.mxu0 %v493
  %631 = vmatpush.bf16.msra.mxu0 %v492
  %632 = vmatpush.bf16.msra.mxu0 %v491
  %633 = vmatpush.bf16.msra.mxu0 %v490
  %634 = vmatpush.bf16.msra.mxu0 %v489
  %635 = vmatpush.bf16.msra.mxu0 %v488
  %636 = vmatpush.bf16.msra.mxu0 %v487
  %637 = vmatpush.bf16.msra.mxu0 %v486
  %638 = vmatmul.bf16.gmra.mxu0 %v180
  %v639 = vpop.f32.mrf.mxu0
  %v640 = vadd.f32 0.0, %v639
  %v641 = vpop.f32.mrf.mxu0
  %642 = vdwg.mxu0
  %643 = vmatpush.bf16.msra.mxu0 %v501
  %644 = vmatpush.bf16.msra.mxu0 %v500
  %645 = vmatpush.bf16.msra.mxu0 %v499
  %646 = vmatpush.bf16.msra.mxu0 %v498
  %647 = vmatpush.bf16.msra.mxu0 %v497
  %648 = vmatpush.bf16.msra.mxu0 %v496
  %649 = vmatpush.bf16.msra.mxu0 %v495
  %650 = vmatpush.bf16.msra.mxu0 %v494
  %651 = vmatmul.bf16.gmra.mxu0 %v181
  %v652 = vpop.f32.mrf.mxu0
  %v653 = vadd.f32 %v640, %v652
  %v654 = vpop.f32.mrf.mxu0
  %655 = vdwg.mxu0
  %656 = vmatpush.bf16.msra.mxu0 %v509
  %657 = vmatpush.bf16.msra.mxu0 %v508
  %658 = vmatpush.bf16.msra.mxu0 %v507
  %659 = vmatpush.bf16.msra.mxu0 %v506
  %660 = vmatpush.bf16.msra.mxu0 %v505
  %661 = vmatpush.bf16.msra.mxu0 %v504
  %662 = vmatpush.bf16.msra.mxu0 %v503
  %663 = vmatpush.bf16.msra.mxu0 %v502
  %664 = vmatmul.bf16.gmra.mxu0 %v182
  %v665 = vpop.f32.mrf.mxu0
  %v666 = vadd.f32 %v653, %v665
  %v667 = vpop.f32.mrf.mxu0
  %668 = vdwg.mxu0
  %669 = vmatpush.bf16.msra.mxu0 %v517
  %670 = vmatpush.bf16.msra.mxu0 %v516
  %671 = vmatpush.bf16.msra.mxu0 %v515
  %672 = vmatpush.bf16.msra.mxu0 %v514
  %673 = vmatpush.bf16.msra.mxu0 %v513
  %674 = vmatpush.bf16.msra.mxu0 %v512
  %675 = vmatpush.bf16.msra.mxu0 %v511
  %676 = vmatpush.bf16.msra.mxu0 %v510
  %677 = vmatmul.bf16.gmra.mxu0 %v183
  %v678 = vpop.f32.mrf.mxu0
  %v679 = vadd.f32 %v666, %v678
  %v680 = vpop.f32.mrf.mxu0
  %681 = vdwg.mxu0
  %682 = vmatpush.bf16.msra.mxu0 %v525
  %683 = vmatpush.bf16.msra.mxu0 %v524
  %684 = vmatpush.bf16.msra.mxu0 %v523
  %685 = vmatpush.bf16.msra.mxu0 %v522
  %686 = vmatpush.bf16.msra.mxu0 %v521
  %687 = vmatpush.bf16.msra.mxu0 %v520
  %688 = vmatpush.bf16.msra.mxu0 %v519
  %689 = vmatpush.bf16.msra.mxu0 %v518
  %690 = vmatmul.bf16.gmra.mxu0 %v184
  %v691 = vpop.f32.mrf.mxu0
  %v692 = vadd.f32 %v679, %v691
  %v693 = vpop.f32.mrf.mxu0
  %694 = vdwg.mxu0
  %695 = vmatpush.bf16.msra.mxu0 %v533
  %696 = vmatpush.bf16.msra.mxu0 %v532
  %697 = vmatpush.bf16.msra.mxu0 %v531
  %698 = vmatpush.bf16.msra.mxu0 %v530
  %699 = vmatpush.bf16.msra.mxu0 %v529
  %700 = vmatpush.bf16.msra.mxu0 %v528
  %701 = vmatpush.bf16.msra.mxu0 %v527
  %702 = vmatpush.bf16.msra.mxu0 %v526
  %703 = vmatmul.bf16.gmra.mxu0 %v185
  %v704 = vpop.f32.mrf.mxu0
  %v705 = vadd.f32 %v692, %v704
  %v706 = vpop.f32.mrf.mxu0
  %707 = vdwg.mxu0
  %708 = vmatpush.bf16.msra.mxu0 %v541
  %709 = vmatpush.bf16.msra.mxu0 %v540
  %710 = vmatpush.bf16.msra.mxu0 %v539
  %711 = vmatpush.bf16.msra.mxu0 %v538
  %712 = vmatpush.bf16.msra.mxu0 %v537
  %713 = vmatpush.bf16.msra.mxu0 %v536
  %714 = vmatpush.bf16.msra.mxu0 %v535
  %715 = vmatpush.bf16.msra.mxu0 %v534
  %716 = vmatmul.bf16.gmra.mxu0 %v186
  %v717 = vpop.f32.mrf.mxu0
  %v718 = vadd.f32 %v705, %v717
  %v719 = vpop.f32.mrf.mxu0
  %720 = vdwg.mxu0
  %721 = vmatpush.bf16.msra.mxu0 %v549
  %722 = vmatpush.bf16.msra.mxu0 %v548
  %723 = vmatpush.bf16.msra.mxu0 %v547
  %724 = vmatpush.bf16.msra.mxu0 %v546
  %725 = vmatpush.bf16.msra.mxu0 %v545
  %726 = vmatpush.bf16.msra.mxu0 %v544
  %727 = vmatpush.bf16.msra.mxu0 %v543
  %728 = vmatpush.bf16.msra.mxu0 %v542
  %729 = vmatmul.bf16.gmra.mxu0 %v187
  %v730 = vpop.f32.mrf.mxu0
  %v731 = vadd.f32 %v718, %v730
  %v732 = vpop.f32.mrf.mxu0
  %733 = vdwg.mxu0
  %734 = vmatpush.bf16.msra.mxu0 %v557
  %735 = vmatpush.bf16.msra.mxu0 %v556
  %736 = vmatpush.bf16.msra.mxu0 %v555
  %737 = vmatpush.bf16.msra.mxu0 %v554
  %738 = vmatpush.bf16.msra.mxu0 %v553
  %739 = vmatpush.bf16.msra.mxu0 %v552
  %740 = vmatpush.bf16.msra.mxu0 %v551
  %741 = vmatpush.bf16.msra.mxu0 %v550
  %742 = vmatmul.bf16.gmra.mxu0 %v188
  %v743 = vpop.f32.mrf.mxu0
  %v744 = vadd.f32 %v731, %v743
  %v745 = vpop.f32.mrf.mxu0
  %746 = vdwg.mxu0
  %s747 = smul.u32 0, 8
  %s748 = scalar_lea.vmem [#allocation2], %s747
  %749 = vst [vmem:[%s748] sm:$0xff] %v744
  %p750 = scmp.eq.s32.totalorder 0, 0
  // Predicated region
  $region18: #{encoder_forward.6} parent=0 // pred_check
    %p751 = pneg %p750
  $region19: #{encoder_forward.6} parent=0 // pred_check_branch
    %753 = sbr.rel (%p751) target = $region21
  $region20: #{encoder_forward.6} parent=0 // pred_region
    %v754 = vld [vmem:[#allocation2] sm:$0xff]
    %v755 = vrot.slane %v754, 4
    %v756 = vadd.f32 %v754, %v755
    %v757 = vrot.slane %v756, 2
    %v758 = vadd.f32 %v756, %v757
    %v759 = vrot.slane %v758, 1
    %v760 = vadd.f32 %v758, %v759
    %v761 = vmul.f32 %v760, 0.125
    %v762 = vsub.f32 %v754, %v761
    %v763 = vmul.f32 %v762, %v762
    %v764 = vrot.slane %v763, 4
    %v765 = vadd.f32 %v763, %v764
    %v766 = vrot.slane %v765, 2
    %v767 = vadd.f32 %v765, %v766
    %v768 = vrot.slane %v767, 1
    %v769 = vadd.f32 %v767, %v768
    %v770 = vmul.f32 %v769, 0.125
    %v771 = vadd.f32 %v770, 1e-05
    %v772 = vrsqrt.pop %v771
    %v773 = vmul.f32 %v772, %v771
    %v774 = vmul.f32 %v773, %v772
    %v775 = vmul.f32 0.5, %v774
    %v776 = vsub.f32 1.5, %v775
    %v777 = vmul.f32 %v772, %v776
    %vm778 = vweird.f32 %v771
    %vm779 = vweird.f32 %v772
    %vm780 = vmor %vm778, %vm779
    %v781 = vsel %vm780, %v772, %v777
    %v782 = vld [vmem:[%s2] sm:$0x1]
    %v783 = vmul.f32 %v781, %v782
    %v784 = vperm.slane %v783, 0
    %v785 = vmul.f32 %v762, %v784
    %v786 = vld [vmem:[%s3] sm:$0x1]
    %v788 = vperm.slane %v786, 0
    %v790 = vadd.f32 %v785, %v788
    %vm791 = vcmp.gt.f32.partialorder %v790, 0.0
    %v792 = vmul.f32 %v790, 0.01
    %v793 = vsel %vm791, %v790, %v792
    %v794 = vpack.c.bf16 %v793, %v793
    %795 = vst [vmem:[%s4] sm:$0xf] %v794
  $region21: #{encoder_forward.6} parent=0 // pred_fallthru
    _
  // Predicated region
  $region22: #{encoder_forward.6} parent=0 // pred_check
    _
  $region23: #{encoder_forward.6} parent=0 // pred_check_branch
    %797 = sbr.rel (0) target = $region25
  $region24: #{encoder_forward.6} parent=0 // pred_region
    _
  $region25: #{encoder_forward.6} parent=0 // pred_fallthru
    _
  // Predicated region
  $region26: #{encoder_forward.6} parent=0 // pred_check
    _
  $region27: #{encoder_forward.6} parent=0 // pred_check_branch
    %799 = sbr.rel (0) target = $region29
  $region28: #{encoder_forward.6} parent=0 // pred_region
    _
  $region29: #{encoder_forward.6} parent=0 // pred_fallthru
    _

</llo_original>
